<compile_context>
chip_gen: v7x
topology: tpu7x:2x2x1
jax: 0.10.0
libtpu: 0.0.40
codegen_flags: <defaults>
</compile_context>

<pallas_src>
import functools
import math

import jax
import jax.numpy as jnp
from jax import lax
from jax.experimental import pallas as pl
from jax.experimental.pallas import tpu as pltpu

D_MODEL = 32
N_HEADS = 4
D_HEAD = D_MODEL // N_HEADS
D_FF = 64
PAD = max(D_MODEL, D_FF)          # lane width of the packed FFN / bias slabs
LN_EPS = 1e-5                     # torch.nn.LayerNorm default eps

# Row layout of the packed [16, PAD] bias / LayerNorm slab.
_SA_B0, _CA_B0 = 0, 4             # q,k,v,o bias rows for self / cross attention
_FF_B1, _FF_B2 = 8, 9
_LN1_G, _LN1_B = 10, 11
_LN2_G, _LN2_B = 12, 13
_LN3_G, _LN3_B = 14, 15


def _decoder_layer_kernel(x_ref, mem_ref, tgt_bias_ref, src_bias_ref,
                          attn_w_ref, ff_w_ref, vec_ref, out_ref, *, use_bf16):
    Bt, T, D = x_ref.shape
    S = mem_ref.shape[1]

    # Flatten (batch, seq) into one row slab: all projections / FFN / LayerNorms
    # run on [Bt*T, D] (fills the MXU M dimension, one wide store at the end).
    x = x_ref[...].reshape(Bt * T, D)
    m = mem_ref[...].reshape(Bt * S, D)
    vec = vec_ref[...]                          # [16, PAD] biases + LN params

    def mm(a, b):                               # a @ b   (f32 accumulate)
        if use_bf16:
            a, b = a.astype(jnp.bfloat16), b.astype(jnp.bfloat16)
        return jnp.dot(a, b, preferred_element_type=jnp.float32)

    def mm_t(a, b):                             # a @ b.T (contract last dims)
        if use_bf16:
            a, b = a.astype(jnp.bfloat16), b.astype(jnp.bfloat16)
        return lax.dot_general(a, b, (((1,), (1,)), ((), ())),
                               preferred_element_type=jnp.float32)

    def vrow(i, n):                             # [1, n] bias / LN row
        return vec[i:i + 1, :n]

    def layer_norm(h, gi, bi):
        mu = jnp.mean(h, axis=-1, keepdims=True)
        c = h - mu
        var = jnp.mean(c * c, axis=-1, keepdims=True)
        return c * lax.rsqrt(var + LN_EPS) * vrow(gi, D) + vrow(bi, D)

    def mha(xq, xkv, n_kv, bias_fn, w0):
        # w0: base index into the stacked attention weights / bias rows.
        wq, wk = attn_w_ref[w0 + 0], attn_w_ref[w0 + 1]
        wv, wo = attn_w_ref[w0 + 2], attn_w_ref[w0 + 3]
        # 1/sqrt(d_k) is already folded into wq / bq by pack_params().
        q = mm(xq, wq) + vrow(w0 + 0, D)        # [Bt*T,  D]
        k = mm(xkv, wk) + vrow(w0 + 1, D)       # [Bt*Kv, D]
        v = mm(xkv, wv) + vrow(w0 + 2, D)
        rows = []
        for b in range(Bt):                     # static loops (Bt, H are small)
            qb = q[b * T:(b + 1) * T, :]
            kb = k[b * n_kv:(b + 1) * n_kv, :]
            vb = v[b * n_kv:(b + 1) * n_kv, :]
            bias_b = bias_fn(b)                 # additive: [T, n_kv] or [1, n_kv]
            acc = None
            for h in range(N_HEADS):
                lo, hi = h * D_HEAD, (h + 1) * D_HEAD
                s = mm_t(qb[:, lo:hi], kb[:, lo:hi]) + bias_b    # [T, n_kv]
                s = s - jnp.max(s, axis=-1, keepdims=True)
                p = jnp.exp(s)
                p = p * pl.reciprocal(jnp.sum(p, axis=-1, keepdims=True),
                                      approx=True)
                head = mm(p, vb[:, lo:hi])                       # [T, D_HEAD]
                contrib = mm(head, wo[lo:hi, :])                 # [T, D] (no concat)
                acc = contrib if acc is None else acc + contrib
            rows.append(acc)
        out = rows[0] if Bt == 1 else jnp.concatenate(rows, axis=0)
        return out + vrow(w0 + 3, D)

    tgt_bias = tgt_bias_ref[...]                # [Bt, T, T]
    src_bias = src_bias_ref[...]                # [Bt, 1, S]

    # sublayer 1: masked self-attention + residual, post-LayerNorm
    x = layer_norm(mha(x, x, T, lambda b: tgt_bias[b], _SA_B0) + x, _LN1_G, _LN1_B)
    # sublayer 2: encoder-decoder (src) attention + residual, post-LayerNorm
    x = layer_norm(mha(x, m, S, lambda b: src_bias[b], _CA_B0) + x, _LN2_G, _LN2_B)
    # sublayer 3: position-wise feed-forward + residual, post-LayerNorm
    # TODO(synk): dropout inside attention / FFN omitted (eval-mode identity).
    w1 = ff_w_ref[0][:D, :D_FF]
    w2 = ff_w_ref[1][:D_FF, :D]
    h1 = jnp.maximum(mm(x, w1) + vrow(_FF_B1, D_FF), 0.0)
    ff = mm(h1, w2) + vrow(_FF_B2, D)
    x = layer_norm(ff + x, _LN3_G, _LN3_B)

    out_ref[...] = x.reshape(Bt, T, D).astype(out_ref.dtype)


def pack_params(params, dtype=jnp.float32):
    """Pack the 26 per-tensor parameters into 3 slabs:
       attn_w [8, D, D], ff_w [2, PAD, PAD] (zero-padded), vec [16, PAD].
       Folds 1/sqrt(d_k) into the query projections.  Biases / LN stay f32."""
    (sa_wq, sa_bq, sa_wk, sa_bk, sa_wv, sa_bv, sa_wo, sa_bo,
     ca_wq, ca_bq, ca_wk, ca_bk, ca_wv, ca_bv, ca_wo, ca_bo,
     ff_w1, ff_b1, ff_w2, ff_b2,
     ln1_g, ln1_b, ln2_g, ln2_b, ln3_g, ln3_b) = params
    scale = 1.0 / math.sqrt(D_HEAD)

    attn_w = jnp.stack([sa_wq * scale, sa_wk, sa_wv, sa_wo,
                        ca_wq * scale, ca_wk, ca_wv, ca_wo]).astype(dtype)

    ff_w = jnp.zeros((2, PAD, PAD), dtype)
    ff_w = ff_w.at[0, :D_MODEL, :D_FF].set(ff_w1.astype(dtype))
    ff_w = ff_w.at[1, :D_FF, :D_MODEL].set(ff_w2.astype(dtype))

    def row(v, n):
        r = jnp.zeros((1, PAD), jnp.float32)
        return r.at[0, :n].set(v.reshape(-1).astype(jnp.float32))

    vec = jnp.concatenate([
        row(sa_bq * scale, D_MODEL), row(sa_bk, D_MODEL),
        row(sa_bv, D_MODEL), row(sa_bo, D_MODEL),
        row(ca_bq * scale, D_MODEL), row(ca_bk, D_MODEL),
        row(ca_bv, D_MODEL), row(ca_bo, D_MODEL),
        row(ff_b1, D_FF), row(ff_b2, D_MODEL),
        row(ln1_g, D_MODEL), row(ln1_b, D_MODEL),
        row(ln2_g, D_MODEL), row(ln2_b, D_MODEL),
        row(ln3_g, D_MODEL), row(ln3_b, D_MODEL),
    ], axis=0)                                                   # [16, PAD]
    return attn_w, ff_w, vec


def decoder_layer(x, memory, src_mask, tgt_mask, params, *,
                  block_b=None, use_bf16_matmul=False):
    """block_b: batch elements per grid step.  Default = whole batch (one grid
    step), which is best on single-TensorCore v5e/v6e; on v7x pass
    block_b = B // 2 so both TensorCores get a 'parallel' grid step.
    use_bf16_matmul: cast MXU operands to bf16 (recommended on v6e/v7x);
    elementwise / LN / softmax math stays f32 either way."""
    B, T, D = x.shape
    S = memory.shape[1]
    assert D == D_MODEL
    if block_b is None:
        block_b = B
    assert B % block_b == 0
    grid = (B // block_b,)

    # Additive attention-mask biases ((mask - 1) * 1e9): a single add in the
    # kernel instead of compare+select+mul.  src bias stays skinny [B, 1, S].
    tgt_bias = jnp.broadcast_to((tgt_mask.astype(jnp.float32) - 1.0) * 1e9,
                                (B, T, T))
    src_bias = jnp.broadcast_to((src_mask.astype(jnp.float32) - 1.0) * 1e9,
                                (B, 1, S))

    w_dtype = jnp.bfloat16 if use_bf16_matmul else jnp.float32
    attn_w, ff_w, vec = pack_params(params, dtype=w_dtype)

    kernel = functools.partial(_decoder_layer_kernel, use_bf16=use_bf16_matmul)

    in_specs = [
        pl.BlockSpec((block_b, T, D), lambda b: (b, 0, 0)),      # x
        pl.BlockSpec((block_b, S, D), lambda b: (b, 0, 0)),      # memory
        pl.BlockSpec((block_b, T, T), lambda b: (b, 0, 0)),      # tgt additive bias
        pl.BlockSpec((block_b, 1, S), lambda b: (b, 0, 0)),      # src additive bias
        pl.BlockSpec(attn_w.shape, lambda b: (0, 0, 0)),         # [8, D, D]
        pl.BlockSpec(ff_w.shape, lambda b: (0, 0, 0)),           # [2, PAD, PAD]
        pl.BlockSpec(vec.shape, lambda b: (0, 0)),               # [16, PAD]
    ]

    return pl.pallas_call(
        kernel,
        out_shape=jax.ShapeDtypeStruct((B, T, D), jnp.float32),
        grid_spec=pltpu.PrefetchScalarGridSpec(
            num_scalar_prefetch=0,
            grid=grid,
            in_specs=in_specs,
            out_specs=pl.BlockSpec((block_b, T, D), lambda b: (b, 0, 0)),
        ),
        compiler_params=pltpu.CompilerParams(
            dimension_semantics=("parallel",)),
    )(x, memory, tgt_bias, src_bias, attn_w, ff_w, vec)


def init_params(key):
    """Deterministic synthetic parameters.  Linear weights stored as [in, out]
    (y = x @ W + b, same math as nn.Linear); biases / LN params as [1, D]."""
    keys = iter(jax.random.split(key, 24))

    def w(shape, scale=0.1):
        return (scale * jax.random.normal(next(keys), shape)).astype(jnp.float32)

    params = []
    for _ in range(4):                                   # self-attn q, k, v, o
        params.append(w((D_MODEL, D_MODEL)))
        params.append(w((1, D_MODEL)))
    for _ in range(4):                                   # src-attn q, k, v, o
        params.append(w((D_MODEL, D_MODEL)))
        params.append(w((1, D_MODEL)))
    params.append(w((D_MODEL, D_FF)))                    # feed-forward
    params.append(w((1, D_FF)))
    params.append(w((D_FF, D_MODEL)))
    params.append(w((1, D_MODEL)))
    for _ in range(3):                                   # LayerNorms (g=1, b=0)
        params.append(jnp.ones((1, D_MODEL), jnp.float32))
        params.append(jnp.zeros((1, D_MODEL), jnp.float32))
    return params


def decoder_layer_reference(x, memory, src_mask, tgt_mask, params):
    """Pure-JAX reference mirroring the PyTorch module (post-norm, masked_fill)."""
    (sa_wq, sa_bq, sa_wk, sa_bk, sa_wv, sa_bv, sa_wo, sa_bo,
     ca_wq, ca_bq, ca_wk, ca_bk, ca_wv, ca_bv, ca_wo, ca_bo,
     ff_w1, ff_b1, ff_w2, ff_b2,
     ln1_g, ln1_b, ln2_g, ln2_b, ln3_g, ln3_b) = params

    def linear(h, w, b):
        return h @ w + b

    def layer_norm(h, g, b):
        mu = jnp.mean(h, axis=-1, keepdims=True)
        var = jnp.mean((h - mu) ** 2, axis=-1, keepdims=True)
        return (h - mu) / jnp.sqrt(var + LN_EPS) * g + b

    def mha(xq, xkv, mask, wq, bq, wk, bk, wv, bv, wo, bo):
        B, Tq, _ = xq.shape
        Tk = xkv.shape[1]
        q = linear(xq, wq, bq).reshape(B, Tq, N_HEADS, D_HEAD).transpose(0, 2, 1, 3)
        k = linear(xkv, wk, bk).reshape(B, Tk, N_HEADS, D_HEAD).transpose(0, 2, 1, 3)
        v = linear(xkv, wv, bv).reshape(B, Tk, N_HEADS, D_HEAD).transpose(0, 2, 1, 3)
        s = jnp.einsum('bhqd,bhkd->bhqk', q, k) / math.sqrt(D_HEAD)
        s = jnp.where(mask[:, None, :, :] == 0.0, -1e9, s)
        p = jax.nn.softmax(s, axis=-1)
        o = jnp.einsum('bhqk,bhkd->bhqd', p, v).transpose(0, 2, 1, 3)
        return linear(o.reshape(B, Tq, D_MODEL), wo, bo)

    m = memory
    x = layer_norm(mha(x, x, tgt_mask, sa_wq, sa_bq, sa_wk, sa_bk,
                       sa_wv, sa_bv, sa_wo, sa_bo) + x, ln1_g, ln1_b)
    x = layer_norm(mha(x, m, src_mask, ca_wq, ca_bq, ca_wk, ca_bk,
                       ca_wv, ca_bv, ca_wo, ca_bo) + x, ln2_g, ln2_b)
    ff = linear(jnp.maximum(linear(x, ff_w1, ff_b1), 0.0), ff_w2, ff_b2)
    return layer_norm(ff + x, ln3_g, ln3_b)


if __name__ == "__main__":
    key = jax.random.PRNGKey(0)
    kx, km, kp = jax.random.split(key, 3)

    B, T, S = 2, 8, 8
    x = jax.random.normal(kx, (B, T, D_MODEL), dtype=jnp.float32)
    memory = jax.random.normal(km, (B, S, D_MODEL), dtype=jnp.float32)
    # causal (subsequent) target mask [B, T, T]; src padding mask [B, 1, S]
    tgt_mask = jnp.broadcast_to(jnp.tril(jnp.ones((T, T), jnp.float32)), (B, T, T))
    src_mask = jnp.ones((B, 1, S), jnp.float32)

    params = init_params(kp)

    out = jax.block_until_ready(
        decoder_layer(x, memory, src_mask, tgt_mask, params))
    assert out.shape == (B, T, D_MODEL) and out.dtype == jnp.float32

    with jax.default_matmul_precision("highest"):
        ref = jax.block_until_ready(
            decoder_layer_reference(x, memory, src_mask, tgt_mask, params))
    err = float(jnp.max(jnp.abs(out - ref)))
    assert err < 1e-2, f"kernel/reference mismatch: max abs err = {err}"
    print("KERNEL_OK")
</pallas_src>

<mosaic_0001>
module attributes {stable_mosaic.version = 11 : i64} {
  func.func @_decoder_layer_kernel(%arg0: i32, %arg1: memref<2x8x32xf32, #tpu.memory_space<vmem>>, %arg2: memref<2x8x32xf32, #tpu.memory_space<vmem>>, %arg3: memref<2x8x8xf32, #tpu.memory_space<vmem>>, %arg4: memref<2x1x8xf32, #tpu.memory_space<vmem>>, %arg5: memref<8x32x32xf32, #tpu.memory_space<vmem>>, %arg6: memref<2x64x64xf32, #tpu.memory_space<vmem>>, %arg7: memref<16x64xf32, #tpu.memory_space<vmem>>, %arg8: memref<2x8x32xf32, #tpu.memory_space<vmem>>) attributes {dimension_semantics = [#tpu.dimension_semantics<parallel>], iteration_bounds = array<i64: 1>, scalar_prefetch = 0 : i64, scratch_operands = 0 : i64, tpu.core_type = #tpu.core_type<tc>, window_params = [{transform_indices = @transform_0, window_bounds = array<i64: 2, 8, 32>}, {transform_indices = @transform_1, window_bounds = array<i64: 2, 8, 32>}, {transform_indices = @transform_2, window_bounds = array<i64: 2, 8, 8>}, {transform_indices = @transform_3, window_bounds = array<i64: 2, 1, 8>}, {pipeline_mode = #tpu.pipeline_mode<synchronous>, transform_indices = @transform_4, window_bounds = array<i64: 8, 32, 32>}, {pipeline_mode = #tpu.pipeline_mode<synchronous>, transform_indices = @transform_5, window_bounds = array<i64: 2, 64, 64>}, {pipeline_mode = #tpu.pipeline_mode<synchronous>, transform_indices = @transform_6, window_bounds = array<i64: 16, 64>}, {transform_indices = @transform_7, window_bounds = array<i64: 2, 8, 32>}]} {
    %c0 = arith.constant 0 : index
    %c0_0 = arith.constant 0 : index
    %c0_1 = arith.constant 0 : index
    %0 = vector.load %arg1[%c0, %c0_0, %c0_1] : memref<2x8x32xf32, #tpu.memory_space<vmem>>, vector<2x8x32xf32>
    %1 = vector.shape_cast %0 : vector<2x8x32xf32> to vector<16x32xf32>
    %c0_2 = arith.constant 0 : index
    %c0_3 = arith.constant 0 : index
    %c0_4 = arith.constant 0 : index
    %2 = vector.load %arg2[%c0_2, %c0_3, %c0_4] : memref<2x8x32xf32, #tpu.memory_space<vmem>>, vector<2x8x32xf32>
    %3 = vector.shape_cast %2 : vector<2x8x32xf32> to vector<16x32xf32>
    %c0_5 = arith.constant 0 : index
    %c0_6 = arith.constant 0 : index
    %4 = vector.load %arg7[%c0_5, %c0_6] : memref<16x64xf32, #tpu.memory_space<vmem>>, vector<16x64xf32>
    %c0_7 = arith.constant 0 : index
    %c0_8 = arith.constant 0 : index
    %c0_9 = arith.constant 0 : index
    %5 = vector.load %arg3[%c0_7, %c0_8, %c0_9] : memref<2x8x8xf32, #tpu.memory_space<vmem>>, vector<2x8x8xf32>
    %c0_10 = arith.constant 0 : index
    %c0_11 = arith.constant 0 : index
    %c0_12 = arith.constant 0 : index
    %6 = vector.load %arg4[%c0_10, %c0_11, %c0_12] : memref<2x1x8xf32, #tpu.memory_space<vmem>>, vector<2x1x8xf32>
    %c0_13 = arith.constant 0 : index
    %c0_14 = arith.constant 0 : index
    %c0_15 = arith.constant 0 : index
    %7 = vector.load %arg5[%c0_13, %c0_14, %c0_15] : memref<8x32x32xf32, #tpu.memory_space<vmem>>, vector<1x32x32xf32>
    %8 = vector.shape_cast %7 : vector<1x32x32xf32> to vector<32x32xf32>
    %c1 = arith.constant 1 : index
    %c0_16 = arith.constant 0 : index
    %c0_17 = arith.constant 0 : index
    %9 = vector.load %arg5[%c1, %c0_16, %c0_17] : memref<8x32x32xf32, #tpu.memory_space<vmem>>, vector<1x32x32xf32>
    %10 = vector.shape_cast %9 : vector<1x32x32xf32> to vector<32x32xf32>
    %c2 = arith.constant 2 : index
    %c0_18 = arith.constant 0 : index
    %c0_19 = arith.constant 0 : index
    %11 = vector.load %arg5[%c2, %c0_18, %c0_19] : memref<8x32x32xf32, #tpu.memory_space<vmem>>, vector<1x32x32xf32>
    %12 = vector.shape_cast %11 : vector<1x32x32xf32> to vector<32x32xf32>
    %c3 = arith.constant 3 : index
    %c0_20 = arith.constant 0 : index
    %c0_21 = arith.constant 0 : index
    %13 = vector.load %arg5[%c3, %c0_20, %c0_21] : memref<8x32x32xf32, #tpu.memory_space<vmem>>, vector<1x32x32xf32>
    %14 = vector.shape_cast %13 : vector<1x32x32xf32> to vector<32x32xf32>
    %cst = arith.constant dense<0.000000e+00> : vector<16x32xf32>
    %15 = tpu.matmul %1, %8, %cst {dimension_numbers = #tpu.dot_dimension_numbers<[1], [0], [0], [1], [0, 0, 1, 1], [], []>} : vector<16x32xf32>, vector<32x32xf32>, vector<16x32xf32> -> vector<16x32xf32>
    %16 = vector.extract_strided_slice %4 {offsets = [0, 0], sizes = [1, 32], strides = [1, 1]} : vector<16x64xf32> to vector<1x32xf32>
    %17 = vector.broadcast %16 : vector<1x32xf32> to vector<16x32xf32>
    %18 = arith.addf %15, %17 : vector<16x32xf32>
    %cst_22 = arith.constant dense<0.000000e+00> : vector<16x32xf32>
    %19 = tpu.matmul %1, %10, %cst_22 {dimension_numbers = #tpu.dot_dimension_numbers<[1], [0], [0], [1], [0, 0, 1, 1], [], []>} : vector<16x32xf32>, vector<32x32xf32>, vector<16x32xf32> -> vector<16x32xf32>
    %20 = vector.extract_strided_slice %4 {offsets = [1, 0], sizes = [1, 32], strides = [1, 1]} : vector<16x64xf32> to vector<1x32xf32>
    %21 = vector.broadcast %20 : vector<1x32xf32> to vector<16x32xf32>
    %22 = arith.addf %19, %21 : vector<16x32xf32>
    %cst_23 = arith.constant dense<0.000000e+00> : vector<16x32xf32>
    %23 = tpu.matmul %1, %12, %cst_23 {dimension_numbers = #tpu.dot_dimension_numbers<[1], [0], [0], [1], [0, 0, 1, 1], [], []>} : vector<16x32xf32>, vector<32x32xf32>, vector<16x32xf32> -> vector<16x32xf32>
    %24 = vector.extract_strided_slice %4 {offsets = [2, 0], sizes = [1, 32], strides = [1, 1]} : vector<16x64xf32> to vector<1x32xf32>
    %25 = vector.broadcast %24 : vector<1x32xf32> to vector<16x32xf32>
    %26 = arith.addf %23, %25 : vector<16x32xf32>
    %27 = vector.extract_strided_slice %18 {offsets = [0, 0], sizes = [8, 32], strides = [1, 1]} : vector<16x32xf32> to vector<8x32xf32>
    %28 = vector.extract_strided_slice %22 {offsets = [0, 0], sizes = [8, 32], strides = [1, 1]} : vector<16x32xf32> to vector<8x32xf32>
    %29 = vector.extract_strided_slice %26 {offsets = [0, 0], sizes = [8, 32], strides = [1, 1]} : vector<16x32xf32> to vector<8x32xf32>
    %30 = vector.extract_strided_slice %5 {offsets = [0, 0, 0], sizes = [1, 8, 8], strides = [1, 1, 1]} : vector<2x8x8xf32> to vector<1x8x8xf32>
    %31 = vector.shape_cast %30 : vector<1x8x8xf32> to vector<8x8xf32>
    %32 = vector.extract_strided_slice %27 {offsets = [0, 0], sizes = [8, 8], strides = [1, 1]} : vector<8x32xf32> to vector<8x8xf32>
    %33 = vector.extract_strided_slice %28 {offsets = [0, 0], sizes = [8, 8], strides = [1, 1]} : vector<8x32xf32> to vector<8x8xf32>
    %cst_24 = arith.constant dense<0.000000e+00> : vector<8x8xf32>
    %34 = tpu.matmul %32, %33, %cst_24 {dimension_numbers = #tpu.dot_dimension_numbers<[1], [1], [0], [0], [0, 0, 1, 0], [], []>} : vector<8x8xf32>, vector<8x8xf32>, vector<8x8xf32> -> vector<8x8xf32>
    %35 = arith.addf %34, %31 : vector<8x8xf32>
    %cst_25 = arith.constant dense<0xFF800000> : vector<8xf32>
    %36 = vector.multi_reduction <maximumf>, %35, %cst_25 [1] : vector<8x8xf32> to vector<8xf32>
    %37 = vector.shape_cast %36 : vector<8xf32> to vector<8x1xf32>
    %38 = vector.broadcast %37 : vector<8x1xf32> to vector<8x8xf32>
    %39 = arith.subf %35, %38 : vector<8x8xf32>
    %40 = math.exp %39 : vector<8x8xf32>
    %cst_26 = arith.constant dense<0.000000e+00> : vector<8xf32>
    %41 = vector.multi_reduction <add>, %40, %cst_26 [1] : vector<8x8xf32> to vector<8xf32>
    %42 = vector.shape_cast %41 : vector<8xf32> to vector<8x1xf32>
    %43 = tpu.reciprocal %42 {approx = true} : vector<8x1xf32> -> vector<8x1xf32>
    %44 = vector.broadcast %43 : vector<8x1xf32> to vector<8x8xf32>
    %45 = arith.mulf %40, %44 : vector<8x8xf32>
    %46 = vector.extract_strided_slice %29 {offsets = [0, 0], sizes = [8, 8], strides = [1, 1]} : vector<8x32xf32> to vector<8x8xf32>
    %cst_27 = arith.constant dense<0.000000e+00> : vector<8x8xf32>
    %47 = tpu.matmul %45, %46, %cst_27 {dimension_numbers = #tpu.dot_dimension_numbers<[1], [0], [0], [1], [0, 0, 1, 1], [], []>} : vector<8x8xf32>, vector<8x8xf32>, vector<8x8xf32> -> vector<8x8xf32>
    %48 = vector.extract_strided_slice %14 {offsets = [0, 0], sizes = [8, 32], strides = [1, 1]} : vector<32x32xf32> to vector<8x32xf32>
    %cst_28 = arith.constant dense<0.000000e+00> : vector<8x32xf32>
    %49 = tpu.matmul %47, %48, %cst_28 {dimension_numbers = #tpu.dot_dimension_numbers<[1], [0], [0], [1], [0, 0, 1, 1], [], []>} : vector<8x8xf32>, vector<8x32xf32>, vector<8x32xf32> -> vector<8x32xf32>
    %50 = vector.extract_strided_slice %27 {offsets = [0, 8], sizes = [8, 8], strides = [1, 1]} : vector<8x32xf32> to vector<8x8xf32>
    %51 = vector.extract_strided_slice %28 {offsets = [0, 8], sizes = [8, 8], strides = [1, 1]} : vector<8x32xf32> to vector<8x8xf32>
    %cst_29 = arith.constant dense<0.000000e+00> : vector<8x8xf32>
    %52 = tpu.matmul %50, %51, %cst_29 {dimension_numbers = #tpu.dot_dimension_numbers<[1], [1], [0], [0], [0, 0, 1, 0], [], []>} : vector<8x8xf32>, vector<8x8xf32>, vector<8x8xf32> -> vector<8x8xf32>
    %53 = arith.addf %52, %31 : vector<8x8xf32>
    %cst_30 = arith.constant dense<0xFF800000> : vector<8xf32>
    %54 = vector.multi_reduction <maximumf>, %53, %cst_30 [1] : vector<8x8xf32> to vector<8xf32>
    %55 = vector.shape_cast %54 : vector<8xf32> to vector<8x1xf32>
    %56 = vector.broadcast %55 : vector<8x1xf32> to vector<8x8xf32>
    %57 = arith.subf %53, %56 : vector<8x8xf32>
    %58 = math.exp %57 : vector<8x8xf32>
    %cst_31 = arith.constant dense<0.000000e+00> : vector<8xf32>
    %59 = vector.multi_reduction <add>, %58, %cst_31 [1] : vector<8x8xf32> to vector<8xf32>
    %60 = vector.shape_cast %59 : vector<8xf32> to vector<8x1xf32>
    %61 = tpu.reciprocal %60 {approx = true} : vector<8x1xf32> -> vector<8x1xf32>
    %62 = vector.broadcast %61 : vector<8x1xf32> to vector<8x8xf32>
    %63 = arith.mulf %58, %62 : vector<8x8xf32>
    %64 = vector.extract_strided_slice %29 {offsets = [0, 8], sizes = [8, 8], strides = [1, 1]} : vector<8x32xf32> to vector<8x8xf32>
    %cst_32 = arith.constant dense<0.000000e+00> : vector<8x8xf32>
    %65 = tpu.matmul %63, %64, %cst_32 {dimension_numbers = #tpu.dot_dimension_numbers<[1], [0], [0], [1], [0, 0, 1, 1], [], []>} : vector<8x8xf32>, vector<8x8xf32>, vector<8x8xf32> -> vector<8x8xf32>
    %66 = vector.extract_strided_slice %14 {offsets = [8, 0], sizes = [8, 32], strides = [1, 1]} : vector<32x32xf32> to vector<8x32xf32>
    %cst_33 = arith.constant dense<0.000000e+00> : vector<8x32xf32>
    %67 = tpu.matmul %65, %66, %cst_33 {dimension_numbers = #tpu.dot_dimension_numbers<[1], [0], [0], [1], [0, 0, 1, 1], [], []>} : vector<8x8xf32>, vector<8x32xf32>, vector<8x32xf32> -> vector<8x32xf32>
    %68 = arith.addf %49, %67 : vector<8x32xf32>
    %69 = vector.extract_strided_slice %27 {offsets = [0, 16], sizes = [8, 8], strides = [1, 1]} : vector<8x32xf32> to vector<8x8xf32>
    %70 = vector.extract_strided_slice %28 {offsets = [0, 16], sizes = [8, 8], strides = [1, 1]} : vector<8x32xf32> to vector<8x8xf32>
    %cst_34 = arith.constant dense<0.000000e+00> : vector<8x8xf32>
    %71 = tpu.matmul %69, %70, %cst_34 {dimension_numbers = #tpu.dot_dimension_numbers<[1], [1], [0], [0], [0, 0, 1, 0], [], []>} : vector<8x8xf32>, vector<8x8xf32>, vector<8x8xf32> -> vector<8x8xf32>
    %72 = arith.addf %71, %31 : vector<8x8xf32>
    %cst_35 = arith.constant dense<0xFF800000> : vector<8xf32>
    %73 = vector.multi_reduction <maximumf>, %72, %cst_35 [1] : vector<8x8xf32> to vector<8xf32>
    %74 = vector.shape_cast %73 : vector<8xf32> to vector<8x1xf32>
    %75 = vector.broadcast %74 : vector<8x1xf32> to vector<8x8xf32>
    %76 = arith.subf %72, %75 : vector<8x8xf32>
    %77 = math.exp %76 : vector<8x8xf32>
    %cst_36 = arith.constant dense<0.000000e+00> : vector<8xf32>
    %78 = vector.multi_reduction <add>, %77, %cst_36 [1] : vector<8x8xf32> to vector<8xf32>
    %79 = vector.shape_cast %78 : vector<8xf32> to vector<8x1xf32>
    %80 = tpu.reciprocal %79 {approx = true} : vector<8x1xf32> -> vector<8x1xf32>
    %81 = vector.broadcast %80 : vector<8x1xf32> to vector<8x8xf32>
    %82 = arith.mulf %77, %81 : vector<8x8xf32>
    %83 = vector.extract_strided_slice %29 {offsets = [0, 16], sizes = [8, 8], strides = [1, 1]} : vector<8x32xf32> to vector<8x8xf32>
    %cst_37 = arith.constant dense<0.000000e+00> : vector<8x8xf32>
    %84 = tpu.matmul %82, %83, %cst_37 {dimension_numbers = #tpu.dot_dimension_numbers<[1], [0], [0], [1], [0, 0, 1, 1], [], []>} : vector<8x8xf32>, vector<8x8xf32>, vector<8x8xf32> -> vector<8x8xf32>
    %85 = vector.extract_strided_slice %14 {offsets = [16, 0], sizes = [8, 32], strides = [1, 1]} : vector<32x32xf32> to vector<8x32xf32>
    %cst_38 = arith.constant dense<0.000000e+00> : vector<8x32xf32>
    %86 = tpu.matmul %84, %85, %cst_38 {dimension_numbers = #tpu.dot_dimension_numbers<[1], [0], [0], [1], [0, 0, 1, 1], [], []>} : vector<8x8xf32>, vector<8x32xf32>, vector<8x32xf32> -> vector<8x32xf32>
    %87 = arith.addf %68, %86 : vector<8x32xf32>
    %88 = vector.extract_strided_slice %27 {offsets = [0, 24], sizes = [8, 8], strides = [1, 1]} : vector<8x32xf32> to vector<8x8xf32>
    %89 = vector.extract_strided_slice %28 {offsets = [0, 24], sizes = [8, 8], strides = [1, 1]} : vector<8x32xf32> to vector<8x8xf32>
    %cst_39 = arith.constant dense<0.000000e+00> : vector<8x8xf32>
    %90 = tpu.matmul %88, %89, %cst_39 {dimension_numbers = #tpu.dot_dimension_numbers<[1], [1], [0], [0], [0, 0, 1, 0], [], []>} : vector<8x8xf32>, vector<8x8xf32>, vector<8x8xf32> -> vector<8x8xf32>
    %91 = arith.addf %90, %31 : vector<8x8xf32>
    %cst_40 = arith.constant dense<0xFF800000> : vector<8xf32>
    %92 = vector.multi_reduction <maximumf>, %91, %cst_40 [1] : vector<8x8xf32> to vector<8xf32>
    %93 = vector.shape_cast %92 : vector<8xf32> to vector<8x1xf32>
    %94 = vector.broadcast %93 : vector<8x1xf32> to vector<8x8xf32>
    %95 = arith.subf %91, %94 : vector<8x8xf32>
    %96 = math.exp %95 : vector<8x8xf32>
    %cst_41 = arith.constant dense<0.000000e+00> : vector<8xf32>
    %97 = vector.multi_reduction <add>, %96, %cst_41 [1] : vector<8x8xf32> to vector<8xf32>
    %98 = vector.shape_cast %97 : vector<8xf32> to vector<8x1xf32>
    %99 = tpu.reciprocal %98 {approx = true} : vector<8x1xf32> -> vector<8x1xf32>
    %100 = vector.broadcast %99 : vector<8x1xf32> to vector<8x8xf32>
    %101 = arith.mulf %96, %100 : vector<8x8xf32>
    %102 = vector.extract_strided_slice %29 {offsets = [0, 24], sizes = [8, 8], strides = [1, 1]} : vector<8x32xf32> to vector<8x8xf32>
    %cst_42 = arith.constant dense<0.000000e+00> : vector<8x8xf32>
    %103 = tpu.matmul %101, %102, %cst_42 {dimension_numbers = #tpu.dot_dimension_numbers<[1], [0], [0], [1], [0, 0, 1, 1], [], []>} : vector<8x8xf32>, vector<8x8xf32>, vector<8x8xf32> -> vector<8x8xf32>
    %104 = vector.extract_strided_slice %14 {offsets = [24, 0], sizes = [8, 32], strides = [1, 1]} : vector<32x32xf32> to vector<8x32xf32>
    %cst_43 = arith.constant dense<0.000000e+00> : vector<8x32xf32>
    %105 = tpu.matmul %103, %104, %cst_43 {dimension_numbers = #tpu.dot_dimension_numbers<[1], [0], [0], [1], [0, 0, 1, 1], [], []>} : vector<8x8xf32>, vector<8x32xf32>, vector<8x32xf32> -> vector<8x32xf32>
    %106 = arith.addf %87, %105 : vector<8x32xf32>
    %107 = vector.extract_strided_slice %18 {offsets = [8, 0], sizes = [8, 32], strides = [1, 1]} : vector<16x32xf32> to vector<8x32xf32>
    %108 = vector.extract_strided_slice %22 {offsets = [8, 0], sizes = [8, 32], strides = [1, 1]} : vector<16x32xf32> to vector<8x32xf32>
    %109 = vector.extract_strided_slice %26 {offsets = [8, 0], sizes = [8, 32], strides = [1, 1]} : vector<16x32xf32> to vector<8x32xf32>
    %110 = vector.extract_strided_slice %5 {offsets = [1, 0, 0], sizes = [1, 8, 8], strides = [1, 1, 1]} : vector<2x8x8xf32> to vector<1x8x8xf32>
    %111 = vector.shape_cast %110 : vector<1x8x8xf32> to vector<8x8xf32>
    %112 = vector.extract_strided_slice %107 {offsets = [0, 0], sizes = [8, 8], strides = [1, 1]} : vector<8x32xf32> to vector<8x8xf32>
    %113 = vector.extract_strided_slice %108 {offsets = [0, 0], sizes = [8, 8], strides = [1, 1]} : vector<8x32xf32> to vector<8x8xf32>
    %cst_44 = arith.constant dense<0.000000e+00> : vector<8x8xf32>
    %114 = tpu.matmul %112, %113, %cst_44 {dimension_numbers = #tpu.dot_dimension_numbers<[1], [1], [0], [0], [0, 0, 1, 0], [], []>} : vector<8x8xf32>, vector<8x8xf32>, vector<8x8xf32> -> vector<8x8xf32>
    %115 = arith.addf %114, %111 : vector<8x8xf32>
    %cst_45 = arith.constant dense<0xFF800000> : vector<8xf32>
    %116 = vector.multi_reduction <maximumf>, %115, %cst_45 [1] : vector<8x8xf32> to vector<8xf32>
    %117 = vector.shape_cast %116 : vector<8xf32> to vector<8x1xf32>
    %118 = vector.broadcast %117 : vector<8x1xf32> to vector<8x8xf32>
    %119 = arith.subf %115, %118 : vector<8x8xf32>
    %120 = math.exp %119 : vector<8x8xf32>
    %cst_46 = arith.constant dense<0.000000e+00> : vector<8xf32>
    %121 = vector.multi_reduction <add>, %120, %cst_46 [1] : vector<8x8xf32> to vector<8xf32>
    %122 = vector.shape_cast %121 : vector<8xf32> to vector<8x1xf32>
    %123 = tpu.reciprocal %122 {approx = true} : vector<8x1xf32> -> vector<8x1xf32>
    %124 = vector.broadcast %123 : vector<8x1xf32> to vector<8x8xf32>
    %125 = arith.mulf %120, %124 : vector<8x8xf32>
    %126 = vector.extract_strided_slice %109 {offsets = [0, 0], sizes = [8, 8], strides = [1, 1]} : vector<8x32xf32> to vector<8x8xf32>
    %cst_47 = arith.constant dense<0.000000e+00> : vector<8x8xf32>
    %127 = tpu.matmul %125, %126, %cst_47 {dimension_numbers = #tpu.dot_dimension_numbers<[1], [0], [0], [1], [0, 0, 1, 1], [], []>} : vector<8x8xf32>, vector<8x8xf32>, vector<8x8xf32> -> vector<8x8xf32>
    %128 = vector.extract_strided_slice %14 {offsets = [0, 0], sizes = [8, 32], strides = [1, 1]} : vector<32x32xf32> to vector<8x32xf32>
    %cst_48 = arith.constant dense<0.000000e+00> : vector<8x32xf32>
    %129 = tpu.matmul %127, %128, %cst_48 {dimension_numbers = #tpu.dot_dimension_numbers<[1], [0], [0], [1], [0, 0, 1, 1], [], []>} : vector<8x8xf32>, vector<8x32xf32>, vector<8x32xf32> -> vector<8x32xf32>
    %130 = vector.extract_strided_slice %107 {offsets = [0, 8], sizes = [8, 8], strides = [1, 1]} : vector<8x32xf32> to vector<8x8xf32>
    %131 = vector.extract_strided_slice %108 {offsets = [0, 8], sizes = [8, 8], strides = [1, 1]} : vector<8x32xf32> to vector<8x8xf32>
    %cst_49 = arith.constant dense<0.000000e+00> : vector<8x8xf32>
    %132 = tpu.matmul %130, %131, %cst_49 {dimension_numbers = #tpu.dot_dimension_numbers<[1], [1], [0], [0], [0, 0, 1, 0], [], []>} : vector<8x8xf32>, vector<8x8xf32>, vector<8x8xf32> -> vector<8x8xf32>
    %133 = arith.addf %132, %111 : vector<8x8xf32>
    %cst_50 = arith.constant dense<0xFF800000> : vector<8xf32>
    %134 = vector.multi_reduction <maximumf>, %133, %cst_50 [1] : vector<8x8xf32> to vector<8xf32>
    %135 = vector.shape_cast %134 : vector<8xf32> to vector<8x1xf32>
    %136 = vector.broadcast %135 : vector<8x1xf32> to vector<8x8xf32>
    %137 = arith.subf %133, %136 : vector<8x8xf32>
    %138 = math.exp %137 : vector<8x8xf32>
    %cst_51 = arith.constant dense<0.000000e+00> : vector<8xf32>
    %139 = vector.multi_reduction <add>, %138, %cst_51 [1] : vector<8x8xf32> to vector<8xf32>
    %140 = vector.shape_cast %139 : vector<8xf32> to vector<8x1xf32>
    %141 = tpu.reciprocal %140 {approx = true} : vector<8x1xf32> -> vector<8x1xf32>
    %142 = vector.broadcast %141 : vector<8x1xf32> to vector<8x8xf32>
    %143 = arith.mulf %138, %142 : vector<8x8xf32>
    %144 = vector.extract_strided_slice %109 {offsets = [0, 8], sizes = [8, 8], strides = [1, 1]} : vector<8x32xf32> to vector<8x8xf32>
    %cst_52 = arith.constant dense<0.000000e+00> : vector<8x8xf32>
    %145 = tpu.matmul %143, %144, %cst_52 {dimension_numbers = #tpu.dot_dimension_numbers<[1], [0], [0], [1], [0, 0, 1, 1], [], []>} : vector<8x8xf32>, vector<8x8xf32>, vector<8x8xf32> -> vector<8x8xf32>
    %146 = vector.extract_strided_slice %14 {offsets = [8, 0], sizes = [8, 32], strides = [1, 1]} : vector<32x32xf32> to vector<8x32xf32>
    %cst_53 = arith.constant dense<0.000000e+00> : vector<8x32xf32>
    %147 = tpu.matmul %145, %146, %cst_53 {dimension_numbers = #tpu.dot_dimension_numbers<[1], [0], [0], [1], [0, 0, 1, 1], [], []>} : vector<8x8xf32>, vector<8x32xf32>, vector<8x32xf32> -> vector<8x32xf32>
    %148 = arith.addf %129, %147 : vector<8x32xf32>
    %149 = vector.extract_strided_slice %107 {offsets = [0, 16], sizes = [8, 8], strides = [1, 1]} : vector<8x32xf32> to vector<8x8xf32>
    %150 = vector.extract_strided_slice %108 {offsets = [0, 16], sizes = [8, 8], strides = [1, 1]} : vector<8x32xf32> to vector<8x8xf32>
    %cst_54 = arith.constant dense<0.000000e+00> : vector<8x8xf32>
    %151 = tpu.matmul %149, %150, %cst_54 {dimension_numbers = #tpu.dot_dimension_numbers<[1], [1], [0], [0], [0, 0, 1, 0], [], []>} : vector<8x8xf32>, vector<8x8xf32>, vector<8x8xf32> -> vector<8x8xf32>
    %152 = arith.addf %151, %111 : vector<8x8xf32>
    %cst_55 = arith.constant dense<0xFF800000> : vector<8xf32>
    %153 = vector.multi_reduction <maximumf>, %152, %cst_55 [1] : vector<8x8xf32> to vector<8xf32>
    %154 = vector.shape_cast %153 : vector<8xf32> to vector<8x1xf32>
    %155 = vector.broadcast %154 : vector<8x1xf32> to vector<8x8xf32>
    %156 = arith.subf %152, %155 : vector<8x8xf32>
    %157 = math.exp %156 : vector<8x8xf32>
    %cst_56 = arith.constant dense<0.000000e+00> : vector<8xf32>
    %158 = vector.multi_reduction <add>, %157, %cst_56 [1] : vector<8x8xf32> to vector<8xf32>
    %159 = vector.shape_cast %158 : vector<8xf32> to vector<8x1xf32>
    %160 = tpu.reciprocal %159 {approx = true} : vector<8x1xf32> -> vector<8x1xf32>
    %161 = vector.broadcast %160 : vector<8x1xf32> to vector<8x8xf32>
    %162 = arith.mulf %157, %161 : vector<8x8xf32>
    %163 = vector.extract_strided_slice %109 {offsets = [0, 16], sizes = [8, 8], strides = [1, 1]} : vector<8x32xf32> to vector<8x8xf32>
    %cst_57 = arith.constant dense<0.000000e+00> : vector<8x8xf32>
    %164 = tpu.matmul %162, %163, %cst_57 {dimension_numbers = #tpu.dot_dimension_numbers<[1], [0], [0], [1], [0, 0, 1, 1], [], []>} : vector<8x8xf32>, vector<8x8xf32>, vector<8x8xf32> -> vector<8x8xf32>
    %165 = vector.extract_strided_slice %14 {offsets = [16, 0], sizes = [8, 32], strides = [1, 1]} : vector<32x32xf32> to vector<8x32xf32>
    %cst_58 = arith.constant dense<0.000000e+00> : vector<8x32xf32>
    %166 = tpu.matmul %164, %165, %cst_58 {dimension_numbers = #tpu.dot_dimension_numbers<[1], [0], [0], [1], [0, 0, 1, 1], [], []>} : vector<8x8xf32>, vector<8x32xf32>, vector<8x32xf32> -> vector<8x32xf32>
    %167 = arith.addf %148, %166 : vector<8x32xf32>
    %168 = vector.extract_strided_slice %107 {offsets = [0, 24], sizes = [8, 8], strides = [1, 1]} : vector<8x32xf32> to vector<8x8xf32>
    %169 = vector.extract_strided_slice %108 {offsets = [0, 24], sizes = [8, 8], strides = [1, 1]} : vector<8x32xf32> to vector<8x8xf32>
    %cst_59 = arith.constant dense<0.000000e+00> : vector<8x8xf32>
    %170 = tpu.matmul %168, %169, %cst_59 {dimension_numbers = #tpu.dot_dimension_numbers<[1], [1], [0], [0], [0, 0, 1, 0], [], []>} : vector<8x8xf32>, vector<8x8xf32>, vector<8x8xf32> -> vector<8x8xf32>
    %171 = arith.addf %170, %111 : vector<8x8xf32>
    %cst_60 = arith.constant dense<0xFF800000> : vector<8xf32>
    %172 = vector.multi_reduction <maximumf>, %171, %cst_60 [1] : vector<8x8xf32> to vector<8xf32>
    %173 = vector.shape_cast %172 : vector<8xf32> to vector<8x1xf32>
    %174 = vector.broadcast %173 : vector<8x1xf32> to vector<8x8xf32>
    %175 = arith.subf %171, %174 : vector<8x8xf32>
    %176 = math.exp %175 : vector<8x8xf32>
    %cst_61 = arith.constant dense<0.000000e+00> : vector<8xf32>
    %177 = vector.multi_reduction <add>, %176, %cst_61 [1] : vector<8x8xf32> to vector<8xf32>
    %178 = vector.shape_cast %177 : vector<8xf32> to vector<8x1xf32>
    %179 = tpu.reciprocal %178 {approx = true} : vector<8x1xf32> -> vector<8x1xf32>
    %180 = vector.broadcast %179 : vector<8x1xf32> to vector<8x8xf32>
    %181 = arith.mulf %176, %180 : vector<8x8xf32>
    %182 = vector.extract_strided_slice %109 {offsets = [0, 24], sizes = [8, 8], strides = [1, 1]} : vector<8x32xf32> to vector<8x8xf32>
    %cst_62 = arith.constant dense<0.000000e+00> : vector<8x8xf32>
    %183 = tpu.matmul %181, %182, %cst_62 {dimension_numbers = #tpu.dot_dimension_numbers<[1], [0], [0], [1], [0, 0, 1, 1], [], []>} : vector<8x8xf32>, vector<8x8xf32>, vector<8x8xf32> -> vector<8x8xf32>
    %184 = vector.extract_strided_slice %14 {offsets = [24, 0], sizes = [8, 32], strides = [1, 1]} : vector<32x32xf32> to vector<8x32xf32>
    %cst_63 = arith.constant dense<0.000000e+00> : vector<8x32xf32>
    %185 = tpu.matmul %183, %184, %cst_63 {dimension_numbers = #tpu.dot_dimension_numbers<[1], [0], [0], [1], [0, 0, 1, 1], [], []>} : vector<8x8xf32>, vector<8x32xf32>, vector<8x32xf32> -> vector<8x32xf32>
    %186 = arith.addf %167, %185 : vector<8x32xf32>
    %187 = tpu.concatenate %106, %186 in 0 : vector<8x32xf32>, vector<8x32xf32> -> vector<16x32xf32>
    %188 = vector.extract_strided_slice %4 {offsets = [3, 0], sizes = [1, 32], strides = [1, 1]} : vector<16x64xf32> to vector<1x32xf32>
    %189 = vector.broadcast %188 : vector<1x32xf32> to vector<16x32xf32>
    %190 = arith.addf %187, %189 : vector<16x32xf32>
    %191 = arith.addf %190, %1 : vector<16x32xf32>
    %cst_64 = arith.constant dense<0.000000e+00> : vector<16xf32>
    %192 = vector.multi_reduction <add>, %191, %cst_64 [1] : vector<16x32xf32> to vector<16xf32>
    %193 = vector.shape_cast %192 : vector<16xf32> to vector<16x1xf32>
    %cst_65 = arith.constant 3.200000e+01 : f32
    %194 = vector.broadcast %cst_65 : f32 to vector<16x1xf32>
    %195 = arith.divf %193, %194 : vector<16x1xf32>
    %196 = vector.broadcast %195 : vector<16x1xf32> to vector<16x32xf32>
    %197 = arith.subf %191, %196 : vector<16x32xf32>
    %198 = arith.mulf %197, %197 : vector<16x32xf32>
    %cst_66 = arith.constant dense<0.000000e+00> : vector<16xf32>
    %199 = vector.multi_reduction <add>, %198, %cst_66 [1] : vector<16x32xf32> to vector<16xf32>
    %200 = vector.shape_cast %199 : vector<16xf32> to vector<16x1xf32>
    %cst_67 = arith.constant 3.200000e+01 : f32
    %201 = vector.broadcast %cst_67 : f32 to vector<16x1xf32>
    %202 = arith.divf %200, %201 : vector<16x1xf32>
    %cst_68 = arith.constant 9.99999974E-6 : f32
    %203 = vector.broadcast %cst_68 : f32 to vector<16x1xf32>
    %204 = arith.addf %202, %203 : vector<16x1xf32>
    %205 = math.rsqrt %204 : vector<16x1xf32>
    %206 = vector.broadcast %205 : vector<16x1xf32> to vector<16x32xf32>
    %207 = arith.mulf %197, %206 : vector<16x32xf32>
    %208 = vector.extract_strided_slice %4 {offsets = [10, 0], sizes = [1, 32], strides = [1, 1]} : vector<16x64xf32> to vector<1x32xf32>
    %209 = vector.broadcast %208 : vector<1x32xf32> to vector<16x32xf32>
    %210 = arith.mulf %207, %209 : vector<16x32xf32>
    %211 = vector.extract_strided_slice %4 {offsets = [11, 0], sizes = [1, 32], strides = [1, 1]} : vector<16x64xf32> to vector<1x32xf32>
    %212 = vector.broadcast %211 : vector<1x32xf32> to vector<16x32xf32>
    %213 = arith.addf %210, %212 : vector<16x32xf32>
    %c4 = arith.constant 4 : index
    %c0_69 = arith.constant 0 : index
    %c0_70 = arith.constant 0 : index
    %214 = vector.load %arg5[%c4, %c0_69, %c0_70] : memref<8x32x32xf32, #tpu.memory_space<vmem>>, vector<1x32x32xf32>
    %215 = vector.shape_cast %214 : vector<1x32x32xf32> to vector<32x32xf32>
    %c5 = arith.constant 5 : index
    %c0_71 = arith.constant 0 : index
    %c0_72 = arith.constant 0 : index
    %216 = vector.load %arg5[%c5, %c0_71, %c0_72] : memref<8x32x32xf32, #tpu.memory_space<vmem>>, vector<1x32x32xf32>
    %217 = vector.shape_cast %216 : vector<1x32x32xf32> to vector<32x32xf32>
    %c6 = arith.constant 6 : index
    %c0_73 = arith.constant 0 : index
    %c0_74 = arith.constant 0 : index
    %218 = vector.load %arg5[%c6, %c0_73, %c0_74] : memref<8x32x32xf32, #tpu.memory_space<vmem>>, vector<1x32x32xf32>
    %219 = vector.shape_cast %218 : vector<1x32x32xf32> to vector<32x32xf32>
    %c7 = arith.constant 7 : index
    %c0_75 = arith.constant 0 : index
    %c0_76 = arith.constant 0 : index
    %220 = vector.load %arg5[%c7, %c0_75, %c0_76] : memref<8x32x32xf32, #tpu.memory_space<vmem>>, vector<1x32x32xf32>
    %221 = vector.shape_cast %220 : vector<1x32x32xf32> to vector<32x32xf32>
    %cst_77 = arith.constant dense<0.000000e+00> : vector<16x32xf32>
    %222 = tpu.matmul %213, %215, %cst_77 {dimension_numbers = #tpu.dot_dimension_numbers<[1], [0], [0], [1], [0, 0, 1, 1], [], []>} : vector<16x32xf32>, vector<32x32xf32>, vector<16x32xf32> -> vector<16x32xf32>
    %223 = vector.extract_strided_slice %4 {offsets = [4, 0], sizes = [1, 32], strides = [1, 1]} : vector<16x64xf32> to vector<1x32xf32>
    %224 = vector.broadcast %223 : vector<1x32xf32> to vector<16x32xf32>
    %225 = arith.addf %222, %224 : vector<16x32xf32>
    %cst_78 = arith.constant dense<0.000000e+00> : vector<16x32xf32>
    %226 = tpu.matmul %3, %217, %cst_78 {dimension_numbers = #tpu.dot_dimension_numbers<[1], [0], [0], [1], [0, 0, 1, 1], [], []>} : vector<16x32xf32>, vector<32x32xf32>, vector<16x32xf32> -> vector<16x32xf32>
    %227 = vector.extract_strided_slice %4 {offsets = [5, 0], sizes = [1, 32], strides = [1, 1]} : vector<16x64xf32> to vector<1x32xf32>
    %228 = vector.broadcast %227 : vector<1x32xf32> to vector<16x32xf32>
    %229 = arith.addf %226, %228 : vector<16x32xf32>
    %cst_79 = arith.constant dense<0.000000e+00> : vector<16x32xf32>
    %230 = tpu.matmul %3, %219, %cst_79 {dimension_numbers = #tpu.dot_dimension_numbers<[1], [0], [0], [1], [0, 0, 1, 1], [], []>} : vector<16x32xf32>, vector<32x32xf32>, vector<16x32xf32> -> vector<16x32xf32>
    %231 = vector.extract_strided_slice %4 {offsets = [6, 0], sizes = [1, 32], strides = [1, 1]} : vector<16x64xf32> to vector<1x32xf32>
    %232 = vector.broadcast %231 : vector<1x32xf32> to vector<16x32xf32>
    %233 = arith.addf %230, %232 : vector<16x32xf32>
    %234 = vector.extract_strided_slice %225 {offsets = [0, 0], sizes = [8, 32], strides = [1, 1]} : vector<16x32xf32> to vector<8x32xf32>
    %235 = vector.extract_strided_slice %229 {offsets = [0, 0], sizes = [8, 32], strides = [1, 1]} : vector<16x32xf32> to vector<8x32xf32>
    %236 = vector.extract_strided_slice %233 {offsets = [0, 0], sizes = [8, 32], strides = [1, 1]} : vector<16x32xf32> to vector<8x32xf32>
    %237 = vector.extract_strided_slice %6 {offsets = [0, 0, 0], sizes = [1, 1, 8], strides = [1, 1, 1]} : vector<2x1x8xf32> to vector<1x1x8xf32>
    %238 = vector.shape_cast %237 : vector<1x1x8xf32> to vector<1x8xf32>
    %239 = vector.extract_strided_slice %234 {offsets = [0, 0], sizes = [8, 8], strides = [1, 1]} : vector<8x32xf32> to vector<8x8xf32>
    %240 = vector.extract_strided_slice %235 {offsets = [0, 0], sizes = [8, 8], strides = [1, 1]} : vector<8x32xf32> to vector<8x8xf32>
    %cst_80 = arith.constant dense<0.000000e+00> : vector<8x8xf32>
    %241 = tpu.matmul %239, %240, %cst_80 {dimension_numbers = #tpu.dot_dimension_numbers<[1], [1], [0], [0], [0, 0, 1, 0], [], []>} : vector<8x8xf32>, vector<8x8xf32>, vector<8x8xf32> -> vector<8x8xf32>
    %242 = vector.broadcast %238 : vector<1x8xf32> to vector<8x8xf32>
    %243 = arith.addf %241, %242 : vector<8x8xf32>
    %cst_81 = arith.constant dense<0xFF800000> : vector<8xf32>
    %244 = vector.multi_reduction <maximumf>, %243, %cst_81 [1] : vector<8x8xf32> to vector<8xf32>
    %245 = vector.shape_cast %244 : vector<8xf32> to vector<8x1xf32>
    %246 = vector.broadcast %245 : vector<8x1xf32> to vector<8x8xf32>
    %247 = arith.subf %243, %246 : vector<8x8xf32>
    %248 = math.exp %247 : vector<8x8xf32>
    %cst_82 = arith.constant dense<0.000000e+00> : vector<8xf32>
    %249 = vector.multi_reduction <add>, %248, %cst_82 [1] : vector<8x8xf32> to vector<8xf32>
    %250 = vector.shape_cast %249 : vector<8xf32> to vector<8x1xf32>
    %251 = tpu.reciprocal %250 {approx = true} : vector<8x1xf32> -> vector<8x1xf32>
    %252 = vector.broadcast %251 : vector<8x1xf32> to vector<8x8xf32>
    %253 = arith.mulf %248, %252 : vector<8x8xf32>
    %254 = vector.extract_strided_slice %236 {offsets = [0, 0], sizes = [8, 8], strides = [1, 1]} : vector<8x32xf32> to vector<8x8xf32>
    %cst_83 = arith.constant dense<0.000000e+00> : vector<8x8xf32>
    %255 = tpu.matmul %253, %254, %cst_83 {dimension_numbers = #tpu.dot_dimension_numbers<[1], [0], [0], [1], [0, 0, 1, 1], [], []>} : vector<8x8xf32>, vector<8x8xf32>, vector<8x8xf32> -> vector<8x8xf32>
    %256 = vector.extract_strided_slice %221 {offsets = [0, 0], sizes = [8, 32], strides = [1, 1]} : vector<32x32xf32> to vector<8x32xf32>
    %cst_84 = arith.constant dense<0.000000e+00> : vector<8x32xf32>
    %257 = tpu.matmul %255, %256, %cst_84 {dimension_numbers = #tpu.dot_dimension_numbers<[1], [0], [0], [1], [0, 0, 1, 1], [], []>} : vector<8x8xf32>, vector<8x32xf32>, vector<8x32xf32> -> vector<8x32xf32>
    %258 = vector.extract_strided_slice %234 {offsets = [0, 8], sizes = [8, 8], strides = [1, 1]} : vector<8x32xf32> to vector<8x8xf32>
    %259 = vector.extract_strided_slice %235 {offsets = [0, 8], sizes = [8, 8], strides = [1, 1]} : vector<8x32xf32> to vector<8x8xf32>
    %cst_85 = arith.constant dense<0.000000e+00> : vector<8x8xf32>
    %260 = tpu.matmul %258, %259, %cst_85 {dimension_numbers = #tpu.dot_dimension_numbers<[1], [1], [0], [0], [0, 0, 1, 0], [], []>} : vector<8x8xf32>, vector<8x8xf32>, vector<8x8xf32> -> vector<8x8xf32>
    %261 = vector.broadcast %238 : vector<1x8xf32> to vector<8x8xf32>
    %262 = arith.addf %260, %261 : vector<8x8xf32>
    %cst_86 = arith.constant dense<0xFF800000> : vector<8xf32>
    %263 = vector.multi_reduction <maximumf>, %262, %cst_86 [1] : vector<8x8xf32> to vector<8xf32>
    %264 = vector.shape_cast %263 : vector<8xf32> to vector<8x1xf32>
    %265 = vector.broadcast %264 : vector<8x1xf32> to vector<8x8xf32>
    %266 = arith.subf %262, %265 : vector<8x8xf32>
    %267 = math.exp %266 : vector<8x8xf32>
    %cst_87 = arith.constant dense<0.000000e+00> : vector<8xf32>
    %268 = vector.multi_reduction <add>, %267, %cst_87 [1] : vector<8x8xf32> to vector<8xf32>
    %269 = vector.shape_cast %268 : vector<8xf32> to vector<8x1xf32>
    %270 = tpu.reciprocal %269 {approx = true} : vector<8x1xf32> -> vector<8x1xf32>
    %271 = vector.broadcast %270 : vector<8x1xf32> to vector<8x8xf32>
    %272 = arith.mulf %267, %271 : vector<8x8xf32>
    %273 = vector.extract_strided_slice %236 {offsets = [0, 8], sizes = [8, 8], strides = [1, 1]} : vector<8x32xf32> to vector<8x8xf32>
    %cst_88 = arith.constant dense<0.000000e+00> : vector<8x8xf32>
    %274 = tpu.matmul %272, %273, %cst_88 {dimension_numbers = #tpu.dot_dimension_numbers<[1], [0], [0], [1], [0, 0, 1, 1], [], []>} : vector<8x8xf32>, vector<8x8xf32>, vector<8x8xf32> -> vector<8x8xf32>
    %275 = vector.extract_strided_slice %221 {offsets = [8, 0], sizes = [8, 32], strides = [1, 1]} : vector<32x32xf32> to vector<8x32xf32>
    %cst_89 = arith.constant dense<0.000000e+00> : vector<8x32xf32>
    %276 = tpu.matmul %274, %275, %cst_89 {dimension_numbers = #tpu.dot_dimension_numbers<[1], [0], [0], [1], [0, 0, 1, 1], [], []>} : vector<8x8xf32>, vector<8x32xf32>, vector<8x32xf32> -> vector<8x32xf32>
    %277 = arith.addf %257, %276 : vector<8x32xf32>
    %278 = vector.extract_strided_slice %234 {offsets = [0, 16], sizes = [8, 8], strides = [1, 1]} : vector<8x32xf32> to vector<8x8xf32>
    %279 = vector.extract_strided_slice %235 {offsets = [0, 16], sizes = [8, 8], strides = [1, 1]} : vector<8x32xf32> to vector<8x8xf32>
    %cst_90 = arith.constant dense<0.000000e+00> : vector<8x8xf32>
    %280 = tpu.matmul %278, %279, %cst_90 {dimension_numbers = #tpu.dot_dimension_numbers<[1], [1], [0], [0], [0, 0, 1, 0], [], []>} : vector<8x8xf32>, vector<8x8xf32>, vector<8x8xf32> -> vector<8x8xf32>
    %281 = vector.broadcast %238 : vector<1x8xf32> to vector<8x8xf32>
    %282 = arith.addf %280, %281 : vector<8x8xf32>
    %cst_91 = arith.constant dense<0xFF800000> : vector<8xf32>
    %283 = vector.multi_reduction <maximumf>, %282, %cst_91 [1] : vector<8x8xf32> to vector<8xf32>
    %284 = vector.shape_cast %283 : vector<8xf32> to vector<8x1xf32>
    %285 = vector.broadcast %284 : vector<8x1xf32> to vector<8x8xf32>
    %286 = arith.subf %282, %285 : vector<8x8xf32>
    %287 = math.exp %286 : vector<8x8xf32>
    %cst_92 = arith.constant dense<0.000000e+00> : vector<8xf32>
    %288 = vector.multi_reduction <add>, %287, %cst_92 [1] : vector<8x8xf32> to vector<8xf32>
    %289 = vector.shape_cast %288 : vector<8xf32> to vector<8x1xf32>
    %290 = tpu.reciprocal %289 {approx = true} : vector<8x1xf32> -> vector<8x1xf32>
    %291 = vector.broadcast %290 : vector<8x1xf32> to vector<8x8xf32>
    %292 = arith.mulf %287, %291 : vector<8x8xf32>
    %293 = vector.extract_strided_slice %236 {offsets = [0, 16], sizes = [8, 8], strides = [1, 1]} : vector<8x32xf32> to vector<8x8xf32>
    %cst_93 = arith.constant dense<0.000000e+00> : vector<8x8xf32>
    %294 = tpu.matmul %292, %293, %cst_93 {dimension_numbers = #tpu.dot_dimension_numbers<[1], [0], [0], [1], [0, 0, 1, 1], [], []>} : vector<8x8xf32>, vector<8x8xf32>, vector<8x8xf32> -> vector<8x8xf32>
    %295 = vector.extract_strided_slice %221 {offsets = [16, 0], sizes = [8, 32], strides = [1, 1]} : vector<32x32xf32> to vector<8x32xf32>
    %cst_94 = arith.constant dense<0.000000e+00> : vector<8x32xf32>
    %296 = tpu.matmul %294, %295, %cst_94 {dimension_numbers = #tpu.dot_dimension_numbers<[1], [0], [0], [1], [0, 0, 1, 1], [], []>} : vector<8x8xf32>, vector<8x32xf32>, vector<8x32xf32> -> vector<8x32xf32>
    %297 = arith.addf %277, %296 : vector<8x32xf32>
    %298 = vector.extract_strided_slice %234 {offsets = [0, 24], sizes = [8, 8], strides = [1, 1]} : vector<8x32xf32> to vector<8x8xf32>
    %299 = vector.extract_strided_slice %235 {offsets = [0, 24], sizes = [8, 8], strides = [1, 1]} : vector<8x32xf32> to vector<8x8xf32>
    %cst_95 = arith.constant dense<0.000000e+00> : vector<8x8xf32>
    %300 = tpu.matmul %298, %299, %cst_95 {dimension_numbers = #tpu.dot_dimension_numbers<[1], [1], [0], [0], [0, 0, 1, 0], [], []>} : vector<8x8xf32>, vector<8x8xf32>, vector<8x8xf32> -> vector<8x8xf32>
    %301 = vector.broadcast %238 : vector<1x8xf32> to vector<8x8xf32>
    %302 = arith.addf %300, %301 : vector<8x8xf32>
    %cst_96 = arith.constant dense<0xFF800000> : vector<8xf32>
    %303 = vector.multi_reduction <maximumf>, %302, %cst_96 [1] : vector<8x8xf32> to vector<8xf32>
    %304 = vector.shape_cast %303 : vector<8xf32> to vector<8x1xf32>
    %305 = vector.broadcast %304 : vector<8x1xf32> to vector<8x8xf32>
    %306 = arith.subf %302, %305 : vector<8x8xf32>
    %307 = math.exp %306 : vector<8x8xf32>
    %cst_97 = arith.constant dense<0.000000e+00> : vector<8xf32>
    %308 = vector.multi_reduction <add>, %307, %cst_97 [1] : vector<8x8xf32> to vector<8xf32>
    %309 = vector.shape_cast %308 : vector<8xf32> to vector<8x1xf32>
    %310 = tpu.reciprocal %309 {approx = true} : vector<8x1xf32> -> vector<8x1xf32>
    %311 = vector.broadcast %310 : vector<8x1xf32> to vector<8x8xf32>
    %312 = arith.mulf %307, %311 : vector<8x8xf32>
    %313 = vector.extract_strided_slice %236 {offsets = [0, 24], sizes = [8, 8], strides = [1, 1]} : vector<8x32xf32> to vector<8x8xf32>
    %cst_98 = arith.constant dense<0.000000e+00> : vector<8x8xf32>
    %314 = tpu.matmul %312, %313, %cst_98 {dimension_numbers = #tpu.dot_dimension_numbers<[1], [0], [0], [1], [0, 0, 1, 1], [], []>} : vector<8x8xf32>, vector<8x8xf32>, vector<8x8xf32> -> vector<8x8xf32>
    %315 = vector.extract_strided_slice %221 {offsets = [24, 0], sizes = [8, 32], strides = [1, 1]} : vector<32x32xf32> to vector<8x32xf32>
    %cst_99 = arith.constant dense<0.000000e+00> : vector<8x32xf32>
    %316 = tpu.matmul %314, %315, %cst_99 {dimension_numbers = #tpu.dot_dimension_numbers<[1], [0], [0], [1], [0, 0, 1, 1], [], []>} : vector<8x8xf32>, vector<8x32xf32>, vector<8x32xf32> -> vector<8x32xf32>
    %317 = arith.addf %297, %316 : vector<8x32xf32>
    %318 = vector.extract_strided_slice %225 {offsets = [8, 0], sizes = [8, 32], strides = [1, 1]} : vector<16x32xf32> to vector<8x32xf32>
    %319 = vector.extract_strided_slice %229 {offsets = [8, 0], sizes = [8, 32], strides = [1, 1]} : vector<16x32xf32> to vector<8x32xf32>
    %320 = vector.extract_strided_slice %233 {offsets = [8, 0], sizes = [8, 32], strides = [1, 1]} : vector<16x32xf32> to vector<8x32xf32>
    %321 = vector.extract_strided_slice %6 {offsets = [1, 0, 0], sizes = [1, 1, 8], strides = [1, 1, 1]} : vector<2x1x8xf32> to vector<1x1x8xf32>
    %322 = vector.shape_cast %321 : vector<1x1x8xf32> to vector<1x8xf32>
    %323 = vector.extract_strided_slice %318 {offsets = [0, 0], sizes = [8, 8], strides = [1, 1]} : vector<8x32xf32> to vector<8x8xf32>
    %324 = vector.extract_strided_slice %319 {offsets = [0, 0], sizes = [8, 8], strides = [1, 1]} : vector<8x32xf32> to vector<8x8xf32>
    %cst_100 = arith.constant dense<0.000000e+00> : vector<8x8xf32>
    %325 = tpu.matmul %323, %324, %cst_100 {dimension_numbers = #tpu.dot_dimension_numbers<[1], [1], [0], [0], [0, 0, 1, 0], [], []>} : vector<8x8xf32>, vector<8x8xf32>, vector<8x8xf32> -> vector<8x8xf32>
    %326 = vector.broadcast %322 : vector<1x8xf32> to vector<8x8xf32>
    %327 = arith.addf %325, %326 : vector<8x8xf32>
    %cst_101 = arith.constant dense<0xFF800000> : vector<8xf32>
    %328 = vector.multi_reduction <maximumf>, %327, %cst_101 [1] : vector<8x8xf32> to vector<8xf32>
    %329 = vector.shape_cast %328 : vector<8xf32> to vector<8x1xf32>
    %330 = vector.broadcast %329 : vector<8x1xf32> to vector<8x8xf32>
    %331 = arith.subf %327, %330 : vector<8x8xf32>
    %332 = math.exp %331 : vector<8x8xf32>
    %cst_102 = arith.constant dense<0.000000e+00> : vector<8xf32>
    %333 = vector.multi_reduction <add>, %332, %cst_102 [1] : vector<8x8xf32> to vector<8xf32>
    %334 = vector.shape_cast %333 : vector<8xf32> to vector<8x1xf32>
    %335 = tpu.reciprocal %334 {approx = true} : vector<8x1xf32> -> vector<8x1xf32>
    %336 = vector.broadcast %335 : vector<8x1xf32> to vector<8x8xf32>
    %337 = arith.mulf %332, %336 : vector<8x8xf32>
    %338 = vector.extract_strided_slice %320 {offsets = [0, 0], sizes = [8, 8], strides = [1, 1]} : vector<8x32xf32> to vector<8x8xf32>
    %cst_103 = arith.constant dense<0.000000e+00> : vector<8x8xf32>
    %339 = tpu.matmul %337, %338, %cst_103 {dimension_numbers = #tpu.dot_dimension_numbers<[1], [0], [0], [1], [0, 0, 1, 1], [], []>} : vector<8x8xf32>, vector<8x8xf32>, vector<8x8xf32> -> vector<8x8xf32>
    %340 = vector.extract_strided_slice %221 {offsets = [0, 0], sizes = [8, 32], strides = [1, 1]} : vector<32x32xf32> to vector<8x32xf32>
    %cst_104 = arith.constant dense<0.000000e+00> : vector<8x32xf32>
    %341 = tpu.matmul %339, %340, %cst_104 {dimension_numbers = #tpu.dot_dimension_numbers<[1], [0], [0], [1], [0, 0, 1, 1], [], []>} : vector<8x8xf32>, vector<8x32xf32>, vector<8x32xf32> -> vector<8x32xf32>
    %342 = vector.extract_strided_slice %318 {offsets = [0, 8], sizes = [8, 8], strides = [1, 1]} : vector<8x32xf32> to vector<8x8xf32>
    %343 = vector.extract_strided_slice %319 {offsets = [0, 8], sizes = [8, 8], strides = [1, 1]} : vector<8x32xf32> to vector<8x8xf32>
    %cst_105 = arith.constant dense<0.000000e+00> : vector<8x8xf32>
    %344 = tpu.matmul %342, %343, %cst_105 {dimension_numbers = #tpu.dot_dimension_numbers<[1], [1], [0], [0], [0, 0, 1, 0], [], []>} : vector<8x8xf32>, vector<8x8xf32>, vector<8x8xf32> -> vector<8x8xf32>
    %345 = vector.broadcast %322 : vector<1x8xf32> to vector<8x8xf32>
    %346 = arith.addf %344, %345 : vector<8x8xf32>
    %cst_106 = arith.constant dense<0xFF800000> : vector<8xf32>
    %347 = vector.multi_reduction <maximumf>, %346, %cst_106 [1] : vector<8x8xf32> to vector<8xf32>
    %348 = vector.shape_cast %347 : vector<8xf32> to vector<8x1xf32>
    %349 = vector.broadcast %348 : vector<8x1xf32> to vector<8x8xf32>
    %350 = arith.subf %346, %349 : vector<8x8xf32>
    %351 = math.exp %350 : vector<8x8xf32>
    %cst_107 = arith.constant dense<0.000000e+00> : vector<8xf32>
    %352 = vector.multi_reduction <add>, %351, %cst_107 [1] : vector<8x8xf32> to vector<8xf32>
    %353 = vector.shape_cast %352 : vector<8xf32> to vector<8x1xf32>
    %354 = tpu.reciprocal %353 {approx = true} : vector<8x1xf32> -> vector<8x1xf32>
    %355 = vector.broadcast %354 : vector<8x1xf32> to vector<8x8xf32>
    %356 = arith.mulf %351, %355 : vector<8x8xf32>
    %357 = vector.extract_strided_slice %320 {offsets = [0, 8], sizes = [8, 8], strides = [1, 1]} : vector<8x32xf32> to vector<8x8xf32>
    %cst_108 = arith.constant dense<0.000000e+00> : vector<8x8xf32>
    %358 = tpu.matmul %356, %357, %cst_108 {dimension_numbers = #tpu.dot_dimension_numbers<[1], [0], [0], [1], [0, 0, 1, 1], [], []>} : vector<8x8xf32>, vector<8x8xf32>, vector<8x8xf32> -> vector<8x8xf32>
    %359 = vector.extract_strided_slice %221 {offsets = [8, 0], sizes = [8, 32], strides = [1, 1]} : vector<32x32xf32> to vector<8x32xf32>
    %cst_109 = arith.constant dense<0.000000e+00> : vector<8x32xf32>
    %360 = tpu.matmul %358, %359, %cst_109 {dimension_numbers = #tpu.dot_dimension_numbers<[1], [0], [0], [1], [0, 0, 1, 1], [], []>} : vector<8x8xf32>, vector<8x32xf32>, vector<8x32xf32> -> vector<8x32xf32>
    %361 = arith.addf %341, %360 : vector<8x32xf32>
    %362 = vector.extract_strided_slice %318 {offsets = [0, 16], sizes = [8, 8], strides = [1, 1]} : vector<8x32xf32> to vector<8x8xf32>
    %363 = vector.extract_strided_slice %319 {offsets = [0, 16], sizes = [8, 8], strides = [1, 1]} : vector<8x32xf32> to vector<8x8xf32>
    %cst_110 = arith.constant dense<0.000000e+00> : vector<8x8xf32>
    %364 = tpu.matmul %362, %363, %cst_110 {dimension_numbers = #tpu.dot_dimension_numbers<[1], [1], [0], [0], [0, 0, 1, 0], [], []>} : vector<8x8xf32>, vector<8x8xf32>, vector<8x8xf32> -> vector<8x8xf32>
    %365 = vector.broadcast %322 : vector<1x8xf32> to vector<8x8xf32>
    %366 = arith.addf %364, %365 : vector<8x8xf32>
    %cst_111 = arith.constant dense<0xFF800000> : vector<8xf32>
    %367 = vector.multi_reduction <maximumf>, %366, %cst_111 [1] : vector<8x8xf32> to vector<8xf32>
    %368 = vector.shape_cast %367 : vector<8xf32> to vector<8x1xf32>
    %369 = vector.broadcast %368 : vector<8x1xf32> to vector<8x8xf32>
    %370 = arith.subf %366, %369 : vector<8x8xf32>
    %371 = math.exp %370 : vector<8x8xf32>
    %cst_112 = arith.constant dense<0.000000e+00> : vector<8xf32>
    %372 = vector.multi_reduction <add>, %371, %cst_112 [1] : vector<8x8xf32> to vector<8xf32>
    %373 = vector.shape_cast %372 : vector<8xf32> to vector<8x1xf32>
    %374 = tpu.reciprocal %373 {approx = true} : vector<8x1xf32> -> vector<8x1xf32>
    %375 = vector.broadcast %374 : vector<8x1xf32> to vector<8x8xf32>
    %376 = arith.mulf %371, %375 : vector<8x8xf32>
    %377 = vector.extract_strided_slice %320 {offsets = [0, 16], sizes = [8, 8], strides = [1, 1]} : vector<8x32xf32> to vector<8x8xf32>
    %cst_113 = arith.constant dense<0.000000e+00> : vector<8x8xf32>
    %378 = tpu.matmul %376, %377, %cst_113 {dimension_numbers = #tpu.dot_dimension_numbers<[1], [0], [0], [1], [0, 0, 1, 1], [], []>} : vector<8x8xf32>, vector<8x8xf32>, vector<8x8xf32> -> vector<8x8xf32>
    %379 = vector.extract_strided_slice %221 {offsets = [16, 0], sizes = [8, 32], strides = [1, 1]} : vector<32x32xf32> to vector<8x32xf32>
    %cst_114 = arith.constant dense<0.000000e+00> : vector<8x32xf32>
    %380 = tpu.matmul %378, %379, %cst_114 {dimension_numbers = #tpu.dot_dimension_numbers<[1], [0], [0], [1], [0, 0, 1, 1], [], []>} : vector<8x8xf32>, vector<8x32xf32>, vector<8x32xf32> -> vector<8x32xf32>
    %381 = arith.addf %361, %380 : vector<8x32xf32>
    %382 = vector.extract_strided_slice %318 {offsets = [0, 24], sizes = [8, 8], strides = [1, 1]} : vector<8x32xf32> to vector<8x8xf32>
    %383 = vector.extract_strided_slice %319 {offsets = [0, 24], sizes = [8, 8], strides = [1, 1]} : vector<8x32xf32> to vector<8x8xf32>
    %cst_115 = arith.constant dense<0.000000e+00> : vector<8x8xf32>
    %384 = tpu.matmul %382, %383, %cst_115 {dimension_numbers = #tpu.dot_dimension_numbers<[1], [1], [0], [0], [0, 0, 1, 0], [], []>} : vector<8x8xf32>, vector<8x8xf32>, vector<8x8xf32> -> vector<8x8xf32>
    %385 = vector.broadcast %322 : vector<1x8xf32> to vector<8x8xf32>
    %386 = arith.addf %384, %385 : vector<8x8xf32>
    %cst_116 = arith.constant dense<0xFF800000> : vector<8xf32>
    %387 = vector.multi_reduction <maximumf>, %386, %cst_116 [1] : vector<8x8xf32> to vector<8xf32>
    %388 = vector.shape_cast %387 : vector<8xf32> to vector<8x1xf32>
    %389 = vector.broadcast %388 : vector<8x1xf32> to vector<8x8xf32>
    %390 = arith.subf %386, %389 : vector<8x8xf32>
    %391 = math.exp %390 : vector<8x8xf32>
    %cst_117 = arith.constant dense<0.000000e+00> : vector<8xf32>
    %392 = vector.multi_reduction <add>, %391, %cst_117 [1] : vector<8x8xf32> to vector<8xf32>
    %393 = vector.shape_cast %392 : vector<8xf32> to vector<8x1xf32>
    %394 = tpu.reciprocal %393 {approx = true} : vector<8x1xf32> -> vector<8x1xf32>
    %395 = vector.broadcast %394 : vector<8x1xf32> to vector<8x8xf32>
    %396 = arith.mulf %391, %395 : vector<8x8xf32>
    %397 = vector.extract_strided_slice %320 {offsets = [0, 24], sizes = [8, 8], strides = [1, 1]} : vector<8x32xf32> to vector<8x8xf32>
    %cst_118 = arith.constant dense<0.000000e+00> : vector<8x8xf32>
    %398 = tpu.matmul %396, %397, %cst_118 {dimension_numbers = #tpu.dot_dimension_numbers<[1], [0], [0], [1], [0, 0, 1, 1], [], []>} : vector<8x8xf32>, vector<8x8xf32>, vector<8x8xf32> -> vector<8x8xf32>
    %399 = vector.extract_strided_slice %221 {offsets = [24, 0], sizes = [8, 32], strides = [1, 1]} : vector<32x32xf32> to vector<8x32xf32>
    %cst_119 = arith.constant dense<0.000000e+00> : vector<8x32xf32>
    %400 = tpu.matmul %398, %399, %cst_119 {dimension_numbers = #tpu.dot_dimension_numbers<[1], [0], [0], [1], [0, 0, 1, 1], [], []>} : vector<8x8xf32>, vector<8x32xf32>, vector<8x32xf32> -> vector<8x32xf32>
    %401 = arith.addf %381, %400 : vector<8x32xf32>
    %402 = tpu.concatenate %317, %401 in 0 : vector<8x32xf32>, vector<8x32xf32> -> vector<16x32xf32>
    %403 = vector.extract_strided_slice %4 {offsets = [7, 0], sizes = [1, 32], strides = [1, 1]} : vector<16x64xf32> to vector<1x32xf32>
    %404 = vector.broadcast %403 : vector<1x32xf32> to vector<16x32xf32>
    %405 = arith.addf %402, %404 : vector<16x32xf32>
    %406 = arith.addf %405, %213 : vector<16x32xf32>
    %cst_120 = arith.constant dense<0.000000e+00> : vector<16xf32>
    %407 = vector.multi_reduction <add>, %406, %cst_120 [1] : vector<16x32xf32> to vector<16xf32>
    %408 = vector.shape_cast %407 : vector<16xf32> to vector<16x1xf32>
    %cst_121 = arith.constant 3.200000e+01 : f32
    %409 = vector.broadcast %cst_121 : f32 to vector<16x1xf32>
    %410 = arith.divf %408, %409 : vector<16x1xf32>
    %411 = vector.broadcast %410 : vector<16x1xf32> to vector<16x32xf32>
    %412 = arith.subf %406, %411 : vector<16x32xf32>
    %413 = arith.mulf %412, %412 : vector<16x32xf32>
    %cst_122 = arith.constant dense<0.000000e+00> : vector<16xf32>
    %414 = vector.multi_reduction <add>, %413, %cst_122 [1] : vector<16x32xf32> to vector<16xf32>
    %415 = vector.shape_cast %414 : vector<16xf32> to vector<16x1xf32>
    %cst_123 = arith.constant 3.200000e+01 : f32
    %416 = vector.broadcast %cst_123 : f32 to vector<16x1xf32>
    %417 = arith.divf %415, %416 : vector<16x1xf32>
    %cst_124 = arith.constant 9.99999974E-6 : f32
    %418 = vector.broadcast %cst_124 : f32 to vector<16x1xf32>
    %419 = arith.addf %417, %418 : vector<16x1xf32>
    %420 = math.rsqrt %419 : vector<16x1xf32>
    %421 = vector.broadcast %420 : vector<16x1xf32> to vector<16x32xf32>
    %422 = arith.mulf %412, %421 : vector<16x32xf32>
    %423 = vector.extract_strided_slice %4 {offsets = [12, 0], sizes = [1, 32], strides = [1, 1]} : vector<16x64xf32> to vector<1x32xf32>
    %424 = vector.broadcast %423 : vector<1x32xf32> to vector<16x32xf32>
    %425 = arith.mulf %422, %424 : vector<16x32xf32>
    %426 = vector.extract_strided_slice %4 {offsets = [13, 0], sizes = [1, 32], strides = [1, 1]} : vector<16x64xf32> to vector<1x32xf32>
    %427 = vector.broadcast %426 : vector<1x32xf32> to vector<16x32xf32>
    %428 = arith.addf %425, %427 : vector<16x32xf32>
    %c0_125 = arith.constant 0 : index
    %c0_126 = arith.constant 0 : index
    %c0_127 = arith.constant 0 : index
    %429 = vector.load %arg6[%c0_125, %c0_126, %c0_127] : memref<2x64x64xf32, #tpu.memory_space<vmem>>, vector<1x64x64xf32>
    %430 = vector.shape_cast %429 : vector<1x64x64xf32> to vector<64x64xf32>
    %431 = vector.extract_strided_slice %430 {offsets = [0, 0], sizes = [32, 64], strides = [1, 1]} : vector<64x64xf32> to vector<32x64xf32>
    %c1_128 = arith.constant 1 : index
    %c0_129 = arith.constant 0 : index
    %c0_130 = arith.constant 0 : index
    %432 = vector.load %arg6[%c1_128, %c0_129, %c0_130] : memref<2x64x64xf32, #tpu.memory_space<vmem>>, vector<1x64x64xf32>
    %433 = vector.shape_cast %432 : vector<1x64x64xf32> to vector<64x64xf32>
    %434 = vector.extract_strided_slice %433 {offsets = [0, 0], sizes = [64, 32], strides = [1, 1]} : vector<64x64xf32> to vector<64x32xf32>
    %cst_131 = arith.constant dense<0.000000e+00> : vector<16x64xf32>
    %435 = tpu.matmul %428, %431, %cst_131 {dimension_numbers = #tpu.dot_dimension_numbers<[1], [0], [0], [1], [0, 0, 1, 1], [], []>} : vector<16x32xf32>, vector<32x64xf32>, vector<16x64xf32> -> vector<16x64xf32>
    %436 = vector.extract_strided_slice %4 {offsets = [8, 0], sizes = [1, 64], strides = [1, 1]} : vector<16x64xf32> to vector<1x64xf32>
    %437 = vector.broadcast %436 : vector<1x64xf32> to vector<16x64xf32>
    %438 = arith.addf %435, %437 : vector<16x64xf32>
    %cst_132 = arith.constant 0.000000e+00 : f32
    %439 = vector.broadcast %cst_132 : f32 to vector<16x64xf32>
    %440 = arith.maximumf %438, %439 : vector<16x64xf32>
    %cst_133 = arith.constant dense<0.000000e+00> : vector<16x32xf32>
    %441 = tpu.matmul %440, %434, %cst_133 {dimension_numbers = #tpu.dot_dimension_numbers<[1], [0], [0], [1], [0, 0, 1, 1], [], []>} : vector<16x64xf32>, vector<64x32xf32>, vector<16x32xf32> -> vector<16x32xf32>
    %442 = vector.extract_strided_slice %4 {offsets = [9, 0], sizes = [1, 32], strides = [1, 1]} : vector<16x64xf32> to vector<1x32xf32>
    %443 = vector.broadcast %442 : vector<1x32xf32> to vector<16x32xf32>
    %444 = arith.addf %441, %443 : vector<16x32xf32>
    %445 = arith.addf %444, %428 : vector<16x32xf32>
    %cst_134 = arith.constant dense<0.000000e+00> : vector<16xf32>
    %446 = vector.multi_reduction <add>, %445, %cst_134 [1] : vector<16x32xf32> to vector<16xf32>
    %447 = vector.shape_cast %446 : vector<16xf32> to vector<16x1xf32>
    %cst_135 = arith.constant 3.200000e+01 : f32
    %448 = vector.broadcast %cst_135 : f32 to vector<16x1xf32>
    %449 = arith.divf %447, %448 : vector<16x1xf32>
    %450 = vector.broadcast %449 : vector<16x1xf32> to vector<16x32xf32>
    %451 = arith.subf %445, %450 : vector<16x32xf32>
    %452 = arith.mulf %451, %451 : vector<16x32xf32>
    %cst_136 = arith.constant dense<0.000000e+00> : vector<16xf32>
    %453 = vector.multi_reduction <add>, %452, %cst_136 [1] : vector<16x32xf32> to vector<16xf32>
    %454 = vector.shape_cast %453 : vector<16xf32> to vector<16x1xf32>
    %cst_137 = arith.constant 3.200000e+01 : f32
    %455 = vector.broadcast %cst_137 : f32 to vector<16x1xf32>
    %456 = arith.divf %454, %455 : vector<16x1xf32>
    %cst_138 = arith.constant 9.99999974E-6 : f32
    %457 = vector.broadcast %cst_138 : f32 to vector<16x1xf32>
    %458 = arith.addf %456, %457 : vector<16x1xf32>
    %459 = math.rsqrt %458 : vector<16x1xf32>
    %460 = vector.broadcast %459 : vector<16x1xf32> to vector<16x32xf32>
    %461 = arith.mulf %451, %460 : vector<16x32xf32>
    %462 = vector.extract_strided_slice %4 {offsets = [14, 0], sizes = [1, 32], strides = [1, 1]} : vector<16x64xf32> to vector<1x32xf32>
    %463 = vector.broadcast %462 : vector<1x32xf32> to vector<16x32xf32>
    %464 = arith.mulf %461, %463 : vector<16x32xf32>
    %465 = vector.extract_strided_slice %4 {offsets = [15, 0], sizes = [1, 32], strides = [1, 1]} : vector<16x64xf32> to vector<1x32xf32>
    %466 = vector.broadcast %465 : vector<1x32xf32> to vector<16x32xf32>
    %467 = arith.addf %464, %466 : vector<16x32xf32>
    %468 = vector.shape_cast %467 : vector<16x32xf32> to vector<2x8x32xf32>
    %c0_139 = arith.constant 0 : index
    %c0_140 = arith.constant 0 : index
    %c0_141 = arith.constant 0 : index
    %469 = vector.load %arg8[%c0_139, %c0_140, %c0_141] : memref<2x8x32xf32, #tpu.memory_space<vmem>>, vector<2x8x32xf32>
    tpu.vector_store %arg8[%c0_139, %c0_140, %c0_141], %468 {strides = array<i32>} : memref<2x8x32xf32, #tpu.memory_space<vmem>>, vector<2x8x32xf32>,
    return
  }
  func.func @transform_0(%arg0: i32) -> (i32, i32, i32) {
    %c0_i32 = arith.constant 0 : i32
    %c0_i32_0 = arith.constant 0 : i32
    %c0_i32_1 = arith.constant 0 : i32
    return %arg0, %c0_i32, %c0_i32_0 : i32, i32, i32
  }
  func.func @transform_1(%arg0: i32) -> (i32, i32, i32) {
    %c0_i32 = arith.constant 0 : i32
    %c0_i32_0 = arith.constant 0 : i32
    %c0_i32_1 = arith.constant 0 : i32
    return %arg0, %c0_i32, %c0_i32_0 : i32, i32, i32
  }
  func.func @transform_2(%arg0: i32) -> (i32, i32, i32) {
    %c0_i32 = arith.constant 0 : i32
    %c0_i32_0 = arith.constant 0 : i32
    %c0_i32_1 = arith.constant 0 : i32
    return %arg0, %c0_i32, %c0_i32_0 : i32, i32, i32
  }
  func.func @transform_3(%arg0: i32) -> (i32, i32, i32) {
    %c0_i32 = arith.constant 0 : i32
    %c0_i32_0 = arith.constant 0 : i32
    %c0_i32_1 = arith.constant 0 : i32
    return %arg0, %c0_i32, %c0_i32_0 : i32, i32, i32
  }
  func.func @transform_4(%arg0: i32) -> (i32, i32, i32) {
    %c0_i32 = arith.constant 0 : i32
    %c0_i32_0 = arith.constant 0 : i32
    %c0_i32_1 = arith.constant 0 : i32
    %c0_i32_2 = arith.constant 0 : i32
    return %c0_i32, %c0_i32_0, %c0_i32_1 : i32, i32, i32
  }
  func.func @transform_5(%arg0: i32) -> (i32, i32, i32) {
    %c0_i32 = arith.constant 0 : i32
    %c0_i32_0 = arith.constant 0 : i32
    %c0_i32_1 = arith.constant 0 : i32
    %c0_i32_2 = arith.constant 0 : i32
    return %c0_i32, %c0_i32_0, %c0_i32_1 : i32, i32, i32
  }
  func.func @transform_6(%arg0: i32) -> (i32, i32) {
    %c0_i32 = arith.constant 0 : i32
    %c0_i32_0 = arith.constant 0 : i32
    %c0_i32_1 = arith.constant 0 : i32
    return %c0_i32, %c0_i32_0 : i32, i32
  }
  func.func @transform_7(%arg0: i32) -> (i32, i32, i32) {
    %c0_i32 = arith.constant 0 : i32
    %c0_i32_0 = arith.constant 0 : i32
    %c0_i32_1 = arith.constant 0 : i32
    return %arg0, %c0_i32, %c0_i32_0 : i32, i32, i32
  }
}

</mosaic_0001>

<llo_original>
// kernel: tpu_custom_call.1
$region0: #{tpu_custom_call.1}
  #allocation0 [shape = 'u32[]', space=smem, size = 0x4, offset = 0x4, fixed_abs, tag = 'smem constant byte address 0x4 - core index']
  #allocation1 [shape = 'u32[144,128]{1,0:T(1,128)}', space=vmem, size = 0x12000, scoped, tag = 'internal scratch']
  %s0 = inlined_call_operand.hbm [shape: f32[2,8,32], index: 0, kind: input, shape index: {}]
  %s1 = inlined_call_operand.hbm [shape: f32[2,8,32], index: 1, kind: input, shape index: {}]
  %s2 = inlined_call_operand.hbm [shape: f32[2,8,8], index: 2, kind: input, shape index: {}]
  %s3 = inlined_call_operand.vmem [shape: f32[2,1,8], index: 3, kind: input, shape index: {}]
  %s4 = inlined_call_operand.hbm [shape: f32[8,32,32], index: 4, kind: input, shape index: {}]
  %s5 = inlined_call_operand.hbm [shape: f32[2,64,64], index: 5, kind: input, shape index: {}]
  %s6 = inlined_call_operand.vmem [shape: f32[16,64], index: 6, kind: input, shape index: {}]
  %s7 = inlined_call_operand.hbm [shape: f32[2,8,32], index: 7, kind: output, shape index: {}]
  %s8 = sld [smem:[#allocation0]]
  $region58: #{tpu_custom_call.1} parent=0
    _
  %s10 = ssub.s32 1, %s8
  %s11 = scalar_select 0, %s10, %s8
  $region1: #{tpu_custom_call.1} parent=0
    #allocation2 [shape = 'u8[8192]{0}', space=vmem, size = 0x2000, scoped, tag = 'input window, operand 0, single buffered']
    #allocation3 [shape = 's32[1]{0}', space=sflag, size = 0x4, scoped, tag = 'scoped memory for tpu_custom_call.1']
    #allocation4 [shape = 's32[1]{0}', space=sflag, size = 0x4, scoped, tag = 'scoped memory for tpu_custom_call.1']
    #allocation5 [shape = 'u8[8192]{0}', space=vmem, size = 0x2000, scoped, tag = 'input window, operand 1, single buffered']
    #allocation6 [shape = 's32[1]{0}', space=sflag, size = 0x4, scoped, tag = 'scoped memory for tpu_custom_call.1']
    #allocation7 [shape = 'u8[8192]{0}', space=vmem, size = 0x2000, scoped, tag = 'input window, operand 2, single buffered']
    #allocation8 [shape = 'u8[131072]{0}', space=vmem, size = 0x20000, scoped, tag = 'input window, operand 4, single buffered']
    #allocation9 [shape = 's32[1]{0}', space=sflag, size = 0x4, scoped, tag = 'scoped memory for tpu_custom_call.1']
    #allocation10 [shape = 'u8[65536]{0}', space=vmem, size = 0x10000, scoped, tag = 'input window, operand 5, single buffered']
    #allocation11 [shape = 'u8[8192]{0}', space=vmem, size = 0x2000, scoped, tag = 'output window, operand 0, single buffered']
    %12 = vsyncpa [#allocation3], 0
    %13 = vsyncpa [#allocation6], 0
    %14 = vsyncpa [#allocation9], 0
    %15 = vsyncpa [#allocation4], 0
    // Predicated region
    $region2: #{tpu_custom_call.1} parent=1 // pred_check
      _
    $region3: #{tpu_custom_call.1} parent=1 // pred_check_branch
      %17 = sbr.rel (0) target = $region5
    $region4: #{tpu_custom_call.1} parent=1 // pred_region
      %s19 = ssub.s32 256, 256
      %20 = vsyncadd [#allocation3], %s19
      %s21 = sshll.u32 [#allocation2], 4
      %s22 = int_to_ptr.vmem [resolvable:$true] %s21
      %27 = dma.hbm_to_vmem [thread:$0]  %s0, 256, %s22, [#allocation3], 128, 128, 8
    $region5: #{tpu_custom_call.1} parent=1 // pred_fallthru
      _
    // Predicated region
    $region6: #{tpu_custom_call.1} parent=1 // pred_check
      _
    $region7: #{tpu_custom_call.1} parent=1 // pred_check_branch
      %29 = sbr.rel (0) target = $region9
    $region8: #{tpu_custom_call.1} parent=1 // pred_region
      %s31 = ssub.s32 256, 256
      %32 = vsyncadd [#allocation6], %s31
      %s33 = sshll.u32 [#allocation5], 4
      %s34 = int_to_ptr.vmem [resolvable:$true] %s33
      %39 = dma.hbm_to_vmem [thread:$0]  %s1, 256, %s34, [#allocation6], 128, 128, 8
    $region9: #{tpu_custom_call.1} parent=1 // pred_fallthru
      _
    // Predicated region
    $region10: #{tpu_custom_call.1} parent=1 // pred_check
      _
    $region11: #{tpu_custom_call.1} parent=1 // pred_check_branch
      %41 = sbr.rel (0) target = $region13
    $region12: #{tpu_custom_call.1} parent=1 // pred_region
      %s43 = ssub.s32 256, 256
      %44 = vsyncadd [#allocation6], %s43
      %s45 = sshll.u32 [#allocation7], 4
      %s46 = int_to_ptr.vmem [resolvable:$true] %s45
      %51 = dma.hbm_to_vmem [thread:$0]  %s2, 256, %s46, [#allocation6], 128, 128, 8
    $region13: #{tpu_custom_call.1} parent=1 // pred_fallthru
      _
    // Predicated region
    $region14: #{tpu_custom_call.1} parent=1 // pred_check
      _
    $region15: #{tpu_custom_call.1} parent=1 // pred_check_branch
      %53 = sbr.rel (0) target = $region17
    $region16: #{tpu_custom_call.1} parent=1 // pred_region
      _
    $region17: #{tpu_custom_call.1} parent=1 // pred_fallthru
      _
    // Predicated region
    $region18: #{tpu_custom_call.1} parent=1 // pred_check
      _
    $region19: #{tpu_custom_call.1} parent=1 // pred_check_branch
      %55 = sbr.rel (0) target = $region21
    $region20: #{tpu_custom_call.1} parent=1 // pred_region
      %s57 = ssub.s32 4096, 4096
      %58 = vsyncadd [#allocation9], %s57
      %s59 = sshll.u32 [#allocation8], 4
      %s60 = int_to_ptr.vmem [resolvable:$true] %s59
      %65 = dma.hbm_to_vmem [thread:$0]  %s4, 4096, %s60, [#allocation9], 128, 128, 8
    $region21: #{tpu_custom_call.1} parent=1 // pred_fallthru
      _
    // Predicated region
    $region22: #{tpu_custom_call.1} parent=1 // pred_check
      _
    $region23: #{tpu_custom_call.1} parent=1 // pred_check_branch
      %67 = sbr.rel (0) target = $region25
    $region24: #{tpu_custom_call.1} parent=1 // pred_region
      %s69 = ssub.s32 2048, 2048
      %70 = vsyncadd [#allocation9], %s69
      %s71 = sshll.u32 [#allocation10], 4
      %s72 = int_to_ptr.vmem [resolvable:$true] %s71
      %77 = dma.hbm_to_vmem [thread:$0]  %s5, 2048, %s72, [#allocation9], 128, 128, 8
    $region25: #{tpu_custom_call.1} parent=1 // pred_fallthru
      _
    // Predicated region
    $region26: #{tpu_custom_call.1} parent=1 // pred_check
      _
    $region27: #{tpu_custom_call.1} parent=1 // pred_check_branch
      %79 = sbr.rel (0) target = $region29
    $region28: #{tpu_custom_call.1} parent=1 // pred_region
      _
    $region29: #{tpu_custom_call.1} parent=1 // pred_fallthru
      _
    // Predicated region
    $region30: #{tpu_custom_call.1} parent=1 // pred_check
      _
    $region31: #{tpu_custom_call.1} parent=1 // pred_check_branch
      %81 = sbr.rel (0) target = $region33
    $region32: #{tpu_custom_call.1} parent=1 // pred_region
      %82 = dma.done [#allocation3], 256
    $region33: #{tpu_custom_call.1} parent=1 // pred_fallthru
      _
    // Predicated region
    $region34: #{tpu_custom_call.1} parent=1 // pred_check
      _
    $region35: #{tpu_custom_call.1} parent=1 // pred_check_branch
      %84 = sbr.rel (0) target = $region37
    $region36: #{tpu_custom_call.1} parent=1 // pred_region
      %85 = dma.done [#allocation6], 256
    $region37: #{tpu_custom_call.1} parent=1 // pred_fallthru
      _
    // Predicated region
    $region38: #{tpu_custom_call.1} parent=1 // pred_check
      _
    $region39: #{tpu_custom_call.1} parent=1 // pred_check_branch
      %87 = sbr.rel (0) target = $region41
    $region40: #{tpu_custom_call.1} parent=1 // pred_region
      %88 = dma.done [#allocation6], 256
    $region41: #{tpu_custom_call.1} parent=1 // pred_fallthru
      _
    // Predicated region
    $region42: #{tpu_custom_call.1} parent=1 // pred_check
      _
    $region43: #{tpu_custom_call.1} parent=1 // pred_check_branch
      %90 = sbr.rel (0) target = $region45
    $region44: #{tpu_custom_call.1} parent=1 // pred_region
      %91 = dma.done [#allocation9], 4096
    $region45: #{tpu_custom_call.1} parent=1 // pred_fallthru
      _
    // Predicated region
    $region46: #{tpu_custom_call.1} parent=1 // pred_check
      _
    $region47: #{tpu_custom_call.1} parent=1 // pred_check_branch
      %93 = sbr.rel (0) target = $region49
    $region48: #{tpu_custom_call.1} parent=1 // pred_region
      %94 = dma.done [#allocation9], 2048
    $region49: #{tpu_custom_call.1} parent=1 // pred_fallthru
      _
    %v95 = vld [vmem:[#allocation2] sm:$0xff]
    %v96 = vld [vmem:[#allocation2 + $0x8] sm:$0xff]
    %v97 = vld [vmem:[#allocation5] sm:$0xff]
    %v98 = vld [vmem:[#allocation5 + $0x8] sm:$0xff]
    %v99 = vld [vmem:[%s6] sm:$0xff]
    %v100 = vld [vmem:[%s6 + $0x8] sm:$0xff]
    %v101 = vld [vmem:[#allocation7] sm:$0xff]
    %v102 = vld [vmem:[#allocation7 + $0x8] sm:$0xff]
    %v103 = vld [vmem:[%s3] sm:$0x1]
    %v104 = vld [vmem:[%s3 + $0x1] sm:$0x1]
    %v105 = vld [vmem:[#allocation8] sm:$0xff]
    %v106 = vld [vmem:[#allocation8 + $0x8] sm:$0xff]
    %v107 = vld [vmem:[#allocation8 + $0x10] sm:$0xff]
    %v108 = vld [vmem:[#allocation8 + $0x18] sm:$0xff]
    %s109 = scalar_lea.vmem [#allocation8], 32
    %v110 = vld [vmem:[%s109] sm:$0xff]
    %v111 = vld [vmem:[%s109 + $0x8] sm:$0xff]
    %v112 = vld [vmem:[%s109 + $0x10] sm:$0xff]
    %v113 = vld [vmem:[%s109 + $0x18] sm:$0xff]
    %s114 = scalar_lea.vmem [#allocation8], 64
    %v115 = vld [vmem:[%s114] sm:$0xff]
    %v116 = vld [vmem:[%s114 + $0x8] sm:$0xff]
    %v117 = vld [vmem:[%s114 + $0x10] sm:$0xff]
    %v118 = vld [vmem:[%s114 + $0x18] sm:$0xff]
    %s119 = scalar_lea.vmem [#allocation8], 96
    %v120 = vld [vmem:[%s119] sm:$0xff]
    %v121 = vld [vmem:[%s119 + $0x8] sm:$0xff]
    %v122 = vld [vmem:[%s119 + $0x10] sm:$0xff]
    %v123 = vld [vmem:[%s119 + $0x18] sm:$0xff]
    %v124 = vlaneseq
    %v125 = vshrl.u32 %v124, 7
    %v126 = vsub.s32 0, %v125
    %v127 = vrot.slane %v99, %v126
    %vm128 = vcmask 261120
    %v130 = vsel %vm128, %v95, 0
    %v133 = vsel %vm128, %v96, 0
    %135 = vmatprep.subr.mxu0 0.0
    %136 = vmatpush1.msra.mxu0 %v105
    %137 = vmatprep.subr.mxu0 0.0
    %138 = vmatpush1.msra.mxu0 %v106
    %139 = vmatprep.subr.mxu0 0.0
    %140 = vmatpush1.msra.mxu0 %v107
    %141 = vmatprep.subr.mxu0 0.0
    %142 = vmatpush1.msra.mxu0 %v108
    %143 = vmatprep.subr.mxu0 0.0
    %144 = vmatpush1.msra.mxu0 0.0
    %145 = vmatprep.subr.mxu0 0.0
    %146 = vmatpush1.msra.mxu0 0.0
    %147 = vmatprep.subr.mxu0 0.0
    %148 = vmatpush1.msra.mxu0 0.0
    %149 = vmatprep.subr.mxu0 0.0
    %150 = vmatpush1.msra.mxu0 0.0
    %151 = vmatprep.subr.mxu0 0.0
    %152 = vmatpush1.msra.mxu0 0.0
    %153 = vmatprep.subr.mxu0 0.0
    %154 = vmatpush1.msra.mxu0 0.0
    %155 = vmatprep.subr.mxu0 0.0
    %156 = vmatpush1.msra.mxu0 0.0
    %157 = vmatprep.subr.mxu0 0.0
    %158 = vmatpush1.msra.mxu0 0.0
    %159 = vmatprep.subr.mxu0 0.0
    %160 = vmatpush1.msra.mxu0 0.0
    %161 = vmatprep.subr.mxu0 0.0
    %162 = vmatpush1.msra.mxu0 0.0
    %163 = vmatprep.subr.mxu0 0.0
    %164 = vmatpush1.msra.mxu0 0.0
    %165 = vmatprep.subr.mxu0 0.0
    %166 = vmatpush1.msra.mxu0 0.0
    %167 = vmatprep.subr.mxu0 0.0
    %168 = vmatpush1.msra.mxu0 0.0
    %169 = vmatprep.subr.mxu0 0.0
    %170 = vmatpush1.msra.mxu0 0.0
    %171 = vmatprep.subr.mxu0 0.0
    %172 = vmatpush1.msra.mxu0 0.0
    %173 = vmatprep.subr.mxu0 0.0
    %174 = vmatpush1.msra.mxu0 0.0
    %175 = vmatprep.subr.mxu0 0.0
    %176 = vmatpush1.msra.mxu0 0.0
    %177 = vmatprep.subr.mxu0 0.0
    %178 = vmatpush1.msra.mxu0 0.0
    %179 = vmatprep.subr.mxu0 0.0
    %180 = vmatpush1.msra.mxu0 0.0
    %181 = vmatprep.subr.mxu0 0.0
    %182 = vmatpush1.msra.mxu0 0.0
    %183 = vmatprep.subr.mxu0 0.0
    %184 = vmatpush1.msra.mxu0 0.0
    %185 = vmatprep.subr.mxu0 0.0
    %186 = vmatpush1.msra.mxu0 0.0
    %187 = vmatprep.subr.mxu0 0.0
    %188 = vmatpush1.msra.mxu0 0.0
    %189 = vmatprep.subr.mxu0 0.0
    %190 = vmatpush1.msra.mxu0 0.0
    %191 = vmatprep.subr.mxu0 0.0
    %192 = vmatpush1.msra.mxu0 0.0
    %193 = vmatprep.subr.mxu0 0.0
    %194 = vmatpush1.msra.mxu0 0.0
    %195 = vmatprep.subr.mxu0 0.0
    %196 = vmatpush1.msra.mxu0 0.0
    %197 = vmatprep.subr.mxu0 0.0
    %198 = vmatpush1.msra.mxu0 0.0
    %199 = vmatprep.mubr.f32.mxu0 0.0
    %200 = vmatmul.mubr.f32.gmra.mrb[0].mxu0 %v130
    %v201 = vpop.f32.mrb[0].mxu0
    %v202 = vadd.f32 %v127, %v201
    %v203 = vpop.f32.mrb[0].mxu0
    %204 = vmatprep.mubr.f32.mxu0 0.0
    %205 = vmatmul.mubr.f32.gmra.mrb[0].mxu0 %v133
    %v206 = vpop.f32.mrb[0].mxu0
    %v207 = vadd.f32 %v127, %v206
    %v208 = vpop.f32.mrb[0].mxu0
    %209 = vdwg.mxu0
    %v210 = vlaneseq
    %v211 = vshrl.u32 %v210, 7
    %v212 = vsub.s32 1, %v211
    %v213 = vrot.slane %v99, %v212
    %214 = vmatprep.subr.mxu0 0.0
    %215 = vmatpush1.msra.mxu0 %v110
    %216 = vmatprep.subr.mxu0 0.0
    %217 = vmatpush1.msra.mxu0 %v111
    %218 = vmatprep.subr.mxu0 0.0
    %219 = vmatpush1.msra.mxu0 %v112
    %220 = vmatprep.subr.mxu0 0.0
    %221 = vmatpush1.msra.mxu0 %v113
    %222 = vmatprep.subr.mxu0 0.0
    %223 = vmatpush1.msra.mxu0 0.0
    %224 = vmatprep.subr.mxu0 0.0
    %225 = vmatpush1.msra.mxu0 0.0
    %226 = vmatprep.subr.mxu0 0.0
    %227 = vmatpush1.msra.mxu0 0.0
    %228 = vmatprep.subr.mxu0 0.0
    %229 = vmatpush1.msra.mxu0 0.0
    %230 = vmatprep.subr.mxu0 0.0
    %231 = vmatpush1.msra.mxu0 0.0
    %232 = vmatprep.subr.mxu0 0.0
    %233 = vmatpush1.msra.mxu0 0.0
    %234 = vmatprep.subr.mxu0 0.0
    %235 = vmatpush1.msra.mxu0 0.0
    %236 = vmatprep.subr.mxu0 0.0
    %237 = vmatpush1.msra.mxu0 0.0
    %238 = vmatprep.subr.mxu0 0.0
    %239 = vmatpush1.msra.mxu0 0.0
    %240 = vmatprep.subr.mxu0 0.0
    %241 = vmatpush1.msra.mxu0 0.0
    %242 = vmatprep.subr.mxu0 0.0
    %243 = vmatpush1.msra.mxu0 0.0
    %244 = vmatprep.subr.mxu0 0.0
    %245 = vmatpush1.msra.mxu0 0.0
    %246 = vmatprep.subr.mxu0 0.0
    %247 = vmatpush1.msra.mxu0 0.0
    %248 = vmatprep.subr.mxu0 0.0
    %249 = vmatpush1.msra.mxu0 0.0
    %250 = vmatprep.subr.mxu0 0.0
    %251 = vmatpush1.msra.mxu0 0.0
    %252 = vmatprep.subr.mxu0 0.0
    %253 = vmatpush1.msra.mxu0 0.0
    %254 = vmatprep.subr.mxu0 0.0
    %255 = vmatpush1.msra.mxu0 0.0
    %256 = vmatprep.subr.mxu0 0.0
    %257 = vmatpush1.msra.mxu0 0.0
    %258 = vmatprep.subr.mxu0 0.0
    %259 = vmatpush1.msra.mxu0 0.0
    %260 = vmatprep.subr.mxu0 0.0
    %261 = vmatpush1.msra.mxu0 0.0
    %262 = vmatprep.subr.mxu0 0.0
    %263 = vmatpush1.msra.mxu0 0.0
    %264 = vmatprep.subr.mxu0 0.0
    %265 = vmatpush1.msra.mxu0 0.0
    %266 = vmatprep.subr.mxu0 0.0
    %267 = vmatpush1.msra.mxu0 0.0
    %268 = vmatprep.subr.mxu0 0.0
    %269 = vmatpush1.msra.mxu0 0.0
    %270 = vmatprep.subr.mxu0 0.0
    %271 = vmatpush1.msra.mxu0 0.0
    %272 = vmatprep.subr.mxu0 0.0
    %273 = vmatpush1.msra.mxu0 0.0
    %274 = vmatprep.subr.mxu0 0.0
    %275 = vmatpush1.msra.mxu0 0.0
    %276 = vmatprep.subr.mxu0 0.0
    %277 = vmatpush1.msra.mxu0 0.0
    %278 = vmatprep.mubr.f32.mxu0 0.0
    %279 = vmatmul.mubr.f32.gmra.mrb[0].mxu0 %v130
    %v280 = vpop.f32.mrb[0].mxu0
    %v281 = vadd.f32 %v213, %v280
    %v282 = vpop.f32.mrb[0].mxu0
    %283 = vmatprep.mubr.f32.mxu0 0.0
    %284 = vmatmul.mubr.f32.gmra.mrb[0].mxu0 %v133
    %v285 = vpop.f32.mrb[0].mxu0
    %v286 = vadd.f32 %v213, %v285
    %v287 = vpop.f32.mrb[0].mxu0
    %288 = vdwg.mxu0
    %v289 = vlaneseq
    %v290 = vshrl.u32 %v289, 7
    %v291 = vsub.s32 2, %v290
    %v292 = vrot.slane %v99, %v291
    %293 = vmatprep.subr.mxu0 0.0
    %294 = vmatpush1.msra.mxu0 %v115
    %295 = vmatprep.subr.mxu0 0.0
    %296 = vmatpush1.msra.mxu0 %v116
    %297 = vmatprep.subr.mxu0 0.0
    %298 = vmatpush1.msra.mxu0 %v117
    %299 = vmatprep.subr.mxu0 0.0
    %300 = vmatpush1.msra.mxu0 %v118
    %301 = vmatprep.subr.mxu0 0.0
    %302 = vmatpush1.msra.mxu0 0.0
    %303 = vmatprep.subr.mxu0 0.0
    %304 = vmatpush1.msra.mxu0 0.0
    %305 = vmatprep.subr.mxu0 0.0
    %306 = vmatpush1.msra.mxu0 0.0
    %307 = vmatprep.subr.mxu0 0.0
    %308 = vmatpush1.msra.mxu0 0.0
    %309 = vmatprep.subr.mxu0 0.0
    %310 = vmatpush1.msra.mxu0 0.0
    %311 = vmatprep.subr.mxu0 0.0
    %312 = vmatpush1.msra.mxu0 0.0
    %313 = vmatprep.subr.mxu0 0.0
    %314 = vmatpush1.msra.mxu0 0.0
    %315 = vmatprep.subr.mxu0 0.0
    %316 = vmatpush1.msra.mxu0 0.0
    %317 = vmatprep.subr.mxu0 0.0
    %318 = vmatpush1.msra.mxu0 0.0
    %319 = vmatprep.subr.mxu0 0.0
    %320 = vmatpush1.msra.mxu0 0.0
    %321 = vmatprep.subr.mxu0 0.0
    %322 = vmatpush1.msra.mxu0 0.0
    %323 = vmatprep.subr.mxu0 0.0
    %324 = vmatpush1.msra.mxu0 0.0
    %325 = vmatprep.subr.mxu0 0.0
    %326 = vmatpush1.msra.mxu0 0.0
    %327 = vmatprep.subr.mxu0 0.0
    %328 = vmatpush1.msra.mxu0 0.0
    %329 = vmatprep.subr.mxu0 0.0
    %330 = vmatpush1.msra.mxu0 0.0
    %331 = vmatprep.subr.mxu0 0.0
    %332 = vmatpush1.msra.mxu0 0.0
    %333 = vmatprep.subr.mxu0 0.0
    %334 = vmatpush1.msra.mxu0 0.0
    %335 = vmatprep.subr.mxu0 0.0
    %336 = vmatpush1.msra.mxu0 0.0
    %337 = vmatprep.subr.mxu0 0.0
    %338 = vmatpush1.msra.mxu0 0.0
    %339 = vmatprep.subr.mxu0 0.0
    %340 = vmatpush1.msra.mxu0 0.0
    %341 = vmatprep.subr.mxu0 0.0
    %342 = vmatpush1.msra.mxu0 0.0
    %343 = vmatprep.subr.mxu0 0.0
    %344 = vmatpush1.msra.mxu0 0.0
    %345 = vmatprep.subr.mxu0 0.0
    %346 = vmatpush1.msra.mxu0 0.0
    %347 = vmatprep.subr.mxu0 0.0
    %348 = vmatpush1.msra.mxu0 0.0
    %349 = vmatprep.subr.mxu0 0.0
    %350 = vmatpush1.msra.mxu0 0.0
    %351 = vmatprep.subr.mxu0 0.0
    %352 = vmatpush1.msra.mxu0 0.0
    %353 = vmatprep.subr.mxu0 0.0
    %354 = vmatpush1.msra.mxu0 0.0
    %355 = vmatprep.subr.mxu0 0.0
    %356 = vmatpush1.msra.mxu0 0.0
    %357 = vmatprep.mubr.f32.mxu0 0.0
    %358 = vmatmul.mubr.f32.gmra.mrb[0].mxu0 %v130
    %v359 = vpop.f32.mrb[0].mxu0
    %v360 = vadd.f32 %v292, %v359
    %v361 = vpop.f32.mrb[0].mxu0
    %362 = vmatprep.mubr.f32.mxu0 0.0
    %363 = vmatmul.mubr.f32.gmra.mrb[0].mxu0 %v133
    %v364 = vpop.f32.mrb[0].mxu0
    %v365 = vadd.f32 %v292, %v364
    %v366 = vpop.f32.mrb[0].mxu0
    %367 = vdwg.mxu0
    %vm368 = vcmask 64512
    %v370 = vsel %vm368, %v202, 0
    %v373 = vsel %vm368, %v281, 0
    %375 = vmatprep.subr.mxu0 0.0
    %376 = vmatpush1.xpose.msra.mxu0 %v373
    %377 = vmatprep.subr.mxu0 0.0
    %378 = vmatpush1.xpose.msra.mxu0 0.0
    %379 = vmatprep.subr.mxu0 0.0
    %380 = vmatpush1.xpose.msra.mxu0 0.0
    %381 = vmatprep.subr.mxu0 0.0
    %382 = vmatpush1.xpose.msra.mxu0 0.0
    %383 = vmatprep.subr.mxu0 0.0
    %384 = vmatpush1.xpose.msra.mxu0 0.0
    %385 = vmatprep.subr.mxu0 0.0
    %386 = vmatpush1.xpose.msra.mxu0 0.0
    %387 = vmatprep.subr.mxu0 0.0
    %388 = vmatpush1.xpose.msra.mxu0 0.0
    %389 = vmatprep.subr.mxu0 0.0
    %390 = vmatpush1.xpose.msra.mxu0 0.0
    %391 = vmatprep.subr.mxu0 0.0
    %392 = vmatpush1.xpose.msra.mxu0 0.0
    %393 = vmatprep.subr.mxu0 0.0
    %394 = vmatpush1.xpose.msra.mxu0 0.0
    %395 = vmatprep.subr.mxu0 0.0
    %396 = vmatpush1.xpose.msra.mxu0 0.0
    %397 = vmatprep.subr.mxu0 0.0
    %398 = vmatpush1.xpose.msra.mxu0 0.0
    %399 = vmatprep.subr.mxu0 0.0
    %400 = vmatpush1.xpose.msra.mxu0 0.0
    %401 = vmatprep.subr.mxu0 0.0
    %402 = vmatpush1.xpose.msra.mxu0 0.0
    %403 = vmatprep.subr.mxu0 0.0
    %404 = vmatpush1.xpose.msra.mxu0 0.0
    %405 = vmatprep.subr.mxu0 0.0
    %406 = vmatpush1.xpose.msra.mxu0 0.0
    %407 = vmatprep.subr.mxu0 0.0
    %408 = vmatpush1.xpose.msra.mxu0 0.0
    %409 = vmatprep.subr.mxu0 0.0
    %410 = vmatpush1.xpose.msra.mxu0 0.0
    %411 = vmatprep.subr.mxu0 0.0
    %412 = vmatpush1.xpose.msra.mxu0 0.0
    %413 = vmatprep.subr.mxu0 0.0
    %414 = vmatpush1.xpose.msra.mxu0 0.0
    %415 = vmatprep.subr.mxu0 0.0
    %416 = vmatpush1.xpose.msra.mxu0 0.0
    %417 = vmatprep.subr.mxu0 0.0
    %418 = vmatpush1.xpose.msra.mxu0 0.0
    %419 = vmatprep.subr.mxu0 0.0
    %420 = vmatpush1.xpose.msra.mxu0 0.0
    %421 = vmatprep.subr.mxu0 0.0
    %422 = vmatpush1.xpose.msra.mxu0 0.0
    %423 = vmatprep.subr.mxu0 0.0
    %424 = vmatpush1.xpose.msra.mxu0 0.0
    %425 = vmatprep.subr.mxu0 0.0
    %426 = vmatpush1.xpose.msra.mxu0 0.0
    %427 = vmatprep.subr.mxu0 0.0
    %428 = vmatpush1.xpose.msra.mxu0 0.0
    %429 = vmatprep.subr.mxu0 0.0
    %430 = vmatpush1.xpose.msra.mxu0 0.0
    %431 = vmatprep.subr.mxu0 0.0
    %432 = vmatpush1.xpose.msra.mxu0 0.0
    %433 = vmatprep.subr.mxu0 0.0
    %434 = vmatpush1.xpose.msra.mxu0 0.0
    %435 = vmatprep.subr.mxu0 0.0
    %436 = vmatpush1.xpose.msra.mxu0 0.0
    %437 = vmatprep.subr.mxu0 0.0
    %438 = vmatpush1.xpose.msra.mxu0 0.0
    %439 = vmatprep.mubr.f32.mxu0 0.0
    %440 = vmatmul.mubr.f32.gmra.mrb[0].mxu0 %v370
    %v441 = vpop.f32.mrb[0].mxu0
    %v442 = vadd.f32 %v101, %v441
    %v443 = vpop.f32.mrb[0].mxu0
    %444 = vdwg.mxu0
    %v445 = vsel %vm368, %v442, -inf
    %446 = vmax.xlane.f32.xlu0 %v445
    %v447 = vpop.xlane.xlu0 %446
    %v448 = vsub.f32 %v442, %v447
    %v449 = vmul.f32 %v448, 1.442695
    %v450 = vpow.pop %v449
    %v451 = vsel %vm368, %v450, 0.0
    %452 = vadd.xlane.f32.xlu0 %v451
    %v453 = vpop.xlane.xlu0 %452
    %v454 = vrcp.pop %v453
    %v455 = vmul.f32 %v450, %v454
    %v457 = vsel %vm368, %v455, 0
    %459 = vmatprep.subr.mxu0 0.0
    %460 = vmatpush1.msra.mxu0 %v360
    %461 = vmatprep.subr.mxu0 0.0
    %462 = vmatpush1.msra.mxu0 0.0
    %463 = vmatprep.subr.mxu0 0.0
    %464 = vmatpush1.msra.mxu0 0.0
    %465 = vmatprep.subr.mxu0 0.0
    %466 = vmatpush1.msra.mxu0 0.0
    %467 = vmatprep.subr.mxu0 0.0
    %468 = vmatpush1.msra.mxu0 0.0
    %469 = vmatprep.subr.mxu0 0.0
    %470 = vmatpush1.msra.mxu0 0.0
    %471 = vmatprep.subr.mxu0 0.0
    %472 = vmatpush1.msra.mxu0 0.0
    %473 = vmatprep.subr.mxu0 0.0
    %474 = vmatpush1.msra.mxu0 0.0
    %475 = vmatprep.subr.mxu0 0.0
    %476 = vmatpush1.msra.mxu0 0.0
    %477 = vmatprep.subr.mxu0 0.0
    %478 = vmatpush1.msra.mxu0 0.0
    %479 = vmatprep.subr.mxu0 0.0
    %480 = vmatpush1.msra.mxu0 0.0
    %481 = vmatprep.subr.mxu0 0.0
    %482 = vmatpush1.msra.mxu0 0.0
    %483 = vmatprep.subr.mxu0 0.0
    %484 = vmatpush1.msra.mxu0 0.0
    %485 = vmatprep.subr.mxu0 0.0
    %486 = vmatpush1.msra.mxu0 0.0
    %487 = vmatprep.subr.mxu0 0.0
    %488 = vmatpush1.msra.mxu0 0.0
    %489 = vmatprep.subr.mxu0 0.0
    %490 = vmatpush1.msra.mxu0 0.0
    %491 = vmatprep.subr.mxu0 0.0
    %492 = vmatpush1.msra.mxu0 0.0
    %493 = vmatprep.subr.mxu0 0.0
    %494 = vmatpush1.msra.mxu0 0.0
    %495 = vmatprep.subr.mxu0 0.0
    %496 = vmatpush1.msra.mxu0 0.0
    %497 = vmatprep.subr.mxu0 0.0
    %498 = vmatpush1.msra.mxu0 0.0
    %499 = vmatprep.subr.mxu0 0.0
    %500 = vmatpush1.msra.mxu0 0.0
    %501 = vmatprep.subr.mxu0 0.0
    %502 = vmatpush1.msra.mxu0 0.0
    %503 = vmatprep.subr.mxu0 0.0
    %504 = vmatpush1.msra.mxu0 0.0
    %505 = vmatprep.subr.mxu0 0.0
    %506 = vmatpush1.msra.mxu0 0.0
    %507 = vmatprep.subr.mxu0 0.0
    %508 = vmatpush1.msra.mxu0 0.0
    %509 = vmatprep.subr.mxu0 0.0
    %510 = vmatpush1.msra.mxu0 0.0
    %511 = vmatprep.subr.mxu0 0.0
    %512 = vmatpush1.msra.mxu0 0.0
    %513 = vmatprep.subr.mxu0 0.0
    %514 = vmatpush1.msra.mxu0 0.0
    %515 = vmatprep.subr.mxu0 0.0
    %516 = vmatpush1.msra.mxu0 0.0
    %517 = vmatprep.subr.mxu0 0.0
    %518 = vmatpush1.msra.mxu0 0.0
    %519 = vmatprep.subr.mxu0 0.0
    %520 = vmatpush1.msra.mxu0 0.0
    %521 = vmatprep.subr.mxu0 0.0
    %522 = vmatpush1.msra.mxu0 0.0
    %523 = vmatprep.mubr.f32.mxu0 0.0
    %524 = vmatmul.mubr.f32.gmra.mrb[0].mxu0 %v457
    %v525 = vpop.f32.mrb[0].mxu0
    %v526 = vadd.f32 0.0, %v525
    %v527 = vpop.f32.mrb[0].mxu0
    %528 = vdwg.mxu0
    %529 = vrot.lane.b32.xlu0 %v202, 120
    %v530 = vpop.permute.xlu0 %529
    %531 = vrot.lane.b32.xlu0 %v281, 120
    %v532 = vpop.permute.xlu0 %531
    %v533 = vsel %vm368, %v530, 0
    %v535 = vsel %vm368, %v532, 0
    %537 = vmatprep.subr.mxu0 0.0
    %538 = vmatpush1.xpose.msra.mxu0 %v535
    %539 = vmatprep.subr.mxu0 0.0
    %540 = vmatpush1.xpose.msra.mxu0 0.0
    %541 = vmatprep.subr.mxu0 0.0
    %542 = vmatpush1.xpose.msra.mxu0 0.0
    %543 = vmatprep.subr.mxu0 0.0
    %544 = vmatpush1.xpose.msra.mxu0 0.0
    %545 = vmatprep.subr.mxu0 0.0
    %546 = vmatpush1.xpose.msra.mxu0 0.0
    %547 = vmatprep.subr.mxu0 0.0
    %548 = vmatpush1.xpose.msra.mxu0 0.0
    %549 = vmatprep.subr.mxu0 0.0
    %550 = vmatpush1.xpose.msra.mxu0 0.0
    %551 = vmatprep.subr.mxu0 0.0
    %552 = vmatpush1.xpose.msra.mxu0 0.0
    %553 = vmatprep.subr.mxu0 0.0
    %554 = vmatpush1.xpose.msra.mxu0 0.0
    %555 = vmatprep.subr.mxu0 0.0
    %556 = vmatpush1.xpose.msra.mxu0 0.0
    %557 = vmatprep.subr.mxu0 0.0
    %558 = vmatpush1.xpose.msra.mxu0 0.0
    %559 = vmatprep.subr.mxu0 0.0
    %560 = vmatpush1.xpose.msra.mxu0 0.0
    %561 = vmatprep.subr.mxu0 0.0
    %562 = vmatpush1.xpose.msra.mxu0 0.0
    %563 = vmatprep.subr.mxu0 0.0
    %564 = vmatpush1.xpose.msra.mxu0 0.0
    %565 = vmatprep.subr.mxu0 0.0
    %566 = vmatpush1.xpose.msra.mxu0 0.0
    %567 = vmatprep.subr.mxu0 0.0
    %568 = vmatpush1.xpose.msra.mxu0 0.0
    %569 = vmatprep.subr.mxu0 0.0
    %570 = vmatpush1.xpose.msra.mxu0 0.0
    %571 = vmatprep.subr.mxu0 0.0
    %572 = vmatpush1.xpose.msra.mxu0 0.0
    %573 = vmatprep.subr.mxu0 0.0
    %574 = vmatpush1.xpose.msra.mxu0 0.0
    %575 = vmatprep.subr.mxu0 0.0
    %576 = vmatpush1.xpose.msra.mxu0 0.0
    %577 = vmatprep.subr.mxu0 0.0
    %578 = vmatpush1.xpose.msra.mxu0 0.0
    %579 = vmatprep.subr.mxu0 0.0
    %580 = vmatpush1.xpose.msra.mxu0 0.0
    %581 = vmatprep.subr.mxu0 0.0
    %582 = vmatpush1.xpose.msra.mxu0 0.0
    %583 = vmatprep.subr.mxu0 0.0
    %584 = vmatpush1.xpose.msra.mxu0 0.0
    %585 = vmatprep.subr.mxu0 0.0
    %586 = vmatpush1.xpose.msra.mxu0 0.0
    %587 = vmatprep.subr.mxu0 0.0
    %588 = vmatpush1.xpose.msra.mxu0 0.0
    %589 = vmatprep.subr.mxu0 0.0
    %590 = vmatpush1.xpose.msra.mxu0 0.0
    %591 = vmatprep.subr.mxu0 0.0
    %592 = vmatpush1.xpose.msra.mxu0 0.0
    %593 = vmatprep.subr.mxu0 0.0
    %594 = vmatpush1.xpose.msra.mxu0 0.0
    %595 = vmatprep.subr.mxu0 0.0
    %596 = vmatpush1.xpose.msra.mxu0 0.0
    %597 = vmatprep.subr.mxu0 0.0
    %598 = vmatpush1.xpose.msra.mxu0 0.0
    %599 = vmatprep.subr.mxu0 0.0
    %600 = vmatpush1.xpose.msra.mxu0 0.0
    %601 = vmatprep.mubr.f32.mxu0 0.0
    %602 = vmatmul.mubr.f32.gmra.mrb[0].mxu0 %v533
    %v603 = vpop.f32.mrb[0].mxu0
    %v604 = vadd.f32 %v101, %v603
    %v605 = vpop.f32.mrb[0].mxu0
    %606 = vdwg.mxu0
    %v607 = vsel %vm368, %v604, -inf
    %608 = vmax.xlane.f32.xlu0 %v607
    %v609 = vpop.xlane.xlu0 %608
    %v610 = vsub.f32 %v604, %v609
    %v611 = vmul.f32 %v610, 1.442695
    %v612 = vpow.pop %v611
    %v613 = vsel %vm368, %v612, 0.0
    %614 = vadd.xlane.f32.xlu0 %v613
    %v615 = vpop.xlane.xlu0 %614
    %v616 = vrcp.pop %v615
    %v617 = vmul.f32 %v612, %v616
    %619 = vrot.lane.b32.xlu0 %v360, 120
    %v620 = vpop.permute.xlu0 %619
    %v623 = vsel %vm368, %v617, 0
    %625 = vmatprep.subr.mxu0 0.0
    %626 = vmatpush1.msra.mxu0 %v620
    %627 = vmatprep.subr.mxu0 0.0
    %628 = vmatpush1.msra.mxu0 0.0
    %629 = vmatprep.subr.mxu0 0.0
    %630 = vmatpush1.msra.mxu0 0.0
    %631 = vmatprep.subr.mxu0 0.0
    %632 = vmatpush1.msra.mxu0 0.0
    %633 = vmatprep.subr.mxu0 0.0
    %634 = vmatpush1.msra.mxu0 0.0
    %635 = vmatprep.subr.mxu0 0.0
    %636 = vmatpush1.msra.mxu0 0.0
    %637 = vmatprep.subr.mxu0 0.0
    %638 = vmatpush1.msra.mxu0 0.0
    %639 = vmatprep.subr.mxu0 0.0
    %640 = vmatpush1.msra.mxu0 0.0
    %641 = vmatprep.subr.mxu0 0.0
    %642 = vmatpush1.msra.mxu0 0.0
    %643 = vmatprep.subr.mxu0 0.0
    %644 = vmatpush1.msra.mxu0 0.0
    %645 = vmatprep.subr.mxu0 0.0
    %646 = vmatpush1.msra.mxu0 0.0
    %647 = vmatprep.subr.mxu0 0.0
    %648 = vmatpush1.msra.mxu0 0.0
    %649 = vmatprep.subr.mxu0 0.0
    %650 = vmatpush1.msra.mxu0 0.0
    %651 = vmatprep.subr.mxu0 0.0
    %652 = vmatpush1.msra.mxu0 0.0
    %653 = vmatprep.subr.mxu0 0.0
    %654 = vmatpush1.msra.mxu0 0.0
    %655 = vmatprep.subr.mxu0 0.0
    %656 = vmatpush1.msra.mxu0 0.0
    %657 = vmatprep.subr.mxu0 0.0
    %658 = vmatpush1.msra.mxu0 0.0
    %659 = vmatprep.subr.mxu0 0.0
    %660 = vmatpush1.msra.mxu0 0.0
    %661 = vmatprep.subr.mxu0 0.0
    %662 = vmatpush1.msra.mxu0 0.0
    %663 = vmatprep.subr.mxu0 0.0
    %664 = vmatpush1.msra.mxu0 0.0
    %665 = vmatprep.subr.mxu0 0.0
    %666 = vmatpush1.msra.mxu0 0.0
    %667 = vmatprep.subr.mxu0 0.0
    %668 = vmatpush1.msra.mxu0 0.0
    %669 = vmatprep.subr.mxu0 0.0
    %670 = vmatpush1.msra.mxu0 0.0
    %671 = vmatprep.subr.mxu0 0.0
    %672 = vmatpush1.msra.mxu0 0.0
    %673 = vmatprep.subr.mxu0 0.0
    %674 = vmatpush1.msra.mxu0 0.0
    %675 = vmatprep.subr.mxu0 0.0
    %676 = vmatpush1.msra.mxu0 0.0
    %677 = vmatprep.subr.mxu0 0.0
    %678 = vmatpush1.msra.mxu0 0.0
    %679 = vmatprep.subr.mxu0 0.0
    %680 = vmatpush1.msra.mxu0 0.0
    %681 = vmatprep.subr.mxu0 0.0
    %682 = vmatpush1.msra.mxu0 0.0
    %683 = vmatprep.subr.mxu0 0.0
    %684 = vmatpush1.msra.mxu0 0.0
    %685 = vmatprep.subr.mxu0 0.0
    %686 = vmatpush1.msra.mxu0 0.0
    %687 = vmatprep.subr.mxu0 0.0
    %688 = vmatpush1.msra.mxu0 0.0
    %689 = vmatprep.mubr.f32.mxu0 0.0
    %690 = vmatmul.mubr.f32.gmra.mrb[0].mxu0 %v623
    %v691 = vpop.f32.mrb[0].mxu0
    %v692 = vadd.f32 0.0, %v691
    %v693 = vpop.f32.mrb[0].mxu0
    %694 = vdwg.mxu0
    %v696 = vsel %vm368, %v692, 0
    %698 = vmatprep.subr.mxu0 0.0
    %699 = vmatpush1.msra.mxu0 %v121
    %700 = vmatprep.subr.mxu0 0.0
    %701 = vmatpush1.msra.mxu0 0.0
    %702 = vmatprep.subr.mxu0 0.0
    %703 = vmatpush1.msra.mxu0 0.0
    %704 = vmatprep.subr.mxu0 0.0
    %705 = vmatpush1.msra.mxu0 0.0
    %706 = vmatprep.subr.mxu0 0.0
    %707 = vmatpush1.msra.mxu0 0.0
    %708 = vmatprep.subr.mxu0 0.0
    %709 = vmatpush1.msra.mxu0 0.0
    %710 = vmatprep.subr.mxu0 0.0
    %711 = vmatpush1.msra.mxu0 0.0
    %712 = vmatprep.subr.mxu0 0.0
    %713 = vmatpush1.msra.mxu0 0.0
    %714 = vmatprep.subr.mxu0 0.0
    %715 = vmatpush1.msra.mxu0 0.0
    %716 = vmatprep.subr.mxu0 0.0
    %717 = vmatpush1.msra.mxu0 0.0
    %718 = vmatprep.subr.mxu0 0.0
    %719 = vmatpush1.msra.mxu0 0.0
    %720 = vmatprep.subr.mxu0 0.0
    %721 = vmatpush1.msra.mxu0 0.0
    %722 = vmatprep.subr.mxu0 0.0
    %723 = vmatpush1.msra.mxu0 0.0
    %724 = vmatprep.subr.mxu0 0.0
    %725 = vmatpush1.msra.mxu0 0.0
    %726 = vmatprep.subr.mxu0 0.0
    %727 = vmatpush1.msra.mxu0 0.0
    %728 = vmatprep.subr.mxu0 0.0
    %729 = vmatpush1.msra.mxu0 0.0
    %730 = vmatprep.subr.mxu0 0.0
    %731 = vmatpush1.msra.mxu0 0.0
    %732 = vmatprep.subr.mxu0 0.0
    %733 = vmatpush1.msra.mxu0 0.0
    %734 = vmatprep.subr.mxu0 0.0
    %735 = vmatpush1.msra.mxu0 0.0
    %736 = vmatprep.subr.mxu0 0.0
    %737 = vmatpush1.msra.mxu0 0.0
    %738 = vmatprep.subr.mxu0 0.0
    %739 = vmatpush1.msra.mxu0 0.0
    %740 = vmatprep.subr.mxu0 0.0
    %741 = vmatpush1.msra.mxu0 0.0
    %742 = vmatprep.subr.mxu0 0.0
    %743 = vmatpush1.msra.mxu0 0.0
    %744 = vmatprep.subr.mxu0 0.0
    %745 = vmatpush1.msra.mxu0 0.0
    %746 = vmatprep.subr.mxu0 0.0
    %747 = vmatpush1.msra.mxu0 0.0
    %748 = vmatprep.subr.mxu0 0.0
    %749 = vmatpush1.msra.mxu0 0.0
    %750 = vmatprep.subr.mxu0 0.0
    %751 = vmatpush1.msra.mxu0 0.0
    %752 = vmatprep.subr.mxu0 0.0
    %753 = vmatpush1.msra.mxu0 0.0
    %754 = vmatprep.subr.mxu0 0.0
    %755 = vmatpush1.msra.mxu0 0.0
    %756 = vmatprep.subr.mxu0 0.0
    %757 = vmatpush1.msra.mxu0 0.0
    %758 = vmatprep.subr.mxu0 0.0
    %759 = vmatpush1.msra.mxu0 0.0
    %760 = vmatprep.subr.mxu0 0.0
    %761 = vmatpush1.msra.mxu0 0.0
    %762 = vmatprep.mubr.f32.mxu0 0.0
    %763 = vmatmul.mubr.f32.gmra.mrb[0].mxu0 %v696
    %v764 = vpop.f32.mrb[0].mxu0
    %v765 = vadd.f32 0.0, %v764
    %v766 = vpop.f32.mrb[0].mxu0
    %767 = vdwg.mxu0
    %v769 = vsel %vm368, %v526, 0
    %771 = vmatprep.subr.mxu0 0.0
    %772 = vmatpush1.msra.mxu0 %v120
    %773 = vmatprep.subr.mxu0 0.0
    %774 = vmatpush1.msra.mxu0 0.0
    %775 = vmatprep.subr.mxu0 0.0
    %776 = vmatpush1.msra.mxu0 0.0
    %777 = vmatprep.subr.mxu0 0.0
    %778 = vmatpush1.msra.mxu0 0.0
    %779 = vmatprep.subr.mxu0 0.0
    %780 = vmatpush1.msra.mxu0 0.0
    %781 = vmatprep.subr.mxu0 0.0
    %782 = vmatpush1.msra.mxu0 0.0
    %783 = vmatprep.subr.mxu0 0.0
    %784 = vmatpush1.msra.mxu0 0.0
    %785 = vmatprep.subr.mxu0 0.0
    %786 = vmatpush1.msra.mxu0 0.0
    %787 = vmatprep.subr.mxu0 0.0
    %788 = vmatpush1.msra.mxu0 0.0
    %789 = vmatprep.subr.mxu0 0.0
    %790 = vmatpush1.msra.mxu0 0.0
    %791 = vmatprep.subr.mxu0 0.0
    %792 = vmatpush1.msra.mxu0 0.0
    %793 = vmatprep.subr.mxu0 0.0
    %794 = vmatpush1.msra.mxu0 0.0
    %795 = vmatprep.subr.mxu0 0.0
    %796 = vmatpush1.msra.mxu0 0.0
    %797 = vmatprep.subr.mxu0 0.0
    %798 = vmatpush1.msra.mxu0 0.0
    %799 = vmatprep.subr.mxu0 0.0
    %800 = vmatpush1.msra.mxu0 0.0
    %801 = vmatprep.subr.mxu0 0.0
    %802 = vmatpush1.msra.mxu0 0.0
    %803 = vmatprep.subr.mxu0 0.0
    %804 = vmatpush1.msra.mxu0 0.0
    %805 = vmatprep.subr.mxu0 0.0
    %806 = vmatpush1.msra.mxu0 0.0
    %807 = vmatprep.subr.mxu0 0.0
    %808 = vmatpush1.msra.mxu0 0.0
    %809 = vmatprep.subr.mxu0 0.0
    %810 = vmatpush1.msra.mxu0 0.0
    %811 = vmatprep.subr.mxu0 0.0
    %812 = vmatpush1.msra.mxu0 0.0
    %813 = vmatprep.subr.mxu0 0.0
    %814 = vmatpush1.msra.mxu0 0.0
    %815 = vmatprep.subr.mxu0 0.0
    %816 = vmatpush1.msra.mxu0 0.0
    %817 = vmatprep.subr.mxu0 0.0
    %818 = vmatpush1.msra.mxu0 0.0
    %819 = vmatprep.subr.mxu0 0.0
    %820 = vmatpush1.msra.mxu0 0.0
    %821 = vmatprep.subr.mxu0 0.0
    %822 = vmatpush1.msra.mxu0 0.0
    %823 = vmatprep.subr.mxu0 0.0
    %824 = vmatpush1.msra.mxu0 0.0
    %825 = vmatprep.subr.mxu0 0.0
    %826 = vmatpush1.msra.mxu0 0.0
    %827 = vmatprep.subr.mxu0 0.0
    %828 = vmatpush1.msra.mxu0 0.0
    %829 = vmatprep.subr.mxu0 0.0
    %830 = vmatpush1.msra.mxu0 0.0
    %831 = vmatprep.subr.mxu0 0.0
    %832 = vmatpush1.msra.mxu0 0.0
    %833 = vmatprep.subr.mxu0 0.0
    %834 = vmatpush1.msra.mxu0 0.0
    %835 = vmatprep.mubr.f32.mxu0 0.0
    %836 = vmatmul.mubr.f32.gmra.mrb[0].mxu0 %v769
    %v837 = vpop.f32.mrb[0].mxu0
    %v838 = vadd.f32 %v765, %v837
    %v839 = vpop.f32.mrb[0].mxu0
    %840 = vdwg.mxu0
    %841 = vrot.lane.b32.xlu0 %v202, 112
    %v842 = vpop.permute.xlu0 %841
    %843 = vrot.lane.b32.xlu0 %v281, 112
    %v844 = vpop.permute.xlu0 %843
    %v845 = vsel %vm368, %v842, 0
    %v847 = vsel %vm368, %v844, 0
    %849 = vmatprep.subr.mxu0 0.0
    %850 = vmatpush1.xpose.msra.mxu0 %v847
    %851 = vmatprep.subr.mxu0 0.0
    %852 = vmatpush1.xpose.msra.mxu0 0.0
    %853 = vmatprep.subr.mxu0 0.0
    %854 = vmatpush1.xpose.msra.mxu0 0.0
    %855 = vmatprep.subr.mxu0 0.0
    %856 = vmatpush1.xpose.msra.mxu0 0.0
    %857 = vmatprep.subr.mxu0 0.0
    %858 = vmatpush1.xpose.msra.mxu0 0.0
    %859 = vmatprep.subr.mxu0 0.0
    %860 = vmatpush1.xpose.msra.mxu0 0.0
    %861 = vmatprep.subr.mxu0 0.0
    %862 = vmatpush1.xpose.msra.mxu0 0.0
    %863 = vmatprep.subr.mxu0 0.0
    %864 = vmatpush1.xpose.msra.mxu0 0.0
    %865 = vmatprep.subr.mxu0 0.0
    %866 = vmatpush1.xpose.msra.mxu0 0.0
    %867 = vmatprep.subr.mxu0 0.0
    %868 = vmatpush1.xpose.msra.mxu0 0.0
    %869 = vmatprep.subr.mxu0 0.0
    %870 = vmatpush1.xpose.msra.mxu0 0.0
    %871 = vmatprep.subr.mxu0 0.0
    %872 = vmatpush1.xpose.msra.mxu0 0.0
    %873 = vmatprep.subr.mxu0 0.0
    %874 = vmatpush1.xpose.msra.mxu0 0.0
    %875 = vmatprep.subr.mxu0 0.0
    %876 = vmatpush1.xpose.msra.mxu0 0.0
    %877 = vmatprep.subr.mxu0 0.0
    %878 = vmatpush1.xpose.msra.mxu0 0.0
    %879 = vmatprep.subr.mxu0 0.0
    %880 = vmatpush1.xpose.msra.mxu0 0.0
    %881 = vmatprep.subr.mxu0 0.0
    %882 = vmatpush1.xpose.msra.mxu0 0.0
    %883 = vmatprep.subr.mxu0 0.0
    %884 = vmatpush1.xpose.msra.mxu0 0.0
    %885 = vmatprep.subr.mxu0 0.0
    %886 = vmatpush1.xpose.msra.mxu0 0.0
    %887 = vmatprep.subr.mxu0 0.0
    %888 = vmatpush1.xpose.msra.mxu0 0.0
    %889 = vmatprep.subr.mxu0 0.0
    %890 = vmatpush1.xpose.msra.mxu0 0.0
    %891 = vmatprep.subr.mxu0 0.0
    %892 = vmatpush1.xpose.msra.mxu0 0.0
    %893 = vmatprep.subr.mxu0 0.0
    %894 = vmatpush1.xpose.msra.mxu0 0.0
    %895 = vmatprep.subr.mxu0 0.0
    %896 = vmatpush1.xpose.msra.mxu0 0.0
    %897 = vmatprep.subr.mxu0 0.0
    %898 = vmatpush1.xpose.msra.mxu0 0.0
    %899 = vmatprep.subr.mxu0 0.0
    %900 = vmatpush1.xpose.msra.mxu0 0.0
    %901 = vmatprep.subr.mxu0 0.0
    %902 = vmatpush1.xpose.msra.mxu0 0.0
    %903 = vmatprep.subr.mxu0 0.0
    %904 = vmatpush1.xpose.msra.mxu0 0.0
    %905 = vmatprep.subr.mxu0 0.0
    %906 = vmatpush1.xpose.msra.mxu0 0.0
    %907 = vmatprep.subr.mxu0 0.0
    %908 = vmatpush1.xpose.msra.mxu0 0.0
    %909 = vmatprep.subr.mxu0 0.0
    %910 = vmatpush1.xpose.msra.mxu0 0.0
    %911 = vmatprep.subr.mxu0 0.0
    %912 = vmatpush1.xpose.msra.mxu0 0.0
    %913 = vmatprep.mubr.f32.mxu0 0.0
    %914 = vmatmul.mubr.f32.gmra.mrb[0].mxu0 %v845
    %v915 = vpop.f32.mrb[0].mxu0
    %v916 = vadd.f32 %v101, %v915
    %v917 = vpop.f32.mrb[0].mxu0
    %918 = vdwg.mxu0
    %v919 = vsel %vm368, %v916, -inf
    %920 = vmax.xlane.f32.xlu0 %v919
    %v921 = vpop.xlane.xlu0 %920
    %v922 = vsub.f32 %v916, %v921
    %v923 = vmul.f32 %v922, 1.442695
    %v924 = vpow.pop %v923
    %v925 = vsel %vm368, %v924, 0.0
    %926 = vadd.xlane.f32.xlu0 %v925
    %v927 = vpop.xlane.xlu0 %926
    %v928 = vrcp.pop %v927
    %v929 = vmul.f32 %v924, %v928
    %930 = vrot.lane.b32.xlu0 %v360, 112
    %v931 = vpop.permute.xlu0 %930
    %v934 = vsel %vm368, %v929, 0
    %936 = vmatprep.subr.mxu0 0.0
    %937 = vmatpush1.msra.mxu0 %v931
    %938 = vmatprep.subr.mxu0 0.0
    %939 = vmatpush1.msra.mxu0 0.0
    %940 = vmatprep.subr.mxu0 0.0
    %941 = vmatpush1.msra.mxu0 0.0
    %942 = vmatprep.subr.mxu0 0.0
    %943 = vmatpush1.msra.mxu0 0.0
    %944 = vmatprep.subr.mxu0 0.0
    %945 = vmatpush1.msra.mxu0 0.0
    %946 = vmatprep.subr.mxu0 0.0
    %947 = vmatpush1.msra.mxu0 0.0
    %948 = vmatprep.subr.mxu0 0.0
    %949 = vmatpush1.msra.mxu0 0.0
    %950 = vmatprep.subr.mxu0 0.0
    %951 = vmatpush1.msra.mxu0 0.0
    %952 = vmatprep.subr.mxu0 0.0
    %953 = vmatpush1.msra.mxu0 0.0
    %954 = vmatprep.subr.mxu0 0.0
    %955 = vmatpush1.msra.mxu0 0.0
    %956 = vmatprep.subr.mxu0 0.0
    %957 = vmatpush1.msra.mxu0 0.0
    %958 = vmatprep.subr.mxu0 0.0
    %959 = vmatpush1.msra.mxu0 0.0
    %960 = vmatprep.subr.mxu0 0.0
    %961 = vmatpush1.msra.mxu0 0.0
    %962 = vmatprep.subr.mxu0 0.0
    %963 = vmatpush1.msra.mxu0 0.0
    %964 = vmatprep.subr.mxu0 0.0
    %965 = vmatpush1.msra.mxu0 0.0
    %966 = vmatprep.subr.mxu0 0.0
    %967 = vmatpush1.msra.mxu0 0.0
    %968 = vmatprep.subr.mxu0 0.0
    %969 = vmatpush1.msra.mxu0 0.0
    %970 = vmatprep.subr.mxu0 0.0
    %971 = vmatpush1.msra.mxu0 0.0
    %972 = vmatprep.subr.mxu0 0.0
    %973 = vmatpush1.msra.mxu0 0.0
    %974 = vmatprep.subr.mxu0 0.0
    %975 = vmatpush1.msra.mxu0 0.0
    %976 = vmatprep.subr.mxu0 0.0
    %977 = vmatpush1.msra.mxu0 0.0
    %978 = vmatprep.subr.mxu0 0.0
    %979 = vmatpush1.msra.mxu0 0.0
    %980 = vmatprep.subr.mxu0 0.0
    %981 = vmatpush1.msra.mxu0 0.0
    %982 = vmatprep.subr.mxu0 0.0
    %983 = vmatpush1.msra.mxu0 0.0
    %984 = vmatprep.subr.mxu0 0.0
    %985 = vmatpush1.msra.mxu0 0.0
    %986 = vmatprep.subr.mxu0 0.0
    %987 = vmatpush1.msra.mxu0 0.0
    %988 = vmatprep.subr.mxu0 0.0
    %989 = vmatpush1.msra.mxu0 0.0
    %990 = vmatprep.subr.mxu0 0.0
    %991 = vmatpush1.msra.mxu0 0.0
    %992 = vmatprep.subr.mxu0 0.0
    %993 = vmatpush1.msra.mxu0 0.0
    %994 = vmatprep.subr.mxu0 0.0
    %995 = vmatpush1.msra.mxu0 0.0
    %996 = vmatprep.subr.mxu0 0.0
    %997 = vmatpush1.msra.mxu0 0.0
    %998 = vmatprep.subr.mxu0 0.0
    %999 = vmatpush1.msra.mxu0 0.0
    %1000 = vmatprep.mubr.f32.mxu0 0.0
    %1001 = vmatmul.mubr.f32.gmra.mrb[0].mxu0 %v934
    %v1002 = vpop.f32.mrb[0].mxu0
    %v1003 = vadd.f32 0.0, %v1002
    %v1004 = vpop.f32.mrb[0].mxu0
    %1005 = vdwg.mxu0
    %v1007 = vsel %vm368, %v1003, 0
    %1009 = vmatprep.subr.mxu0 0.0
    %1010 = vmatpush1.msra.mxu0 %v122
    %1011 = vmatprep.subr.mxu0 0.0
    %1012 = vmatpush1.msra.mxu0 0.0
    %1013 = vmatprep.subr.mxu0 0.0
    %1014 = vmatpush1.msra.mxu0 0.0
    %1015 = vmatprep.subr.mxu0 0.0
    %1016 = vmatpush1.msra.mxu0 0.0
    %1017 = vmatprep.subr.mxu0 0.0
    %1018 = vmatpush1.msra.mxu0 0.0
    %1019 = vmatprep.subr.mxu0 0.0
    %1020 = vmatpush1.msra.mxu0 0.0
    %1021 = vmatprep.subr.mxu0 0.0
    %1022 = vmatpush1.msra.mxu0 0.0
    %1023 = vmatprep.subr.mxu0 0.0
    %1024 = vmatpush1.msra.mxu0 0.0
    %1025 = vmatprep.subr.mxu0 0.0
    %1026 = vmatpush1.msra.mxu0 0.0
    %1027 = vmatprep.subr.mxu0 0.0
    %1028 = vmatpush1.msra.mxu0 0.0
    %1029 = vmatprep.subr.mxu0 0.0
    %1030 = vmatpush1.msra.mxu0 0.0
    %1031 = vmatprep.subr.mxu0 0.0
    %1032 = vmatpush1.msra.mxu0 0.0
    %1033 = vmatprep.subr.mxu0 0.0
    %1034 = vmatpush1.msra.mxu0 0.0
    %1035 = vmatprep.subr.mxu0 0.0
    %1036 = vmatpush1.msra.mxu0 0.0
    %1037 = vmatprep.subr.mxu0 0.0
    %1038 = vmatpush1.msra.mxu0 0.0
    %1039 = vmatprep.subr.mxu0 0.0
    %1040 = vmatpush1.msra.mxu0 0.0
    %1041 = vmatprep.subr.mxu0 0.0
    %1042 = vmatpush1.msra.mxu0 0.0
    %1043 = vmatprep.subr.mxu0 0.0
    %1044 = vmatpush1.msra.mxu0 0.0
    %1045 = vmatprep.subr.mxu0 0.0
    %1046 = vmatpush1.msra.mxu0 0.0
    %1047 = vmatprep.subr.mxu0 0.0
    %1048 = vmatpush1.msra.mxu0 0.0
    %1049 = vmatprep.subr.mxu0 0.0
    %1050 = vmatpush1.msra.mxu0 0.0
    %1051 = vmatprep.subr.mxu0 0.0
    %1052 = vmatpush1.msra.mxu0 0.0
    %1053 = vmatprep.subr.mxu0 0.0
    %1054 = vmatpush1.msra.mxu0 0.0
    %1055 = vmatprep.subr.mxu0 0.0
    %1056 = vmatpush1.msra.mxu0 0.0
    %1057 = vmatprep.subr.mxu0 0.0
    %1058 = vmatpush1.msra.mxu0 0.0
    %1059 = vmatprep.subr.mxu0 0.0
    %1060 = vmatpush1.msra.mxu0 0.0
    %1061 = vmatprep.subr.mxu0 0.0
    %1062 = vmatpush1.msra.mxu0 0.0
    %1063 = vmatprep.subr.mxu0 0.0
    %1064 = vmatpush1.msra.mxu0 0.0
    %1065 = vmatprep.subr.mxu0 0.0
    %1066 = vmatpush1.msra.mxu0 0.0
    %1067 = vmatprep.subr.mxu0 0.0
    %1068 = vmatpush1.msra.mxu0 0.0
    %1069 = vmatprep.subr.mxu0 0.0
    %1070 = vmatpush1.msra.mxu0 0.0
    %1071 = vmatprep.subr.mxu0 0.0
    %1072 = vmatpush1.msra.mxu0 0.0
    %1073 = vmatprep.mubr.f32.mxu0 0.0
    %1074 = vmatmul.mubr.f32.gmra.mrb[0].mxu0 %v1007
    %v1075 = vpop.f32.mrb[0].mxu0
    %v1076 = vadd.f32 0.0, %v1075
    %v1077 = vpop.f32.mrb[0].mxu0
    %1078 = vdwg.mxu0
    %v1079 = vadd.f32 %v838, %v1076
    %1080 = vrot.lane.b32.xlu0 %v202, 104
    %v1081 = vpop.permute.xlu0 %1080
    %1082 = vrot.lane.b32.xlu0 %v281, 104
    %v1083 = vpop.permute.xlu0 %1082
    %v1084 = vsel %vm368, %v1081, 0
    %v1086 = vsel %vm368, %v1083, 0
    %1088 = vmatprep.subr.mxu0 0.0
    %1089 = vmatpush1.xpose.msra.mxu0 %v1086
    %1090 = vmatprep.subr.mxu0 0.0
    %1091 = vmatpush1.xpose.msra.mxu0 0.0
    %1092 = vmatprep.subr.mxu0 0.0
    %1093 = vmatpush1.xpose.msra.mxu0 0.0
    %1094 = vmatprep.subr.mxu0 0.0
    %1095 = vmatpush1.xpose.msra.mxu0 0.0
    %1096 = vmatprep.subr.mxu0 0.0
    %1097 = vmatpush1.xpose.msra.mxu0 0.0
    %1098 = vmatprep.subr.mxu0 0.0
    %1099 = vmatpush1.xpose.msra.mxu0 0.0
    %1100 = vmatprep.subr.mxu0 0.0
    %1101 = vmatpush1.xpose.msra.mxu0 0.0
    %1102 = vmatprep.subr.mxu0 0.0
    %1103 = vmatpush1.xpose.msra.mxu0 0.0
    %1104 = vmatprep.subr.mxu0 0.0
    %1105 = vmatpush1.xpose.msra.mxu0 0.0
    %1106 = vmatprep.subr.mxu0 0.0
    %1107 = vmatpush1.xpose.msra.mxu0 0.0
    %1108 = vmatprep.subr.mxu0 0.0
    %1109 = vmatpush1.xpose.msra.mxu0 0.0
    %1110 = vmatprep.subr.mxu0 0.0
    %1111 = vmatpush1.xpose.msra.mxu0 0.0
    %1112 = vmatprep.subr.mxu0 0.0
    %1113 = vmatpush1.xpose.msra.mxu0 0.0
    %1114 = vmatprep.subr.mxu0 0.0
    %1115 = vmatpush1.xpose.msra.mxu0 0.0
    %1116 = vmatprep.subr.mxu0 0.0
    %1117 = vmatpush1.xpose.msra.mxu0 0.0
    %1118 = vmatprep.subr.mxu0 0.0
    %1119 = vmatpush1.xpose.msra.mxu0 0.0
    %1120 = vmatprep.subr.mxu0 0.0
    %1121 = vmatpush1.xpose.msra.mxu0 0.0
    %1122 = vmatprep.subr.mxu0 0.0
    %1123 = vmatpush1.xpose.msra.mxu0 0.0
    %1124 = vmatprep.subr.mxu0 0.0
    %1125 = vmatpush1.xpose.msra.mxu0 0.0
    %1126 = vmatprep.subr.mxu0 0.0
    %1127 = vmatpush1.xpose.msra.mxu0 0.0
    %1128 = vmatprep.subr.mxu0 0.0
    %1129 = vmatpush1.xpose.msra.mxu0 0.0
    %1130 = vmatprep.subr.mxu0 0.0
    %1131 = vmatpush1.xpose.msra.mxu0 0.0
    %1132 = vmatprep.subr.mxu0 0.0
    %1133 = vmatpush1.xpose.msra.mxu0 0.0
    %1134 = vmatprep.subr.mxu0 0.0
    %1135 = vmatpush1.xpose.msra.mxu0 0.0
    %1136 = vmatprep.subr.mxu0 0.0
    %1137 = vmatpush1.xpose.msra.mxu0 0.0
    %1138 = vmatprep.subr.mxu0 0.0
    %1139 = vmatpush1.xpose.msra.mxu0 0.0
    %1140 = vmatprep.subr.mxu0 0.0
    %1141 = vmatpush1.xpose.msra.mxu0 0.0
    %1142 = vmatprep.subr.mxu0 0.0
    %1143 = vmatpush1.xpose.msra.mxu0 0.0
    %1144 = vmatprep.subr.mxu0 0.0
    %1145 = vmatpush1.xpose.msra.mxu0 0.0
    %1146 = vmatprep.subr.mxu0 0.0
    %1147 = vmatpush1.xpose.msra.mxu0 0.0
    %1148 = vmatprep.subr.mxu0 0.0
    %1149 = vmatpush1.xpose.msra.mxu0 0.0
    %1150 = vmatprep.subr.mxu0 0.0
    %1151 = vmatpush1.xpose.msra.mxu0 0.0
    %1152 = vmatprep.mubr.f32.mxu0 0.0
    %1153 = vmatmul.mubr.f32.gmra.mrb[0].mxu0 %v1084
    %v1154 = vpop.f32.mrb[0].mxu0
    %v1155 = vadd.f32 %v101, %v1154
    %v1156 = vpop.f32.mrb[0].mxu0
    %1157 = vdwg.mxu0
    %v1158 = vsel %vm368, %v1155, -inf
    %1159 = vmax.xlane.f32.xlu0 %v1158
    %v1160 = vpop.xlane.xlu0 %1159
    %v1161 = vsub.f32 %v1155, %v1160
    %v1162 = vmul.f32 %v1161, 1.442695
    %v1163 = vpow.pop %v1162
    %v1164 = vsel %vm368, %v1163, 0.0
    %1165 = vadd.xlane.f32.xlu0 %v1164
    %v1166 = vpop.xlane.xlu0 %1165
    %v1167 = vrcp.pop %v1166
    %v1168 = vmul.f32 %v1163, %v1167
    %1169 = vrot.lane.b32.xlu0 %v360, 104
    %v1170 = vpop.permute.xlu0 %1169
    %v1173 = vsel %vm368, %v1168, 0
    %1175 = vmatprep.subr.mxu0 0.0
    %1176 = vmatpush1.msra.mxu0 %v1170
    %1177 = vmatprep.subr.mxu0 0.0
    %1178 = vmatpush1.msra.mxu0 0.0
    %1179 = vmatprep.subr.mxu0 0.0
    %1180 = vmatpush1.msra.mxu0 0.0
    %1181 = vmatprep.subr.mxu0 0.0
    %1182 = vmatpush1.msra.mxu0 0.0
    %1183 = vmatprep.subr.mxu0 0.0
    %1184 = vmatpush1.msra.mxu0 0.0
    %1185 = vmatprep.subr.mxu0 0.0
    %1186 = vmatpush1.msra.mxu0 0.0
    %1187 = vmatprep.subr.mxu0 0.0
    %1188 = vmatpush1.msra.mxu0 0.0
    %1189 = vmatprep.subr.mxu0 0.0
    %1190 = vmatpush1.msra.mxu0 0.0
    %1191 = vmatprep.subr.mxu0 0.0
    %1192 = vmatpush1.msra.mxu0 0.0
    %1193 = vmatprep.subr.mxu0 0.0
    %1194 = vmatpush1.msra.mxu0 0.0
    %1195 = vmatprep.subr.mxu0 0.0
    %1196 = vmatpush1.msra.mxu0 0.0
    %1197 = vmatprep.subr.mxu0 0.0
    %1198 = vmatpush1.msra.mxu0 0.0
    %1199 = vmatprep.subr.mxu0 0.0
    %1200 = vmatpush1.msra.mxu0 0.0
    %1201 = vmatprep.subr.mxu0 0.0
    %1202 = vmatpush1.msra.mxu0 0.0
    %1203 = vmatprep.subr.mxu0 0.0
    %1204 = vmatpush1.msra.mxu0 0.0
    %1205 = vmatprep.subr.mxu0 0.0
    %1206 = vmatpush1.msra.mxu0 0.0
    %1207 = vmatprep.subr.mxu0 0.0
    %1208 = vmatpush1.msra.mxu0 0.0
    %1209 = vmatprep.subr.mxu0 0.0
    %1210 = vmatpush1.msra.mxu0 0.0
    %1211 = vmatprep.subr.mxu0 0.0
    %1212 = vmatpush1.msra.mxu0 0.0
    %1213 = vmatprep.subr.mxu0 0.0
    %1214 = vmatpush1.msra.mxu0 0.0
    %1215 = vmatprep.subr.mxu0 0.0
    %1216 = vmatpush1.msra.mxu0 0.0
    %1217 = vmatprep.subr.mxu0 0.0
    %1218 = vmatpush1.msra.mxu0 0.0
    %1219 = vmatprep.subr.mxu0 0.0
    %1220 = vmatpush1.msra.mxu0 0.0
    %1221 = vmatprep.subr.mxu0 0.0
    %1222 = vmatpush1.msra.mxu0 0.0
    %1223 = vmatprep.subr.mxu0 0.0
    %1224 = vmatpush1.msra.mxu0 0.0
    %1225 = vmatprep.subr.mxu0 0.0
    %1226 = vmatpush1.msra.mxu0 0.0
    %1227 = vmatprep.subr.mxu0 0.0
    %1228 = vmatpush1.msra.mxu0 0.0
    %1229 = vmatprep.subr.mxu0 0.0
    %1230 = vmatpush1.msra.mxu0 0.0
    %1231 = vmatprep.subr.mxu0 0.0
    %1232 = vmatpush1.msra.mxu0 0.0
    %1233 = vmatprep.subr.mxu0 0.0
    %1234 = vmatpush1.msra.mxu0 0.0
    %1235 = vmatprep.subr.mxu0 0.0
    %1236 = vmatpush1.msra.mxu0 0.0
    %1237 = vmatprep.subr.mxu0 0.0
    %1238 = vmatpush1.msra.mxu0 0.0
    %1239 = vmatprep.mubr.f32.mxu0 0.0
    %1240 = vmatmul.mubr.f32.gmra.mrb[0].mxu0 %v1173
    %v1241 = vpop.f32.mrb[0].mxu0
    %v1242 = vadd.f32 0.0, %v1241
    %v1243 = vpop.f32.mrb[0].mxu0
    %1244 = vdwg.mxu0
    %v1246 = vsel %vm368, %v1242, 0
    %1248 = vmatprep.subr.mxu0 0.0
    %1249 = vmatpush1.msra.mxu0 %v123
    %1250 = vmatprep.subr.mxu0 0.0
    %1251 = vmatpush1.msra.mxu0 0.0
    %1252 = vmatprep.subr.mxu0 0.0
    %1253 = vmatpush1.msra.mxu0 0.0
    %1254 = vmatprep.subr.mxu0 0.0
    %1255 = vmatpush1.msra.mxu0 0.0
    %1256 = vmatprep.subr.mxu0 0.0
    %1257 = vmatpush1.msra.mxu0 0.0
    %1258 = vmatprep.subr.mxu0 0.0
    %1259 = vmatpush1.msra.mxu0 0.0
    %1260 = vmatprep.subr.mxu0 0.0
    %1261 = vmatpush1.msra.mxu0 0.0
    %1262 = vmatprep.subr.mxu0 0.0
    %1263 = vmatpush1.msra.mxu0 0.0
    %1264 = vmatprep.subr.mxu0 0.0
    %1265 = vmatpush1.msra.mxu0 0.0
    %1266 = vmatprep.subr.mxu0 0.0
    %1267 = vmatpush1.msra.mxu0 0.0
    %1268 = vmatprep.subr.mxu0 0.0
    %1269 = vmatpush1.msra.mxu0 0.0
    %1270 = vmatprep.subr.mxu0 0.0
    %1271 = vmatpush1.msra.mxu0 0.0
    %1272 = vmatprep.subr.mxu0 0.0
    %1273 = vmatpush1.msra.mxu0 0.0
    %1274 = vmatprep.subr.mxu0 0.0
    %1275 = vmatpush1.msra.mxu0 0.0
    %1276 = vmatprep.subr.mxu0 0.0
    %1277 = vmatpush1.msra.mxu0 0.0
    %1278 = vmatprep.subr.mxu0 0.0
    %1279 = vmatpush1.msra.mxu0 0.0
    %1280 = vmatprep.subr.mxu0 0.0
    %1281 = vmatpush1.msra.mxu0 0.0
    %1282 = vmatprep.subr.mxu0 0.0
    %1283 = vmatpush1.msra.mxu0 0.0
    %1284 = vmatprep.subr.mxu0 0.0
    %1285 = vmatpush1.msra.mxu0 0.0
    %1286 = vmatprep.subr.mxu0 0.0
    %1287 = vmatpush1.msra.mxu0 0.0
    %1288 = vmatprep.subr.mxu0 0.0
    %1289 = vmatpush1.msra.mxu0 0.0
    %1290 = vmatprep.subr.mxu0 0.0
    %1291 = vmatpush1.msra.mxu0 0.0
    %1292 = vmatprep.subr.mxu0 0.0
    %1293 = vmatpush1.msra.mxu0 0.0
    %1294 = vmatprep.subr.mxu0 0.0
    %1295 = vmatpush1.msra.mxu0 0.0
    %1296 = vmatprep.subr.mxu0 0.0
    %1297 = vmatpush1.msra.mxu0 0.0
    %1298 = vmatprep.subr.mxu0 0.0
    %1299 = vmatpush1.msra.mxu0 0.0
    %1300 = vmatprep.subr.mxu0 0.0
    %1301 = vmatpush1.msra.mxu0 0.0
    %1302 = vmatprep.subr.mxu0 0.0
    %1303 = vmatpush1.msra.mxu0 0.0
    %1304 = vmatprep.subr.mxu0 0.0
    %1305 = vmatpush1.msra.mxu0 0.0
    %1306 = vmatprep.subr.mxu0 0.0
    %1307 = vmatpush1.msra.mxu0 0.0
    %1308 = vmatprep.subr.mxu0 0.0
    %1309 = vmatpush1.msra.mxu0 0.0
    %1310 = vmatprep.subr.mxu0 0.0
    %1311 = vmatpush1.msra.mxu0 0.0
    %1312 = vmatprep.mubr.f32.mxu0 0.0
    %1313 = vmatmul.mubr.f32.gmra.mrb[0].mxu0 %v1246
    %v1314 = vpop.f32.mrb[0].mxu0
    %v1315 = vadd.f32 0.0, %v1314
    %v1316 = vpop.f32.mrb[0].mxu0
    %1317 = vdwg.mxu0
    %v1318 = vadd.f32 %v1079, %v1315
    %v1320 = vsel %vm368, %v207, 0
    %v1323 = vsel %vm368, %v286, 0
    %1325 = vmatprep.subr.mxu0 0.0
    %1326 = vmatpush1.xpose.msra.mxu0 %v1323
    %1327 = vmatprep.subr.mxu0 0.0
    %1328 = vmatpush1.xpose.msra.mxu0 0.0
    %1329 = vmatprep.subr.mxu0 0.0
    %1330 = vmatpush1.xpose.msra.mxu0 0.0
    %1331 = vmatprep.subr.mxu0 0.0
    %1332 = vmatpush1.xpose.msra.mxu0 0.0
    %1333 = vmatprep.subr.mxu0 0.0
    %1334 = vmatpush1.xpose.msra.mxu0 0.0
    %1335 = vmatprep.subr.mxu0 0.0
    %1336 = vmatpush1.xpose.msra.mxu0 0.0
    %1337 = vmatprep.subr.mxu0 0.0
    %1338 = vmatpush1.xpose.msra.mxu0 0.0
    %1339 = vmatprep.subr.mxu0 0.0
    %1340 = vmatpush1.xpose.msra.mxu0 0.0
    %1341 = vmatprep.subr.mxu0 0.0
    %1342 = vmatpush1.xpose.msra.mxu0 0.0
    %1343 = vmatprep.subr.mxu0 0.0
    %1344 = vmatpush1.xpose.msra.mxu0 0.0
    %1345 = vmatprep.subr.mxu0 0.0
    %1346 = vmatpush1.xpose.msra.mxu0 0.0
    %1347 = vmatprep.subr.mxu0 0.0
    %1348 = vmatpush1.xpose.msra.mxu0 0.0
    %1349 = vmatprep.subr.mxu0 0.0
    %1350 = vmatpush1.xpose.msra.mxu0 0.0
    %1351 = vmatprep.subr.mxu0 0.0
    %1352 = vmatpush1.xpose.msra.mxu0 0.0
    %1353 = vmatprep.subr.mxu0 0.0
    %1354 = vmatpush1.xpose.msra.mxu0 0.0
    %1355 = vmatprep.subr.mxu0 0.0
    %1356 = vmatpush1.xpose.msra.mxu0 0.0
    %1357 = vmatprep.subr.mxu0 0.0
    %1358 = vmatpush1.xpose.msra.mxu0 0.0
    %1359 = vmatprep.subr.mxu0 0.0
    %1360 = vmatpush1.xpose.msra.mxu0 0.0
    %1361 = vmatprep.subr.mxu0 0.0
    %1362 = vmatpush1.xpose.msra.mxu0 0.0
    %1363 = vmatprep.subr.mxu0 0.0
    %1364 = vmatpush1.xpose.msra.mxu0 0.0
    %1365 = vmatprep.subr.mxu0 0.0
    %1366 = vmatpush1.xpose.msra.mxu0 0.0
    %1367 = vmatprep.subr.mxu0 0.0
    %1368 = vmatpush1.xpose.msra.mxu0 0.0
    %1369 = vmatprep.subr.mxu0 0.0
    %1370 = vmatpush1.xpose.msra.mxu0 0.0
    %1371 = vmatprep.subr.mxu0 0.0
    %1372 = vmatpush1.xpose.msra.mxu0 0.0
    %1373 = vmatprep.subr.mxu0 0.0
    %1374 = vmatpush1.xpose.msra.mxu0 0.0
    %1375 = vmatprep.subr.mxu0 0.0
    %1376 = vmatpush1.xpose.msra.mxu0 0.0
    %1377 = vmatprep.subr.mxu0 0.0
    %1378 = vmatpush1.xpose.msra.mxu0 0.0
    %1379 = vmatprep.subr.mxu0 0.0
    %1380 = vmatpush1.xpose.msra.mxu0 0.0
    %1381 = vmatprep.subr.mxu0 0.0
    %1382 = vmatpush1.xpose.msra.mxu0 0.0
    %1383 = vmatprep.subr.mxu0 0.0
    %1384 = vmatpush1.xpose.msra.mxu0 0.0
    %1385 = vmatprep.subr.mxu0 0.0
    %1386 = vmatpush1.xpose.msra.mxu0 0.0
    %1387 = vmatprep.subr.mxu0 0.0
    %1388 = vmatpush1.xpose.msra.mxu0 0.0
    %1389 = vmatprep.mubr.f32.mxu0 0.0
    %1390 = vmatmul.mubr.f32.gmra.mrb[0].mxu0 %v1320
    %v1391 = vpop.f32.mrb[0].mxu0
    %v1392 = vadd.f32 %v102, %v1391
    %v1393 = vpop.f32.mrb[0].mxu0
    %1394 = vdwg.mxu0
    %v1395 = vsel %vm368, %v1392, -inf
    %1396 = vmax.xlane.f32.xlu0 %v1395
    %v1397 = vpop.xlane.xlu0 %1396
    %v1398 = vsub.f32 %v1392, %v1397
    %v1399 = vmul.f32 %v1398, 1.442695
    %v1400 = vpow.pop %v1399
    %v1401 = vsel %vm368, %v1400, 0.0
    %1402 = vadd.xlane.f32.xlu0 %v1401
    %v1403 = vpop.xlane.xlu0 %1402
    %v1404 = vrcp.pop %v1403
    %v1405 = vmul.f32 %v1400, %v1404
    %v1407 = vsel %vm368, %v1405, 0
    %1409 = vmatprep.subr.mxu0 0.0
    %1410 = vmatpush1.msra.mxu0 %v365
    %1411 = vmatprep.subr.mxu0 0.0
    %1412 = vmatpush1.msra.mxu0 0.0
    %1413 = vmatprep.subr.mxu0 0.0
    %1414 = vmatpush1.msra.mxu0 0.0
    %1415 = vmatprep.subr.mxu0 0.0
    %1416 = vmatpush1.msra.mxu0 0.0
    %1417 = vmatprep.subr.mxu0 0.0
    %1418 = vmatpush1.msra.mxu0 0.0
    %1419 = vmatprep.subr.mxu0 0.0
    %1420 = vmatpush1.msra.mxu0 0.0
    %1421 = vmatprep.subr.mxu0 0.0
    %1422 = vmatpush1.msra.mxu0 0.0
    %1423 = vmatprep.subr.mxu0 0.0
    %1424 = vmatpush1.msra.mxu0 0.0
    %1425 = vmatprep.subr.mxu0 0.0
    %1426 = vmatpush1.msra.mxu0 0.0
    %1427 = vmatprep.subr.mxu0 0.0
    %1428 = vmatpush1.msra.mxu0 0.0
    %1429 = vmatprep.subr.mxu0 0.0
    %1430 = vmatpush1.msra.mxu0 0.0
    %1431 = vmatprep.subr.mxu0 0.0
    %1432 = vmatpush1.msra.mxu0 0.0
    %1433 = vmatprep.subr.mxu0 0.0
    %1434 = vmatpush1.msra.mxu0 0.0
    %1435 = vmatprep.subr.mxu0 0.0
    %1436 = vmatpush1.msra.mxu0 0.0
    %1437 = vmatprep.subr.mxu0 0.0
    %1438 = vmatpush1.msra.mxu0 0.0
    %1439 = vmatprep.subr.mxu0 0.0
    %1440 = vmatpush1.msra.mxu0 0.0
    %1441 = vmatprep.subr.mxu0 0.0
    %1442 = vmatpush1.msra.mxu0 0.0
    %1443 = vmatprep.subr.mxu0 0.0
    %1444 = vmatpush1.msra.mxu0 0.0
    %1445 = vmatprep.subr.mxu0 0.0
    %1446 = vmatpush1.msra.mxu0 0.0
    %1447 = vmatprep.subr.mxu0 0.0
    %1448 = vmatpush1.msra.mxu0 0.0
    %1449 = vmatprep.subr.mxu0 0.0
    %1450 = vmatpush1.msra.mxu0 0.0
    %1451 = vmatprep.subr.mxu0 0.0
    %1452 = vmatpush1.msra.mxu0 0.0
    %1453 = vmatprep.subr.mxu0 0.0
    %1454 = vmatpush1.msra.mxu0 0.0
    %1455 = vmatprep.subr.mxu0 0.0
    %1456 = vmatpush1.msra.mxu0 0.0
    %1457 = vmatprep.subr.mxu0 0.0
    %1458 = vmatpush1.msra.mxu0 0.0
    %1459 = vmatprep.subr.mxu0 0.0
    %1460 = vmatpush1.msra.mxu0 0.0
    %1461 = vmatprep.subr.mxu0 0.0
    %1462 = vmatpush1.msra.mxu0 0.0
    %1463 = vmatprep.subr.mxu0 0.0
    %1464 = vmatpush1.msra.mxu0 0.0
    %1465 = vmatprep.subr.mxu0 0.0
    %1466 = vmatpush1.msra.mxu0 0.0
    %1467 = vmatprep.subr.mxu0 0.0
    %1468 = vmatpush1.msra.mxu0 0.0
    %1469 = vmatprep.subr.mxu0 0.0
    %1470 = vmatpush1.msra.mxu0 0.0
    %1471 = vmatprep.subr.mxu0 0.0
    %1472 = vmatpush1.msra.mxu0 0.0
    %1473 = vmatprep.mubr.f32.mxu0 0.0
    %1474 = vmatmul.mubr.f32.gmra.mrb[0].mxu0 %v1407
    %v1475 = vpop.f32.mrb[0].mxu0
    %v1476 = vadd.f32 0.0, %v1475
    %v1477 = vpop.f32.mrb[0].mxu0
    %1478 = vdwg.mxu0
    %1479 = vrot.lane.b32.xlu0 %v207, 120
    %v1480 = vpop.permute.xlu0 %1479
    %1481 = vrot.lane.b32.xlu0 %v286, 120
    %v1482 = vpop.permute.xlu0 %1481
    %v1483 = vsel %vm368, %v1480, 0
    %v1485 = vsel %vm368, %v1482, 0
    %1487 = vmatprep.subr.mxu0 0.0
    %1488 = vmatpush1.xpose.msra.mxu0 %v1485
    %1489 = vmatprep.subr.mxu0 0.0
    %1490 = vmatpush1.xpose.msra.mxu0 0.0
    %1491 = vmatprep.subr.mxu0 0.0
    %1492 = vmatpush1.xpose.msra.mxu0 0.0
    %1493 = vmatprep.subr.mxu0 0.0
    %1494 = vmatpush1.xpose.msra.mxu0 0.0
    %1495 = vmatprep.subr.mxu0 0.0
    %1496 = vmatpush1.xpose.msra.mxu0 0.0
    %1497 = vmatprep.subr.mxu0 0.0
    %1498 = vmatpush1.xpose.msra.mxu0 0.0
    %1499 = vmatprep.subr.mxu0 0.0
    %1500 = vmatpush1.xpose.msra.mxu0 0.0
    %1501 = vmatprep.subr.mxu0 0.0
    %1502 = vmatpush1.xpose.msra.mxu0 0.0
    %1503 = vmatprep.subr.mxu0 0.0
    %1504 = vmatpush1.xpose.msra.mxu0 0.0
    %1505 = vmatprep.subr.mxu0 0.0
    %1506 = vmatpush1.xpose.msra.mxu0 0.0
    %1507 = vmatprep.subr.mxu0 0.0
    %1508 = vmatpush1.xpose.msra.mxu0 0.0
    %1509 = vmatprep.subr.mxu0 0.0
    %1510 = vmatpush1.xpose.msra.mxu0 0.0
    %1511 = vmatprep.subr.mxu0 0.0
    %1512 = vmatpush1.xpose.msra.mxu0 0.0
    %1513 = vmatprep.subr.mxu0 0.0
    %1514 = vmatpush1.xpose.msra.mxu0 0.0
    %1515 = vmatprep.subr.mxu0 0.0
    %1516 = vmatpush1.xpose.msra.mxu0 0.0
    %1517 = vmatprep.subr.mxu0 0.0
    %1518 = vmatpush1.xpose.msra.mxu0 0.0
    %1519 = vmatprep.subr.mxu0 0.0
    %1520 = vmatpush1.xpose.msra.mxu0 0.0
    %1521 = vmatprep.subr.mxu0 0.0
    %1522 = vmatpush1.xpose.msra.mxu0 0.0
    %1523 = vmatprep.subr.mxu0 0.0
    %1524 = vmatpush1.xpose.msra.mxu0 0.0
    %1525 = vmatprep.subr.mxu0 0.0
    %1526 = vmatpush1.xpose.msra.mxu0 0.0
    %1527 = vmatprep.subr.mxu0 0.0
    %1528 = vmatpush1.xpose.msra.mxu0 0.0
    %1529 = vmatprep.subr.mxu0 0.0
    %1530 = vmatpush1.xpose.msra.mxu0 0.0
    %1531 = vmatprep.subr.mxu0 0.0
    %1532 = vmatpush1.xpose.msra.mxu0 0.0
    %1533 = vmatprep.subr.mxu0 0.0
    %1534 = vmatpush1.xpose.msra.mxu0 0.0
    %1535 = vmatprep.subr.mxu0 0.0
    %1536 = vmatpush1.xpose.msra.mxu0 0.0
    %1537 = vmatprep.subr.mxu0 0.0
    %1538 = vmatpush1.xpose.msra.mxu0 0.0
    %1539 = vmatprep.subr.mxu0 0.0
    %1540 = vmatpush1.xpose.msra.mxu0 0.0
    %1541 = vmatprep.subr.mxu0 0.0
    %1542 = vmatpush1.xpose.msra.mxu0 0.0
    %1543 = vmatprep.subr.mxu0 0.0
    %1544 = vmatpush1.xpose.msra.mxu0 0.0
    %1545 = vmatprep.subr.mxu0 0.0
    %1546 = vmatpush1.xpose.msra.mxu0 0.0
    %1547 = vmatprep.subr.mxu0 0.0
    %1548 = vmatpush1.xpose.msra.mxu0 0.0
    %1549 = vmatprep.subr.mxu0 0.0
    %1550 = vmatpush1.xpose.msra.mxu0 0.0
    %1551 = vmatprep.mubr.f32.mxu0 0.0
    %1552 = vmatmul.mubr.f32.gmra.mrb[0].mxu0 %v1483
    %v1553 = vpop.f32.mrb[0].mxu0
    %v1554 = vadd.f32 %v102, %v1553
    %v1555 = vpop.f32.mrb[0].mxu0
    %1556 = vdwg.mxu0
    %v1557 = vsel %vm368, %v1554, -inf
    %1558 = vmax.xlane.f32.xlu0 %v1557
    %v1559 = vpop.xlane.xlu0 %1558
    %v1560 = vsub.f32 %v1554, %v1559
    %v1561 = vmul.f32 %v1560, 1.442695
    %v1562 = vpow.pop %v1561
    %v1563 = vsel %vm368, %v1562, 0.0
    %1564 = vadd.xlane.f32.xlu0 %v1563
    %v1565 = vpop.xlane.xlu0 %1564
    %v1566 = vrcp.pop %v1565
    %v1567 = vmul.f32 %v1562, %v1566
    %1569 = vrot.lane.b32.xlu0 %v365, 120
    %v1570 = vpop.permute.xlu0 %1569
    %v1573 = vsel %vm368, %v1567, 0
    %1575 = vmatprep.subr.mxu0 0.0
    %1576 = vmatpush1.msra.mxu0 %v1570
    %1577 = vmatprep.subr.mxu0 0.0
    %1578 = vmatpush1.msra.mxu0 0.0
    %1579 = vmatprep.subr.mxu0 0.0
    %1580 = vmatpush1.msra.mxu0 0.0
    %1581 = vmatprep.subr.mxu0 0.0
    %1582 = vmatpush1.msra.mxu0 0.0
    %1583 = vmatprep.subr.mxu0 0.0
    %1584 = vmatpush1.msra.mxu0 0.0
    %1585 = vmatprep.subr.mxu0 0.0
    %1586 = vmatpush1.msra.mxu0 0.0
    %1587 = vmatprep.subr.mxu0 0.0
    %1588 = vmatpush1.msra.mxu0 0.0
    %1589 = vmatprep.subr.mxu0 0.0
    %1590 = vmatpush1.msra.mxu0 0.0
    %1591 = vmatprep.subr.mxu0 0.0
    %1592 = vmatpush1.msra.mxu0 0.0
    %1593 = vmatprep.subr.mxu0 0.0
    %1594 = vmatpush1.msra.mxu0 0.0
    %1595 = vmatprep.subr.mxu0 0.0
    %1596 = vmatpush1.msra.mxu0 0.0
    %1597 = vmatprep.subr.mxu0 0.0
    %1598 = vmatpush1.msra.mxu0 0.0
    %1599 = vmatprep.subr.mxu0 0.0
    %1600 = vmatpush1.msra.mxu0 0.0
    %1601 = vmatprep.subr.mxu0 0.0
    %1602 = vmatpush1.msra.mxu0 0.0
    %1603 = vmatprep.subr.mxu0 0.0
    %1604 = vmatpush1.msra.mxu0 0.0
    %1605 = vmatprep.subr.mxu0 0.0
    %1606 = vmatpush1.msra.mxu0 0.0
    %1607 = vmatprep.subr.mxu0 0.0
    %1608 = vmatpush1.msra.mxu0 0.0
    %1609 = vmatprep.subr.mxu0 0.0
    %1610 = vmatpush1.msra.mxu0 0.0
    %1611 = vmatprep.subr.mxu0 0.0
    %1612 = vmatpush1.msra.mxu0 0.0
    %1613 = vmatprep.subr.mxu0 0.0
    %1614 = vmatpush1.msra.mxu0 0.0
    %1615 = vmatprep.subr.mxu0 0.0
    %1616 = vmatpush1.msra.mxu0 0.0
    %1617 = vmatprep.subr.mxu0 0.0
    %1618 = vmatpush1.msra.mxu0 0.0
    %1619 = vmatprep.subr.mxu0 0.0
    %1620 = vmatpush1.msra.mxu0 0.0
    %1621 = vmatprep.subr.mxu0 0.0
    %1622 = vmatpush1.msra.mxu0 0.0
    %1623 = vmatprep.subr.mxu0 0.0
    %1624 = vmatpush1.msra.mxu0 0.0
    %1625 = vmatprep.subr.mxu0 0.0
    %1626 = vmatpush1.msra.mxu0 0.0
    %1627 = vmatprep.subr.mxu0 0.0
    %1628 = vmatpush1.msra.mxu0 0.0
    %1629 = vmatprep.subr.mxu0 0.0
    %1630 = vmatpush1.msra.mxu0 0.0
    %1631 = vmatprep.subr.mxu0 0.0
    %1632 = vmatpush1.msra.mxu0 0.0
    %1633 = vmatprep.subr.mxu0 0.0
    %1634 = vmatpush1.msra.mxu0 0.0
    %1635 = vmatprep.subr.mxu0 0.0
    %1636 = vmatpush1.msra.mxu0 0.0
    %1637 = vmatprep.subr.mxu0 0.0
    %1638 = vmatpush1.msra.mxu0 0.0
    %1639 = vmatprep.mubr.f32.mxu0 0.0
    %1640 = vmatmul.mubr.f32.gmra.mrb[0].mxu0 %v1573
    %v1641 = vpop.f32.mrb[0].mxu0
    %v1642 = vadd.f32 0.0, %v1641
    %v1643 = vpop.f32.mrb[0].mxu0
    %1644 = vdwg.mxu0
    %v1646 = vsel %vm368, %v1642, 0
    %1648 = vmatprep.subr.mxu0 0.0
    %1649 = vmatpush1.msra.mxu0 %v121
    %1650 = vmatprep.subr.mxu0 0.0
    %1651 = vmatpush1.msra.mxu0 0.0
    %1652 = vmatprep.subr.mxu0 0.0
    %1653 = vmatpush1.msra.mxu0 0.0
    %1654 = vmatprep.subr.mxu0 0.0
    %1655 = vmatpush1.msra.mxu0 0.0
    %1656 = vmatprep.subr.mxu0 0.0
    %1657 = vmatpush1.msra.mxu0 0.0
    %1658 = vmatprep.subr.mxu0 0.0
    %1659 = vmatpush1.msra.mxu0 0.0
    %1660 = vmatprep.subr.mxu0 0.0
    %1661 = vmatpush1.msra.mxu0 0.0
    %1662 = vmatprep.subr.mxu0 0.0
    %1663 = vmatpush1.msra.mxu0 0.0
    %1664 = vmatprep.subr.mxu0 0.0
    %1665 = vmatpush1.msra.mxu0 0.0
    %1666 = vmatprep.subr.mxu0 0.0
    %1667 = vmatpush1.msra.mxu0 0.0
    %1668 = vmatprep.subr.mxu0 0.0
    %1669 = vmatpush1.msra.mxu0 0.0
    %1670 = vmatprep.subr.mxu0 0.0
    %1671 = vmatpush1.msra.mxu0 0.0
    %1672 = vmatprep.subr.mxu0 0.0
    %1673 = vmatpush1.msra.mxu0 0.0
    %1674 = vmatprep.subr.mxu0 0.0
    %1675 = vmatpush1.msra.mxu0 0.0
    %1676 = vmatprep.subr.mxu0 0.0
    %1677 = vmatpush1.msra.mxu0 0.0
    %1678 = vmatprep.subr.mxu0 0.0
    %1679 = vmatpush1.msra.mxu0 0.0
    %1680 = vmatprep.subr.mxu0 0.0
    %1681 = vmatpush1.msra.mxu0 0.0
    %1682 = vmatprep.subr.mxu0 0.0
    %1683 = vmatpush1.msra.mxu0 0.0
    %1684 = vmatprep.subr.mxu0 0.0
    %1685 = vmatpush1.msra.mxu0 0.0
    %1686 = vmatprep.subr.mxu0 0.0
    %1687 = vmatpush1.msra.mxu0 0.0
    %1688 = vmatprep.subr.mxu0 0.0
    %1689 = vmatpush1.msra.mxu0 0.0
    %1690 = vmatprep.subr.mxu0 0.0
    %1691 = vmatpush1.msra.mxu0 0.0
    %1692 = vmatprep.subr.mxu0 0.0
    %1693 = vmatpush1.msra.mxu0 0.0
    %1694 = vmatprep.subr.mxu0 0.0
    %1695 = vmatpush1.msra.mxu0 0.0
    %1696 = vmatprep.subr.mxu0 0.0
    %1697 = vmatpush1.msra.mxu0 0.0
    %1698 = vmatprep.subr.mxu0 0.0
    %1699 = vmatpush1.msra.mxu0 0.0
    %1700 = vmatprep.subr.mxu0 0.0
    %1701 = vmatpush1.msra.mxu0 0.0
    %1702 = vmatprep.subr.mxu0 0.0
    %1703 = vmatpush1.msra.mxu0 0.0
    %1704 = vmatprep.subr.mxu0 0.0
    %1705 = vmatpush1.msra.mxu0 0.0
    %1706 = vmatprep.subr.mxu0 0.0
    %1707 = vmatpush1.msra.mxu0 0.0
    %1708 = vmatprep.subr.mxu0 0.0
    %1709 = vmatpush1.msra.mxu0 0.0
    %1710 = vmatprep.subr.mxu0 0.0
    %1711 = vmatpush1.msra.mxu0 0.0
    %1712 = vmatprep.mubr.f32.mxu0 0.0
    %1713 = vmatmul.mubr.f32.gmra.mrb[0].mxu0 %v1646
    %v1714 = vpop.f32.mrb[0].mxu0
    %v1715 = vadd.f32 0.0, %v1714
    %v1716 = vpop.f32.mrb[0].mxu0
    %1717 = vdwg.mxu0
    %v1719 = vsel %vm368, %v1476, 0
    %1721 = vmatprep.subr.mxu0 0.0
    %1722 = vmatpush1.msra.mxu0 %v120
    %1723 = vmatprep.subr.mxu0 0.0
    %1724 = vmatpush1.msra.mxu0 0.0
    %1725 = vmatprep.subr.mxu0 0.0
    %1726 = vmatpush1.msra.mxu0 0.0
    %1727 = vmatprep.subr.mxu0 0.0
    %1728 = vmatpush1.msra.mxu0 0.0
    %1729 = vmatprep.subr.mxu0 0.0
    %1730 = vmatpush1.msra.mxu0 0.0
    %1731 = vmatprep.subr.mxu0 0.0
    %1732 = vmatpush1.msra.mxu0 0.0
    %1733 = vmatprep.subr.mxu0 0.0
    %1734 = vmatpush1.msra.mxu0 0.0
    %1735 = vmatprep.subr.mxu0 0.0
    %1736 = vmatpush1.msra.mxu0 0.0
    %1737 = vmatprep.subr.mxu0 0.0
    %1738 = vmatpush1.msra.mxu0 0.0
    %1739 = vmatprep.subr.mxu0 0.0
    %1740 = vmatpush1.msra.mxu0 0.0
    %1741 = vmatprep.subr.mxu0 0.0
    %1742 = vmatpush1.msra.mxu0 0.0
    %1743 = vmatprep.subr.mxu0 0.0
    %1744 = vmatpush1.msra.mxu0 0.0
    %1745 = vmatprep.subr.mxu0 0.0
    %1746 = vmatpush1.msra.mxu0 0.0
    %1747 = vmatprep.subr.mxu0 0.0
    %1748 = vmatpush1.msra.mxu0 0.0
    %1749 = vmatprep.subr.mxu0 0.0
    %1750 = vmatpush1.msra.mxu0 0.0
    %1751 = vmatprep.subr.mxu0 0.0
    %1752 = vmatpush1.msra.mxu0 0.0
    %1753 = vmatprep.subr.mxu0 0.0
    %1754 = vmatpush1.msra.mxu0 0.0
    %1755 = vmatprep.subr.mxu0 0.0
    %1756 = vmatpush1.msra.mxu0 0.0
    %1757 = vmatprep.subr.mxu0 0.0
    %1758 = vmatpush1.msra.mxu0 0.0
    %1759 = vmatprep.subr.mxu0 0.0
    %1760 = vmatpush1.msra.mxu0 0.0
    %1761 = vmatprep.subr.mxu0 0.0
    %1762 = vmatpush1.msra.mxu0 0.0
    %1763 = vmatprep.subr.mxu0 0.0
    %1764 = vmatpush1.msra.mxu0 0.0
    %1765 = vmatprep.subr.mxu0 0.0
    %1766 = vmatpush1.msra.mxu0 0.0
    %1767 = vmatprep.subr.mxu0 0.0
    %1768 = vmatpush1.msra.mxu0 0.0
    %1769 = vmatprep.subr.mxu0 0.0
    %1770 = vmatpush1.msra.mxu0 0.0
    %1771 = vmatprep.subr.mxu0 0.0
    %1772 = vmatpush1.msra.mxu0 0.0
    %1773 = vmatprep.subr.mxu0 0.0
    %1774 = vmatpush1.msra.mxu0 0.0
    %1775 = vmatprep.subr.mxu0 0.0
    %1776 = vmatpush1.msra.mxu0 0.0
    %1777 = vmatprep.subr.mxu0 0.0
    %1778 = vmatpush1.msra.mxu0 0.0
    %1779 = vmatprep.subr.mxu0 0.0
    %1780 = vmatpush1.msra.mxu0 0.0
    %1781 = vmatprep.subr.mxu0 0.0
    %1782 = vmatpush1.msra.mxu0 0.0
    %1783 = vmatprep.subr.mxu0 0.0
    %1784 = vmatpush1.msra.mxu0 0.0
    %1785 = vmatprep.mubr.f32.mxu0 0.0
    %1786 = vmatmul.mubr.f32.gmra.mrb[0].mxu0 %v1719
    %v1787 = vpop.f32.mrb[0].mxu0
    %v1788 = vadd.f32 %v1715, %v1787
    %v1789 = vpop.f32.mrb[0].mxu0
    %1790 = vdwg.mxu0
    %1791 = vrot.lane.b32.xlu0 %v207, 112
    %v1792 = vpop.permute.xlu0 %1791
    %1793 = vrot.lane.b32.xlu0 %v286, 112
    %v1794 = vpop.permute.xlu0 %1793
    %v1795 = vsel %vm368, %v1792, 0
    %v1797 = vsel %vm368, %v1794, 0
    %1799 = vmatprep.subr.mxu0 0.0
    %1800 = vmatpush1.xpose.msra.mxu0 %v1797
    %1801 = vmatprep.subr.mxu0 0.0
    %1802 = vmatpush1.xpose.msra.mxu0 0.0
    %1803 = vmatprep.subr.mxu0 0.0
    %1804 = vmatpush1.xpose.msra.mxu0 0.0
    %1805 = vmatprep.subr.mxu0 0.0
    %1806 = vmatpush1.xpose.msra.mxu0 0.0
    %1807 = vmatprep.subr.mxu0 0.0
    %1808 = vmatpush1.xpose.msra.mxu0 0.0
    %1809 = vmatprep.subr.mxu0 0.0
    %1810 = vmatpush1.xpose.msra.mxu0 0.0
    %1811 = vmatprep.subr.mxu0 0.0
    %1812 = vmatpush1.xpose.msra.mxu0 0.0
    %1813 = vmatprep.subr.mxu0 0.0
    %1814 = vmatpush1.xpose.msra.mxu0 0.0
    %1815 = vmatprep.subr.mxu0 0.0
    %1816 = vmatpush1.xpose.msra.mxu0 0.0
    %1817 = vmatprep.subr.mxu0 0.0
    %1818 = vmatpush1.xpose.msra.mxu0 0.0
    %1819 = vmatprep.subr.mxu0 0.0
    %1820 = vmatpush1.xpose.msra.mxu0 0.0
    %1821 = vmatprep.subr.mxu0 0.0
    %1822 = vmatpush1.xpose.msra.mxu0 0.0
    %1823 = vmatprep.subr.mxu0 0.0
    %1824 = vmatpush1.xpose.msra.mxu0 0.0
    %1825 = vmatprep.subr.mxu0 0.0
    %1826 = vmatpush1.xpose.msra.mxu0 0.0
    %1827 = vmatprep.subr.mxu0 0.0
    %1828 = vmatpush1.xpose.msra.mxu0 0.0
    %1829 = vmatprep.subr.mxu0 0.0
    %1830 = vmatpush1.xpose.msra.mxu0 0.0
    %1831 = vmatprep.subr.mxu0 0.0
    %1832 = vmatpush1.xpose.msra.mxu0 0.0
    %1833 = vmatprep.subr.mxu0 0.0
    %1834 = vmatpush1.xpose.msra.mxu0 0.0
    %1835 = vmatprep.subr.mxu0 0.0
    %1836 = vmatpush1.xpose.msra.mxu0 0.0
    %1837 = vmatprep.subr.mxu0 0.0
    %1838 = vmatpush1.xpose.msra.mxu0 0.0
    %1839 = vmatprep.subr.mxu0 0.0
    %1840 = vmatpush1.xpose.msra.mxu0 0.0
    %1841 = vmatprep.subr.mxu0 0.0
    %1842 = vmatpush1.xpose.msra.mxu0 0.0
    %1843 = vmatprep.subr.mxu0 0.0
    %1844 = vmatpush1.xpose.msra.mxu0 0.0
    %1845 = vmatprep.subr.mxu0 0.0
    %1846 = vmatpush1.xpose.msra.mxu0 0.0
    %1847 = vmatprep.subr.mxu0 0.0
    %1848 = vmatpush1.xpose.msra.mxu0 0.0
    %1849 = vmatprep.subr.mxu0 0.0
    %1850 = vmatpush1.xpose.msra.mxu0 0.0
    %1851 = vmatprep.subr.mxu0 0.0
    %1852 = vmatpush1.xpose.msra.mxu0 0.0
    %1853 = vmatprep.subr.mxu0 0.0
    %1854 = vmatpush1.xpose.msra.mxu0 0.0
    %1855 = vmatprep.subr.mxu0 0.0
    %1856 = vmatpush1.xpose.msra.mxu0 0.0
    %1857 = vmatprep.subr.mxu0 0.0
    %1858 = vmatpush1.xpose.msra.mxu0 0.0
    %1859 = vmatprep.subr.mxu0 0.0
    %1860 = vmatpush1.xpose.msra.mxu0 0.0
    %1861 = vmatprep.subr.mxu0 0.0
    %1862 = vmatpush1.xpose.msra.mxu0 0.0
    %1863 = vmatprep.mubr.f32.mxu0 0.0
    %1864 = vmatmul.mubr.f32.gmra.mrb[0].mxu0 %v1795
    %v1865 = vpop.f32.mrb[0].mxu0
    %v1866 = vadd.f32 %v102, %v1865
    %v1867 = vpop.f32.mrb[0].mxu0
    %1868 = vdwg.mxu0
    %v1869 = vsel %vm368, %v1866, -inf
    %1870 = vmax.xlane.f32.xlu0 %v1869
    %v1871 = vpop.xlane.xlu0 %1870
    %v1872 = vsub.f32 %v1866, %v1871
    %v1873 = vmul.f32 %v1872, 1.442695
    %v1874 = vpow.pop %v1873
    %v1875 = vsel %vm368, %v1874, 0.0
    %1876 = vadd.xlane.f32.xlu0 %v1875
    %v1877 = vpop.xlane.xlu0 %1876
    %v1878 = vrcp.pop %v1877
    %v1879 = vmul.f32 %v1874, %v1878
    %1880 = vrot.lane.b32.xlu0 %v365, 112
    %v1881 = vpop.permute.xlu0 %1880
    %v1884 = vsel %vm368, %v1879, 0
    %1886 = vmatprep.subr.mxu0 0.0
    %1887 = vmatpush1.msra.mxu0 %v1881
    %1888 = vmatprep.subr.mxu0 0.0
    %1889 = vmatpush1.msra.mxu0 0.0
    %1890 = vmatprep.subr.mxu0 0.0
    %1891 = vmatpush1.msra.mxu0 0.0
    %1892 = vmatprep.subr.mxu0 0.0
    %1893 = vmatpush1.msra.mxu0 0.0
    %1894 = vmatprep.subr.mxu0 0.0
    %1895 = vmatpush1.msra.mxu0 0.0
    %1896 = vmatprep.subr.mxu0 0.0
    %1897 = vmatpush1.msra.mxu0 0.0
    %1898 = vmatprep.subr.mxu0 0.0
    %1899 = vmatpush1.msra.mxu0 0.0
    %1900 = vmatprep.subr.mxu0 0.0
    %1901 = vmatpush1.msra.mxu0 0.0
    %1902 = vmatprep.subr.mxu0 0.0
    %1903 = vmatpush1.msra.mxu0 0.0
    %1904 = vmatprep.subr.mxu0 0.0
    %1905 = vmatpush1.msra.mxu0 0.0
    %1906 = vmatprep.subr.mxu0 0.0
    %1907 = vmatpush1.msra.mxu0 0.0
    %1908 = vmatprep.subr.mxu0 0.0
    %1909 = vmatpush1.msra.mxu0 0.0
    %1910 = vmatprep.subr.mxu0 0.0
    %1911 = vmatpush1.msra.mxu0 0.0
    %1912 = vmatprep.subr.mxu0 0.0
    %1913 = vmatpush1.msra.mxu0 0.0
    %1914 = vmatprep.subr.mxu0 0.0
    %1915 = vmatpush1.msra.mxu0 0.0
    %1916 = vmatprep.subr.mxu0 0.0
    %1917 = vmatpush1.msra.mxu0 0.0
    %1918 = vmatprep.subr.mxu0 0.0
    %1919 = vmatpush1.msra.mxu0 0.0
    %1920 = vmatprep.subr.mxu0 0.0
    %1921 = vmatpush1.msra.mxu0 0.0
    %1922 = vmatprep.subr.mxu0 0.0
    %1923 = vmatpush1.msra.mxu0 0.0
    %1924 = vmatprep.subr.mxu0 0.0
    %1925 = vmatpush1.msra.mxu0 0.0
    %1926 = vmatprep.subr.mxu0 0.0
    %1927 = vmatpush1.msra.mxu0 0.0
    %1928 = vmatprep.subr.mxu0 0.0
    %1929 = vmatpush1.msra.mxu0 0.0
    %1930 = vmatprep.subr.mxu0 0.0
    %1931 = vmatpush1.msra.mxu0 0.0
    %1932 = vmatprep.subr.mxu0 0.0
    %1933 = vmatpush1.msra.mxu0 0.0
    %1934 = vmatprep.subr.mxu0 0.0
    %1935 = vmatpush1.msra.mxu0 0.0
    %1936 = vmatprep.subr.mxu0 0.0
    %1937 = vmatpush1.msra.mxu0 0.0
    %1938 = vmatprep.subr.mxu0 0.0
    %1939 = vmatpush1.msra.mxu0 0.0
    %1940 = vmatprep.subr.mxu0 0.0
    %1941 = vmatpush1.msra.mxu0 0.0
    %1942 = vmatprep.subr.mxu0 0.0
    %1943 = vmatpush1.msra.mxu0 0.0
    %1944 = vmatprep.subr.mxu0 0.0
    %1945 = vmatpush1.msra.mxu0 0.0
    %1946 = vmatprep.subr.mxu0 0.0
    %1947 = vmatpush1.msra.mxu0 0.0
    %1948 = vmatprep.subr.mxu0 0.0
    %1949 = vmatpush1.msra.mxu0 0.0
    %1950 = vmatprep.mubr.f32.mxu0 0.0
    %1951 = vmatmul.mubr.f32.gmra.mrb[0].mxu0 %v1884
    %v1952 = vpop.f32.mrb[0].mxu0
    %v1953 = vadd.f32 0.0, %v1952
    %v1954 = vpop.f32.mrb[0].mxu0
    %1955 = vdwg.mxu0
    %v1957 = vsel %vm368, %v1953, 0
    %1959 = vmatprep.subr.mxu0 0.0
    %1960 = vmatpush1.msra.mxu0 %v122
    %1961 = vmatprep.subr.mxu0 0.0
    %1962 = vmatpush1.msra.mxu0 0.0
    %1963 = vmatprep.subr.mxu0 0.0
    %1964 = vmatpush1.msra.mxu0 0.0
    %1965 = vmatprep.subr.mxu0 0.0
    %1966 = vmatpush1.msra.mxu0 0.0
    %1967 = vmatprep.subr.mxu0 0.0
    %1968 = vmatpush1.msra.mxu0 0.0
    %1969 = vmatprep.subr.mxu0 0.0
    %1970 = vmatpush1.msra.mxu0 0.0
    %1971 = vmatprep.subr.mxu0 0.0
    %1972 = vmatpush1.msra.mxu0 0.0
    %1973 = vmatprep.subr.mxu0 0.0
    %1974 = vmatpush1.msra.mxu0 0.0
    %1975 = vmatprep.subr.mxu0 0.0
    %1976 = vmatpush1.msra.mxu0 0.0
    %1977 = vmatprep.subr.mxu0 0.0
    %1978 = vmatpush1.msra.mxu0 0.0
    %1979 = vmatprep.subr.mxu0 0.0
    %1980 = vmatpush1.msra.mxu0 0.0
    %1981 = vmatprep.subr.mxu0 0.0
    %1982 = vmatpush1.msra.mxu0 0.0
    %1983 = vmatprep.subr.mxu0 0.0
    %1984 = vmatpush1.msra.mxu0 0.0
    %1985 = vmatprep.subr.mxu0 0.0
    %1986 = vmatpush1.msra.mxu0 0.0
    %1987 = vmatprep.subr.mxu0 0.0
    %1988 = vmatpush1.msra.mxu0 0.0
    %1989 = vmatprep.subr.mxu0 0.0
    %1990 = vmatpush1.msra.mxu0 0.0
    %1991 = vmatprep.subr.mxu0 0.0
    %1992 = vmatpush1.msra.mxu0 0.0
    %1993 = vmatprep.subr.mxu0 0.0
    %1994 = vmatpush1.msra.mxu0 0.0
    %1995 = vmatprep.subr.mxu0 0.0
    %1996 = vmatpush1.msra.mxu0 0.0
    %1997 = vmatprep.subr.mxu0 0.0
    %1998 = vmatpush1.msra.mxu0 0.0
    %1999 = vmatprep.subr.mxu0 0.0
    %2000 = vmatpush1.msra.mxu0 0.0
    %2001 = vmatprep.subr.mxu0 0.0
    %2002 = vmatpush1.msra.mxu0 0.0
    %2003 = vmatprep.subr.mxu0 0.0
    %2004 = vmatpush1.msra.mxu0 0.0
    %2005 = vmatprep.subr.mxu0 0.0
    %2006 = vmatpush1.msra.mxu0 0.0
    %2007 = vmatprep.subr.mxu0 0.0
    %2008 = vmatpush1.msra.mxu0 0.0
    %2009 = vmatprep.subr.mxu0 0.0
    %2010 = vmatpush1.msra.mxu0 0.0
    %2011 = vmatprep.subr.mxu0 0.0
    %2012 = vmatpush1.msra.mxu0 0.0
    %2013 = vmatprep.subr.mxu0 0.0
    %2014 = vmatpush1.msra.mxu0 0.0
    %2015 = vmatprep.subr.mxu0 0.0
    %2016 = vmatpush1.msra.mxu0 0.0
    %2017 = vmatprep.subr.mxu0 0.0
    %2018 = vmatpush1.msra.mxu0 0.0
    %2019 = vmatprep.subr.mxu0 0.0
    %2020 = vmatpush1.msra.mxu0 0.0
    %2021 = vmatprep.subr.mxu0 0.0
    %2022 = vmatpush1.msra.mxu0 0.0
    %2023 = vmatprep.mubr.f32.mxu0 0.0
    %2024 = vmatmul.mubr.f32.gmra.mrb[0].mxu0 %v1957
    %v2025 = vpop.f32.mrb[0].mxu0
    %v2026 = vadd.f32 0.0, %v2025
    %v2027 = vpop.f32.mrb[0].mxu0
    %2028 = vdwg.mxu0
    %v2029 = vadd.f32 %v1788, %v2026
    %2030 = vrot.lane.b32.xlu0 %v207, 104
    %v2031 = vpop.permute.xlu0 %2030
    %2032 = vrot.lane.b32.xlu0 %v286, 104
    %v2033 = vpop.permute.xlu0 %2032
    %v2034 = vsel %vm368, %v2031, 0
    %v2036 = vsel %vm368, %v2033, 0
    %2038 = vmatprep.subr.mxu0 0.0
    %2039 = vmatpush1.xpose.msra.mxu0 %v2036
    %2040 = vmatprep.subr.mxu0 0.0
    %2041 = vmatpush1.xpose.msra.mxu0 0.0
    %2042 = vmatprep.subr.mxu0 0.0
    %2043 = vmatpush1.xpose.msra.mxu0 0.0
    %2044 = vmatprep.subr.mxu0 0.0
    %2045 = vmatpush1.xpose.msra.mxu0 0.0
    %2046 = vmatprep.subr.mxu0 0.0
    %2047 = vmatpush1.xpose.msra.mxu0 0.0
    %2048 = vmatprep.subr.mxu0 0.0
    %2049 = vmatpush1.xpose.msra.mxu0 0.0
    %2050 = vmatprep.subr.mxu0 0.0
    %2051 = vmatpush1.xpose.msra.mxu0 0.0
    %2052 = vmatprep.subr.mxu0 0.0
    %2053 = vmatpush1.xpose.msra.mxu0 0.0
    %2054 = vmatprep.subr.mxu0 0.0
    %2055 = vmatpush1.xpose.msra.mxu0 0.0
    %2056 = vmatprep.subr.mxu0 0.0
    %2057 = vmatpush1.xpose.msra.mxu0 0.0
    %2058 = vmatprep.subr.mxu0 0.0
    %2059 = vmatpush1.xpose.msra.mxu0 0.0
    %2060 = vmatprep.subr.mxu0 0.0
    %2061 = vmatpush1.xpose.msra.mxu0 0.0
    %2062 = vmatprep.subr.mxu0 0.0
    %2063 = vmatpush1.xpose.msra.mxu0 0.0
    %2064 = vmatprep.subr.mxu0 0.0
    %2065 = vmatpush1.xpose.msra.mxu0 0.0
    %2066 = vmatprep.subr.mxu0 0.0
    %2067 = vmatpush1.xpose.msra.mxu0 0.0
    %2068 = vmatprep.subr.mxu0 0.0
    %2069 = vmatpush1.xpose.msra.mxu0 0.0
    %2070 = vmatprep.subr.mxu0 0.0
    %2071 = vmatpush1.xpose.msra.mxu0 0.0
    %2072 = vmatprep.subr.mxu0 0.0
    %2073 = vmatpush1.xpose.msra.mxu0 0.0
    %2074 = vmatprep.subr.mxu0 0.0
    %2075 = vmatpush1.xpose.msra.mxu0 0.0
    %2076 = vmatprep.subr.mxu0 0.0
    %2077 = vmatpush1.xpose.msra.mxu0 0.0
    %2078 = vmatprep.subr.mxu0 0.0
    %2079 = vmatpush1.xpose.msra.mxu0 0.0
    %2080 = vmatprep.subr.mxu0 0.0
    %2081 = vmatpush1.xpose.msra.mxu0 0.0
    %2082 = vmatprep.subr.mxu0 0.0
    %2083 = vmatpush1.xpose.msra.mxu0 0.0
    %2084 = vmatprep.subr.mxu0 0.0
    %2085 = vmatpush1.xpose.msra.mxu0 0.0
    %2086 = vmatprep.subr.mxu0 0.0
    %2087 = vmatpush1.xpose.msra.mxu0 0.0
    %2088 = vmatprep.subr.mxu0 0.0
    %2089 = vmatpush1.xpose.msra.mxu0 0.0
    %2090 = vmatprep.subr.mxu0 0.0
    %2091 = vmatpush1.xpose.msra.mxu0 0.0
    %2092 = vmatprep.subr.mxu0 0.0
    %2093 = vmatpush1.xpose.msra.mxu0 0.0
    %2094 = vmatprep.subr.mxu0 0.0
    %2095 = vmatpush1.xpose.msra.mxu0 0.0
    %2096 = vmatprep.subr.mxu0 0.0
    %2097 = vmatpush1.xpose.msra.mxu0 0.0
    %2098 = vmatprep.subr.mxu0 0.0
    %2099 = vmatpush1.xpose.msra.mxu0 0.0
    %2100 = vmatprep.subr.mxu0 0.0
    %2101 = vmatpush1.xpose.msra.mxu0 0.0
    %2102 = vmatprep.mubr.f32.mxu0 0.0
    %2103 = vmatmul.mubr.f32.gmra.mrb[0].mxu0 %v2034
    %v2104 = vpop.f32.mrb[0].mxu0
    %v2105 = vadd.f32 %v102, %v2104
    %v2106 = vpop.f32.mrb[0].mxu0
    %2107 = vdwg.mxu0
    %v2108 = vsel %vm368, %v2105, -inf
    %2109 = vmax.xlane.f32.xlu0 %v2108
    %v2110 = vpop.xlane.xlu0 %2109
    %v2111 = vsub.f32 %v2105, %v2110
    %v2112 = vmul.f32 %v2111, 1.442695
    %v2113 = vpow.pop %v2112
    %v2114 = vsel %vm368, %v2113, 0.0
    %2115 = vadd.xlane.f32.xlu0 %v2114
    %v2116 = vpop.xlane.xlu0 %2115
    %v2117 = vrcp.pop %v2116
    %v2118 = vmul.f32 %v2113, %v2117
    %2119 = vrot.lane.b32.xlu0 %v365, 104
    %v2120 = vpop.permute.xlu0 %2119
    %v2123 = vsel %vm368, %v2118, 0
    %2125 = vmatprep.subr.mxu0 0.0
    %2126 = vmatpush1.msra.mxu0 %v2120
    %2127 = vmatprep.subr.mxu0 0.0
    %2128 = vmatpush1.msra.mxu0 0.0
    %2129 = vmatprep.subr.mxu0 0.0
    %2130 = vmatpush1.msra.mxu0 0.0
    %2131 = vmatprep.subr.mxu0 0.0
    %2132 = vmatpush1.msra.mxu0 0.0
    %2133 = vmatprep.subr.mxu0 0.0
    %2134 = vmatpush1.msra.mxu0 0.0
    %2135 = vmatprep.subr.mxu0 0.0
    %2136 = vmatpush1.msra.mxu0 0.0
    %2137 = vmatprep.subr.mxu0 0.0
    %2138 = vmatpush1.msra.mxu0 0.0
    %2139 = vmatprep.subr.mxu0 0.0
    %2140 = vmatpush1.msra.mxu0 0.0
    %2141 = vmatprep.subr.mxu0 0.0
    %2142 = vmatpush1.msra.mxu0 0.0
    %2143 = vmatprep.subr.mxu0 0.0
    %2144 = vmatpush1.msra.mxu0 0.0
    %2145 = vmatprep.subr.mxu0 0.0
    %2146 = vmatpush1.msra.mxu0 0.0
    %2147 = vmatprep.subr.mxu0 0.0
    %2148 = vmatpush1.msra.mxu0 0.0
    %2149 = vmatprep.subr.mxu0 0.0
    %2150 = vmatpush1.msra.mxu0 0.0
    %2151 = vmatprep.subr.mxu0 0.0
    %2152 = vmatpush1.msra.mxu0 0.0
    %2153 = vmatprep.subr.mxu0 0.0
    %2154 = vmatpush1.msra.mxu0 0.0
    %2155 = vmatprep.subr.mxu0 0.0
    %2156 = vmatpush1.msra.mxu0 0.0
    %2157 = vmatprep.subr.mxu0 0.0
    %2158 = vmatpush1.msra.mxu0 0.0
    %2159 = vmatprep.subr.mxu0 0.0
    %2160 = vmatpush1.msra.mxu0 0.0
    %2161 = vmatprep.subr.mxu0 0.0
    %2162 = vmatpush1.msra.mxu0 0.0
    %2163 = vmatprep.subr.mxu0 0.0
    %2164 = vmatpush1.msra.mxu0 0.0
    %2165 = vmatprep.subr.mxu0 0.0
    %2166 = vmatpush1.msra.mxu0 0.0
    %2167 = vmatprep.subr.mxu0 0.0
    %2168 = vmatpush1.msra.mxu0 0.0
    %2169 = vmatprep.subr.mxu0 0.0
    %2170 = vmatpush1.msra.mxu0 0.0
    %2171 = vmatprep.subr.mxu0 0.0
    %2172 = vmatpush1.msra.mxu0 0.0
    %2173 = vmatprep.subr.mxu0 0.0
    %2174 = vmatpush1.msra.mxu0 0.0
    %2175 = vmatprep.subr.mxu0 0.0
    %2176 = vmatpush1.msra.mxu0 0.0
    %2177 = vmatprep.subr.mxu0 0.0
    %2178 = vmatpush1.msra.mxu0 0.0
    %2179 = vmatprep.subr.mxu0 0.0
    %2180 = vmatpush1.msra.mxu0 0.0
    %2181 = vmatprep.subr.mxu0 0.0
    %2182 = vmatpush1.msra.mxu0 0.0
    %2183 = vmatprep.subr.mxu0 0.0
    %2184 = vmatpush1.msra.mxu0 0.0
    %2185 = vmatprep.subr.mxu0 0.0
    %2186 = vmatpush1.msra.mxu0 0.0
    %2187 = vmatprep.subr.mxu0 0.0
    %2188 = vmatpush1.msra.mxu0 0.0
    %2189 = vmatprep.mubr.f32.mxu0 0.0
    %2190 = vmatmul.mubr.f32.gmra.mrb[0].mxu0 %v2123
    %v2191 = vpop.f32.mrb[0].mxu0
    %v2192 = vadd.f32 0.0, %v2191
    %v2193 = vpop.f32.mrb[0].mxu0
    %2194 = vdwg.mxu0
    %v2196 = vsel %vm368, %v2192, 0
    %2198 = vmatprep.subr.mxu0 0.0
    %2199 = vmatpush1.msra.mxu0 %v123
    %2200 = vmatprep.subr.mxu0 0.0
    %2201 = vmatpush1.msra.mxu0 0.0
    %2202 = vmatprep.subr.mxu0 0.0
    %2203 = vmatpush1.msra.mxu0 0.0
    %2204 = vmatprep.subr.mxu0 0.0
    %2205 = vmatpush1.msra.mxu0 0.0
    %2206 = vmatprep.subr.mxu0 0.0
    %2207 = vmatpush1.msra.mxu0 0.0
    %2208 = vmatprep.subr.mxu0 0.0
    %2209 = vmatpush1.msra.mxu0 0.0
    %2210 = vmatprep.subr.mxu0 0.0
    %2211 = vmatpush1.msra.mxu0 0.0
    %2212 = vmatprep.subr.mxu0 0.0
    %2213 = vmatpush1.msra.mxu0 0.0
    %2214 = vmatprep.subr.mxu0 0.0
    %2215 = vmatpush1.msra.mxu0 0.0
    %2216 = vmatprep.subr.mxu0 0.0
    %2217 = vmatpush1.msra.mxu0 0.0
    %2218 = vmatprep.subr.mxu0 0.0
    %2219 = vmatpush1.msra.mxu0 0.0
    %2220 = vmatprep.subr.mxu0 0.0
    %2221 = vmatpush1.msra.mxu0 0.0
    %2222 = vmatprep.subr.mxu0 0.0
    %2223 = vmatpush1.msra.mxu0 0.0
    %2224 = vmatprep.subr.mxu0 0.0
    %2225 = vmatpush1.msra.mxu0 0.0
    %2226 = vmatprep.subr.mxu0 0.0
    %2227 = vmatpush1.msra.mxu0 0.0
    %2228 = vmatprep.subr.mxu0 0.0
    %2229 = vmatpush1.msra.mxu0 0.0
    %2230 = vmatprep.subr.mxu0 0.0
    %2231 = vmatpush1.msra.mxu0 0.0
    %2232 = vmatprep.subr.mxu0 0.0
    %2233 = vmatpush1.msra.mxu0 0.0
    %2234 = vmatprep.subr.mxu0 0.0
    %2235 = vmatpush1.msra.mxu0 0.0
    %2236 = vmatprep.subr.mxu0 0.0
    %2237 = vmatpush1.msra.mxu0 0.0
    %2238 = vmatprep.subr.mxu0 0.0
    %2239 = vmatpush1.msra.mxu0 0.0
    %2240 = vmatprep.subr.mxu0 0.0
    %2241 = vmatpush1.msra.mxu0 0.0
    %2242 = vmatprep.subr.mxu0 0.0
    %2243 = vmatpush1.msra.mxu0 0.0
    %2244 = vmatprep.subr.mxu0 0.0
    %2245 = vmatpush1.msra.mxu0 0.0
    %2246 = vmatprep.subr.mxu0 0.0
    %2247 = vmatpush1.msra.mxu0 0.0
    %2248 = vmatprep.subr.mxu0 0.0
    %2249 = vmatpush1.msra.mxu0 0.0
    %2250 = vmatprep.subr.mxu0 0.0
    %2251 = vmatpush1.msra.mxu0 0.0
    %2252 = vmatprep.subr.mxu0 0.0
    %2253 = vmatpush1.msra.mxu0 0.0
    %2254 = vmatprep.subr.mxu0 0.0
    %2255 = vmatpush1.msra.mxu0 0.0
    %2256 = vmatprep.subr.mxu0 0.0
    %2257 = vmatpush1.msra.mxu0 0.0
    %2258 = vmatprep.subr.mxu0 0.0
    %2259 = vmatpush1.msra.mxu0 0.0
    %2260 = vmatprep.subr.mxu0 0.0
    %2261 = vmatpush1.msra.mxu0 0.0
    %2262 = vmatprep.mubr.f32.mxu0 0.0
    %2263 = vmatmul.mubr.f32.gmra.mrb[0].mxu0 %v2196
    %v2264 = vpop.f32.mrb[0].mxu0
    %v2265 = vadd.f32 0.0, %v2264
    %v2266 = vpop.f32.mrb[0].mxu0
    %2267 = vdwg.mxu0
    %v2268 = vadd.f32 %v2029, %v2265
    %v2269 = vlaneseq
    %v2270 = vshrl.u32 %v2269, 7
    %v2271 = vsub.s32 3, %v2270
    %v2272 = vrot.slane %v99, %v2271
    %v2273 = vadd.f32 %v1318, %v2272
    %v2274 = vadd.f32 %v2268, %v2272
    %v2275 = vadd.f32 %v2273, %v95
    %v2276 = vadd.f32 %v2274, %v96
    %v2277 = vsel %vm128, %v2275, 0.0
    %2278 = vadd.xlane.f32.xlu0 %v2277
    %v2279 = vpop.xlane.xlu0 %2278
    %v2280 = vsel %vm128, %v2276, 0.0
    %2281 = vadd.xlane.f32.xlu0 %v2280
    %v2282 = vpop.xlane.xlu0 %2281
    %v2283 = vrcp.pop 32.0
    %v2284 = vmul.f32 %v2279, %v2283
    %v2285 = vmul.f32 %v2282, %v2283
    %v2286 = vsub.f32 %v2275, %v2284
    %v2287 = vsub.f32 %v2276, %v2285
    %v2288 = vmul.f32 %v2286, %v2286
    %v2289 = vmul.f32 %v2287, %v2287
    %v2290 = vsel %vm128, %v2288, 0.0
    %2291 = vadd.xlane.f32.xlu0 %v2290
    %v2292 = vpop.xlane.xlu0 %2291
    %v2293 = vsel %vm128, %v2289, 0.0
    %2294 = vadd.xlane.f32.xlu0 %v2293
    %v2295 = vpop.xlane.xlu0 %2294
    %v2296 = vmul.f32 %v2292, %v2283
    %v2297 = vmul.f32 %v2295, %v2283
    %v2298 = vadd.f32 %v2296, 1e-05
    %v2299 = vadd.f32 %v2297, 1e-05
    %v2300 = vrsqrt.pop %v2298
    %v2301 = vrsqrt.pop %v2299
    %v2302 = vmul.f32 %v2286, %v2300
    %v2303 = vmul.f32 %v2287, %v2301
    %v2304 = vlaneseq
    %v2305 = vshrl.u32 %v2304, 7
    %v2306 = vsub.s32 2, %v2305
    %v2307 = vrot.slane %v100, %v2306
    %v2308 = vmul.f32 %v2302, %v2307
    %v2309 = vmul.f32 %v2303, %v2307
    %v2310 = vlaneseq
    %v2311 = vshrl.u32 %v2310, 7
    %v2312 = vsub.s32 3, %v2311
    %v2313 = vrot.slane %v100, %v2312
    %v2314 = vadd.f32 %v2308, %v2313
    %v2315 = vadd.f32 %v2309, %v2313
    %s2316 = scalar_lea.vmem [#allocation8], 128
    %v2317 = vld [vmem:[%s2316] sm:$0xff]
    %v2318 = vld [vmem:[%s2316 + $0x8] sm:$0xff]
    %v2319 = vld [vmem:[%s2316 + $0x10] sm:$0xff]
    %v2320 = vld [vmem:[%s2316 + $0x18] sm:$0xff]
    %s2321 = scalar_lea.vmem [#allocation8], 160
    %v2322 = vld [vmem:[%s2321] sm:$0xff]
    %v2323 = vld [vmem:[%s2321 + $0x8] sm:$0xff]
    %v2324 = vld [vmem:[%s2321 + $0x10] sm:$0xff]
    %v2325 = vld [vmem:[%s2321 + $0x18] sm:$0xff]
    %s2326 = scalar_lea.vmem [#allocation8], 192
    %v2327 = vld [vmem:[%s2326] sm:$0xff]
    %v2328 = vld [vmem:[%s2326 + $0x8] sm:$0xff]
    %v2329 = vld [vmem:[%s2326 + $0x10] sm:$0xff]
    %v2330 = vld [vmem:[%s2326 + $0x18] sm:$0xff]
    %s2331 = scalar_lea.vmem [#allocation8], 224
    %v2332 = vld [vmem:[%s2331] sm:$0xff]
    %v2333 = vld [vmem:[%s2331 + $0x8] sm:$0xff]
    %v2334 = vld [vmem:[%s2331 + $0x10] sm:$0xff]
    %v2335 = vld [vmem:[%s2331 + $0x18] sm:$0xff]
    %v2336 = vlaneseq
    %v2337 = vshrl.u32 %v2336, 7
    %v2338 = vsub.s32 4, %v2337
    %v2339 = vrot.slane %v99, %v2338
    %v2341 = vsel %vm128, %v2314, 0
    %v2344 = vsel %vm128, %v2315, 0
    %2346 = vmatprep.subr.mxu0 0.0
    %2347 = vmatpush1.msra.mxu0 %v2317
    %2348 = vmatprep.subr.mxu0 0.0
    %2349 = vmatpush1.msra.mxu0 %v2318
    %2350 = vmatprep.subr.mxu0 0.0
    %2351 = vmatpush1.msra.mxu0 %v2319
    %2352 = vmatprep.subr.mxu0 0.0
    %2353 = vmatpush1.msra.mxu0 %v2320
    %2354 = vmatprep.subr.mxu0 0.0
    %2355 = vmatpush1.msra.mxu0 0.0
    %2356 = vmatprep.subr.mxu0 0.0
    %2357 = vmatpush1.msra.mxu0 0.0
    %2358 = vmatprep.subr.mxu0 0.0
    %2359 = vmatpush1.msra.mxu0 0.0
    %2360 = vmatprep.subr.mxu0 0.0
    %2361 = vmatpush1.msra.mxu0 0.0
    %2362 = vmatprep.subr.mxu0 0.0
    %2363 = vmatpush1.msra.mxu0 0.0
    %2364 = vmatprep.subr.mxu0 0.0
    %2365 = vmatpush1.msra.mxu0 0.0
    %2366 = vmatprep.subr.mxu0 0.0
    %2367 = vmatpush1.msra.mxu0 0.0
    %2368 = vmatprep.subr.mxu0 0.0
    %2369 = vmatpush1.msra.mxu0 0.0
    %2370 = vmatprep.subr.mxu0 0.0
    %2371 = vmatpush1.msra.mxu0 0.0
    %2372 = vmatprep.subr.mxu0 0.0
    %2373 = vmatpush1.msra.mxu0 0.0
    %2374 = vmatprep.subr.mxu0 0.0
    %2375 = vmatpush1.msra.mxu0 0.0
    %2376 = vmatprep.subr.mxu0 0.0
    %2377 = vmatpush1.msra.mxu0 0.0
    %2378 = vmatprep.subr.mxu0 0.0
    %2379 = vmatpush1.msra.mxu0 0.0
    %2380 = vmatprep.subr.mxu0 0.0
    %2381 = vmatpush1.msra.mxu0 0.0
    %2382 = vmatprep.subr.mxu0 0.0
    %2383 = vmatpush1.msra.mxu0 0.0
    %2384 = vmatprep.subr.mxu0 0.0
    %2385 = vmatpush1.msra.mxu0 0.0
    %2386 = vmatprep.subr.mxu0 0.0
    %2387 = vmatpush1.msra.mxu0 0.0
    %2388 = vmatprep.subr.mxu0 0.0
    %2389 = vmatpush1.msra.mxu0 0.0
    %2390 = vmatprep.subr.mxu0 0.0
    %2391 = vmatpush1.msra.mxu0 0.0
    %2392 = vmatprep.subr.mxu0 0.0
    %2393 = vmatpush1.msra.mxu0 0.0
    %2394 = vmatprep.subr.mxu0 0.0
    %2395 = vmatpush1.msra.mxu0 0.0
    %2396 = vmatprep.subr.mxu0 0.0
    %2397 = vmatpush1.msra.mxu0 0.0
    %2398 = vmatprep.subr.mxu0 0.0
    %2399 = vmatpush1.msra.mxu0 0.0
    %2400 = vmatprep.subr.mxu0 0.0
    %2401 = vmatpush1.msra.mxu0 0.0
    %2402 = vmatprep.subr.mxu0 0.0
    %2403 = vmatpush1.msra.mxu0 0.0
    %2404 = vmatprep.subr.mxu0 0.0
    %2405 = vmatpush1.msra.mxu0 0.0
    %2406 = vmatprep.subr.mxu0 0.0
    %2407 = vmatpush1.msra.mxu0 0.0
    %2408 = vmatprep.subr.mxu0 0.0
    %2409 = vmatpush1.msra.mxu0 0.0
    %2410 = vmatprep.mubr.f32.mxu0 0.0
    %2411 = vmatmul.mubr.f32.gmra.mrb[0].mxu0 %v2341
    %v2412 = vpop.f32.mrb[0].mxu0
    %v2413 = vadd.f32 %v2339, %v2412
    %v2414 = vpop.f32.mrb[0].mxu0
    %2415 = vmatprep.mubr.f32.mxu0 0.0
    %2416 = vmatmul.mubr.f32.gmra.mrb[0].mxu0 %v2344
    %v2417 = vpop.f32.mrb[0].mxu0
    %v2418 = vadd.f32 %v2339, %v2417
    %v2419 = vpop.f32.mrb[0].mxu0
    %2420 = vdwg.mxu0
    %v2421 = vlaneseq
    %v2422 = vshrl.u32 %v2421, 7
    %v2423 = vsub.s32 5, %v2422
    %v2424 = vrot.slane %v99, %v2423
    %v2426 = vsel %vm128, %v97, 0
    %v2429 = vsel %vm128, %v98, 0
    %2431 = vmatprep.subr.mxu0 0.0
    %2432 = vmatpush1.msra.mxu0 %v2322
    %2433 = vmatprep.subr.mxu0 0.0
    %2434 = vmatpush1.msra.mxu0 %v2323
    %2435 = vmatprep.subr.mxu0 0.0
    %2436 = vmatpush1.msra.mxu0 %v2324
    %2437 = vmatprep.subr.mxu0 0.0
    %2438 = vmatpush1.msra.mxu0 %v2325
    %2439 = vmatprep.subr.mxu0 0.0
    %2440 = vmatpush1.msra.mxu0 0.0
    %2441 = vmatprep.subr.mxu0 0.0
    %2442 = vmatpush1.msra.mxu0 0.0
    %2443 = vmatprep.subr.mxu0 0.0
    %2444 = vmatpush1.msra.mxu0 0.0
    %2445 = vmatprep.subr.mxu0 0.0
    %2446 = vmatpush1.msra.mxu0 0.0
    %2447 = vmatprep.subr.mxu0 0.0
    %2448 = vmatpush1.msra.mxu0 0.0
    %2449 = vmatprep.subr.mxu0 0.0
    %2450 = vmatpush1.msra.mxu0 0.0
    %2451 = vmatprep.subr.mxu0 0.0
    %2452 = vmatpush1.msra.mxu0 0.0
    %2453 = vmatprep.subr.mxu0 0.0
    %2454 = vmatpush1.msra.mxu0 0.0
    %2455 = vmatprep.subr.mxu0 0.0
    %2456 = vmatpush1.msra.mxu0 0.0
    %2457 = vmatprep.subr.mxu0 0.0
    %2458 = vmatpush1.msra.mxu0 0.0
    %2459 = vmatprep.subr.mxu0 0.0
    %2460 = vmatpush1.msra.mxu0 0.0
    %2461 = vmatprep.subr.mxu0 0.0
    %2462 = vmatpush1.msra.mxu0 0.0
    %2463 = vmatprep.subr.mxu0 0.0
    %2464 = vmatpush1.msra.mxu0 0.0
    %2465 = vmatprep.subr.mxu0 0.0
    %2466 = vmatpush1.msra.mxu0 0.0
    %2467 = vmatprep.subr.mxu0 0.0
    %2468 = vmatpush1.msra.mxu0 0.0
    %2469 = vmatprep.subr.mxu0 0.0
    %2470 = vmatpush1.msra.mxu0 0.0
    %2471 = vmatprep.subr.mxu0 0.0
    %2472 = vmatpush1.msra.mxu0 0.0
    %2473 = vmatprep.subr.mxu0 0.0
    %2474 = vmatpush1.msra.mxu0 0.0
    %2475 = vmatprep.subr.mxu0 0.0
    %2476 = vmatpush1.msra.mxu0 0.0
    %2477 = vmatprep.subr.mxu0 0.0
    %2478 = vmatpush1.msra.mxu0 0.0
    %2479 = vmatprep.subr.mxu0 0.0
    %2480 = vmatpush1.msra.mxu0 0.0
    %2481 = vmatprep.subr.mxu0 0.0
    %2482 = vmatpush1.msra.mxu0 0.0
    %2483 = vmatprep.subr.mxu0 0.0
    %2484 = vmatpush1.msra.mxu0 0.0
    %2485 = vmatprep.subr.mxu0 0.0
    %2486 = vmatpush1.msra.mxu0 0.0
    %2487 = vmatprep.subr.mxu0 0.0
    %2488 = vmatpush1.msra.mxu0 0.0
    %2489 = vmatprep.subr.mxu0 0.0
    %2490 = vmatpush1.msra.mxu0 0.0
    %2491 = vmatprep.subr.mxu0 0.0
    %2492 = vmatpush1.msra.mxu0 0.0
    %2493 = vmatprep.subr.mxu0 0.0
    %2494 = vmatpush1.msra.mxu0 0.0
    %2495 = vmatprep.mubr.f32.mxu0 0.0
    %2496 = vmatmul.mubr.f32.gmra.mrb[0].mxu0 %v2426
    %v2497 = vpop.f32.mrb[0].mxu0
    %v2498 = vadd.f32 %v2424, %v2497
    %v2499 = vpop.f32.mrb[0].mxu0
    %2500 = vmatprep.mubr.f32.mxu0 0.0
    %2501 = vmatmul.mubr.f32.gmra.mrb[0].mxu0 %v2429
    %v2502 = vpop.f32.mrb[0].mxu0
    %v2503 = vadd.f32 %v2424, %v2502
    %v2504 = vpop.f32.mrb[0].mxu0
    %2505 = vdwg.mxu0
    %v2506 = vlaneseq
    %v2507 = vshrl.u32 %v2506, 7
    %v2508 = vsub.s32 6, %v2507
    %v2509 = vrot.slane %v99, %v2508
    %2510 = vmatprep.subr.mxu0 0.0
    %2511 = vmatpush1.msra.mxu0 %v2327
    %2512 = vmatprep.subr.mxu0 0.0
    %2513 = vmatpush1.msra.mxu0 %v2328
    %2514 = vmatprep.subr.mxu0 0.0
    %2515 = vmatpush1.msra.mxu0 %v2329
    %2516 = vmatprep.subr.mxu0 0.0
    %2517 = vmatpush1.msra.mxu0 %v2330
    %2518 = vmatprep.subr.mxu0 0.0
    %2519 = vmatpush1.msra.mxu0 0.0
    %2520 = vmatprep.subr.mxu0 0.0
    %2521 = vmatpush1.msra.mxu0 0.0
    %2522 = vmatprep.subr.mxu0 0.0
    %2523 = vmatpush1.msra.mxu0 0.0
    %2524 = vmatprep.subr.mxu0 0.0
    %2525 = vmatpush1.msra.mxu0 0.0
    %2526 = vmatprep.subr.mxu0 0.0
    %2527 = vmatpush1.msra.mxu0 0.0
    %2528 = vmatprep.subr.mxu0 0.0
    %2529 = vmatpush1.msra.mxu0 0.0
    %2530 = vmatprep.subr.mxu0 0.0
    %2531 = vmatpush1.msra.mxu0 0.0
    %2532 = vmatprep.subr.mxu0 0.0
    %2533 = vmatpush1.msra.mxu0 0.0
    %2534 = vmatprep.subr.mxu0 0.0
    %2535 = vmatpush1.msra.mxu0 0.0
    %2536 = vmatprep.subr.mxu0 0.0
    %2537 = vmatpush1.msra.mxu0 0.0
    %2538 = vmatprep.subr.mxu0 0.0
    %2539 = vmatpush1.msra.mxu0 0.0
    %2540 = vmatprep.subr.mxu0 0.0
    %2541 = vmatpush1.msra.mxu0 0.0
    %2542 = vmatprep.subr.mxu0 0.0
    %2543 = vmatpush1.msra.mxu0 0.0
    %2544 = vmatprep.subr.mxu0 0.0
    %2545 = vmatpush1.msra.mxu0 0.0
    %2546 = vmatprep.subr.mxu0 0.0
    %2547 = vmatpush1.msra.mxu0 0.0
    %2548 = vmatprep.subr.mxu0 0.0
    %2549 = vmatpush1.msra.mxu0 0.0
    %2550 = vmatprep.subr.mxu0 0.0
    %2551 = vmatpush1.msra.mxu0 0.0
    %2552 = vmatprep.subr.mxu0 0.0
    %2553 = vmatpush1.msra.mxu0 0.0
    %2554 = vmatprep.subr.mxu0 0.0
    %2555 = vmatpush1.msra.mxu0 0.0
    %2556 = vmatprep.subr.mxu0 0.0
    %2557 = vmatpush1.msra.mxu0 0.0
    %2558 = vmatprep.subr.mxu0 0.0
    %2559 = vmatpush1.msra.mxu0 0.0
    %2560 = vmatprep.subr.mxu0 0.0
    %2561 = vmatpush1.msra.mxu0 0.0
    %2562 = vmatprep.subr.mxu0 0.0
    %2563 = vmatpush1.msra.mxu0 0.0
    %2564 = vmatprep.subr.mxu0 0.0
    %2565 = vmatpush1.msra.mxu0 0.0
    %2566 = vmatprep.subr.mxu0 0.0
    %2567 = vmatpush1.msra.mxu0 0.0
    %2568 = vmatprep.subr.mxu0 0.0
    %2569 = vmatpush1.msra.mxu0 0.0
    %2570 = vmatprep.subr.mxu0 0.0
    %2571 = vmatpush1.msra.mxu0 0.0
    %2572 = vmatprep.subr.mxu0 0.0
    %2573 = vmatpush1.msra.mxu0 0.0
    %2574 = vmatprep.mubr.f32.mxu0 0.0
    %2575 = vmatmul.mubr.f32.gmra.mrb[0].mxu0 %v2426
    %v2576 = vpop.f32.mrb[0].mxu0
    %v2577 = vadd.f32 %v2509, %v2576
    %v2578 = vpop.f32.mrb[0].mxu0
    %2579 = vmatprep.mubr.f32.mxu0 0.0
    %2580 = vmatmul.mubr.f32.gmra.mrb[0].mxu0 %v2429
    %v2581 = vpop.f32.mrb[0].mxu0
    %v2582 = vadd.f32 %v2509, %v2581
    %v2583 = vpop.f32.mrb[0].mxu0
    %2584 = vdwg.mxu0
    %v2586 = vlaneseq
    %v2587 = vshrl.u32 %v2586, 7
    %v2588 = vsub.s32 0, %v2587
    %v2589 = vrot.slane %v103, %v2588
    %v2592 = vsel %vm368, %v2413, 0
    %v2595 = vsel %vm368, %v2498, 0
    %2597 = vmatprep.subr.mxu0 0.0
    %2598 = vmatpush1.xpose.msra.mxu0 %v2595
    %2599 = vmatprep.subr.mxu0 0.0
    %2600 = vmatpush1.xpose.msra.mxu0 0.0
    %2601 = vmatprep.subr.mxu0 0.0
    %2602 = vmatpush1.xpose.msra.mxu0 0.0
    %2603 = vmatprep.subr.mxu0 0.0
    %2604 = vmatpush1.xpose.msra.mxu0 0.0
    %2605 = vmatprep.subr.mxu0 0.0
    %2606 = vmatpush1.xpose.msra.mxu0 0.0
    %2607 = vmatprep.subr.mxu0 0.0
    %2608 = vmatpush1.xpose.msra.mxu0 0.0
    %2609 = vmatprep.subr.mxu0 0.0
    %2610 = vmatpush1.xpose.msra.mxu0 0.0
    %2611 = vmatprep.subr.mxu0 0.0
    %2612 = vmatpush1.xpose.msra.mxu0 0.0
    %2613 = vmatprep.subr.mxu0 0.0
    %2614 = vmatpush1.xpose.msra.mxu0 0.0
    %2615 = vmatprep.subr.mxu0 0.0
    %2616 = vmatpush1.xpose.msra.mxu0 0.0
    %2617 = vmatprep.subr.mxu0 0.0
    %2618 = vmatpush1.xpose.msra.mxu0 0.0
    %2619 = vmatprep.subr.mxu0 0.0
    %2620 = vmatpush1.xpose.msra.mxu0 0.0
    %2621 = vmatprep.subr.mxu0 0.0
    %2622 = vmatpush1.xpose.msra.mxu0 0.0
    %2623 = vmatprep.subr.mxu0 0.0
    %2624 = vmatpush1.xpose.msra.mxu0 0.0
    %2625 = vmatprep.subr.mxu0 0.0
    %2626 = vmatpush1.xpose.msra.mxu0 0.0
    %2627 = vmatprep.subr.mxu0 0.0
    %2628 = vmatpush1.xpose.msra.mxu0 0.0
    %2629 = vmatprep.subr.mxu0 0.0
    %2630 = vmatpush1.xpose.msra.mxu0 0.0
    %2631 = vmatprep.subr.mxu0 0.0
    %2632 = vmatpush1.xpose.msra.mxu0 0.0
    %2633 = vmatprep.subr.mxu0 0.0
    %2634 = vmatpush1.xpose.msra.mxu0 0.0
    %2635 = vmatprep.subr.mxu0 0.0
    %2636 = vmatpush1.xpose.msra.mxu0 0.0
    %2637 = vmatprep.subr.mxu0 0.0
    %2638 = vmatpush1.xpose.msra.mxu0 0.0
    %2639 = vmatprep.subr.mxu0 0.0
    %2640 = vmatpush1.xpose.msra.mxu0 0.0
    %2641 = vmatprep.subr.mxu0 0.0
    %2642 = vmatpush1.xpose.msra.mxu0 0.0
    %2643 = vmatprep.subr.mxu0 0.0
    %2644 = vmatpush1.xpose.msra.mxu0 0.0
    %2645 = vmatprep.subr.mxu0 0.0
    %2646 = vmatpush1.xpose.msra.mxu0 0.0
    %2647 = vmatprep.subr.mxu0 0.0
    %2648 = vmatpush1.xpose.msra.mxu0 0.0
    %2649 = vmatprep.subr.mxu0 0.0
    %2650 = vmatpush1.xpose.msra.mxu0 0.0
    %2651 = vmatprep.subr.mxu0 0.0
    %2652 = vmatpush1.xpose.msra.mxu0 0.0
    %2653 = vmatprep.subr.mxu0 0.0
    %2654 = vmatpush1.xpose.msra.mxu0 0.0
    %2655 = vmatprep.subr.mxu0 0.0
    %2656 = vmatpush1.xpose.msra.mxu0 0.0
    %2657 = vmatprep.subr.mxu0 0.0
    %2658 = vmatpush1.xpose.msra.mxu0 0.0
    %2659 = vmatprep.subr.mxu0 0.0
    %2660 = vmatpush1.xpose.msra.mxu0 0.0
    %2661 = vmatprep.mubr.f32.mxu0 0.0
    %2662 = vmatmul.mubr.f32.gmra.mrb[0].mxu0 %v2592
    %v2663 = vpop.f32.mrb[0].mxu0
    %v2664 = vadd.f32 %v2589, %v2663
    %v2665 = vpop.f32.mrb[0].mxu0
    %2666 = vdwg.mxu0
    %v2667 = vsel %vm368, %v2664, -inf
    %2668 = vmax.xlane.f32.xlu0 %v2667
    %v2669 = vpop.xlane.xlu0 %2668
    %v2670 = vsub.f32 %v2664, %v2669
    %v2671 = vmul.f32 %v2670, 1.442695
    %v2672 = vpow.pop %v2671
    %v2673 = vsel %vm368, %v2672, 0.0
    %2674 = vadd.xlane.f32.xlu0 %v2673
    %v2675 = vpop.xlane.xlu0 %2674
    %v2676 = vrcp.pop %v2675
    %v2677 = vmul.f32 %v2672, %v2676
    %v2679 = vsel %vm368, %v2677, 0
    %2681 = vmatprep.subr.mxu0 0.0
    %2682 = vmatpush1.msra.mxu0 %v2577
    %2683 = vmatprep.subr.mxu0 0.0
    %2684 = vmatpush1.msra.mxu0 0.0
    %2685 = vmatprep.subr.mxu0 0.0
    %2686 = vmatpush1.msra.mxu0 0.0
    %2687 = vmatprep.subr.mxu0 0.0
    %2688 = vmatpush1.msra.mxu0 0.0
    %2689 = vmatprep.subr.mxu0 0.0
    %2690 = vmatpush1.msra.mxu0 0.0
    %2691 = vmatprep.subr.mxu0 0.0
    %2692 = vmatpush1.msra.mxu0 0.0
    %2693 = vmatprep.subr.mxu0 0.0
    %2694 = vmatpush1.msra.mxu0 0.0
    %2695 = vmatprep.subr.mxu0 0.0
    %2696 = vmatpush1.msra.mxu0 0.0
    %2697 = vmatprep.subr.mxu0 0.0
    %2698 = vmatpush1.msra.mxu0 0.0
    %2699 = vmatprep.subr.mxu0 0.0
    %2700 = vmatpush1.msra.mxu0 0.0
    %2701 = vmatprep.subr.mxu0 0.0
    %2702 = vmatpush1.msra.mxu0 0.0
    %2703 = vmatprep.subr.mxu0 0.0
    %2704 = vmatpush1.msra.mxu0 0.0
    %2705 = vmatprep.subr.mxu0 0.0
    %2706 = vmatpush1.msra.mxu0 0.0
    %2707 = vmatprep.subr.mxu0 0.0
    %2708 = vmatpush1.msra.mxu0 0.0
    %2709 = vmatprep.subr.mxu0 0.0
    %2710 = vmatpush1.msra.mxu0 0.0
    %2711 = vmatprep.subr.mxu0 0.0
    %2712 = vmatpush1.msra.mxu0 0.0
    %2713 = vmatprep.subr.mxu0 0.0
    %2714 = vmatpush1.msra.mxu0 0.0
    %2715 = vmatprep.subr.mxu0 0.0
    %2716 = vmatpush1.msra.mxu0 0.0
    %2717 = vmatprep.subr.mxu0 0.0
    %2718 = vmatpush1.msra.mxu0 0.0
    %2719 = vmatprep.subr.mxu0 0.0
    %2720 = vmatpush1.msra.mxu0 0.0
    %2721 = vmatprep.subr.mxu0 0.0
    %2722 = vmatpush1.msra.mxu0 0.0
    %2723 = vmatprep.subr.mxu0 0.0
    %2724 = vmatpush1.msra.mxu0 0.0
    %2725 = vmatprep.subr.mxu0 0.0
    %2726 = vmatpush1.msra.mxu0 0.0
    %2727 = vmatprep.subr.mxu0 0.0
    %2728 = vmatpush1.msra.mxu0 0.0
    %2729 = vmatprep.subr.mxu0 0.0
    %2730 = vmatpush1.msra.mxu0 0.0
    %2731 = vmatprep.subr.mxu0 0.0
    %2732 = vmatpush1.msra.mxu0 0.0
    %2733 = vmatprep.subr.mxu0 0.0
    %2734 = vmatpush1.msra.mxu0 0.0
    %2735 = vmatprep.subr.mxu0 0.0
    %2736 = vmatpush1.msra.mxu0 0.0
    %2737 = vmatprep.subr.mxu0 0.0
    %2738 = vmatpush1.msra.mxu0 0.0
    %2739 = vmatprep.subr.mxu0 0.0
    %2740 = vmatpush1.msra.mxu0 0.0
    %2741 = vmatprep.subr.mxu0 0.0
    %2742 = vmatpush1.msra.mxu0 0.0
    %2743 = vmatprep.subr.mxu0 0.0
    %2744 = vmatpush1.msra.mxu0 0.0
    %2745 = vmatprep.mubr.f32.mxu0 0.0
    %2746 = vmatmul.mubr.f32.gmra.mrb[0].mxu0 %v2679
    %v2747 = vpop.f32.mrb[0].mxu0
    %v2748 = vadd.f32 0.0, %v2747
    %v2749 = vpop.f32.mrb[0].mxu0
    %2750 = vdwg.mxu0
    %2751 = vrot.lane.b32.xlu0 %v2413, 120
    %v2752 = vpop.permute.xlu0 %2751
    %2753 = vrot.lane.b32.xlu0 %v2498, 120
    %v2754 = vpop.permute.xlu0 %2753
    %v2755 = vsel %vm368, %v2752, 0
    %v2757 = vsel %vm368, %v2754, 0
    %2759 = vmatprep.subr.mxu0 0.0
    %2760 = vmatpush1.xpose.msra.mxu0 %v2757
    %2761 = vmatprep.subr.mxu0 0.0
    %2762 = vmatpush1.xpose.msra.mxu0 0.0
    %2763 = vmatprep.subr.mxu0 0.0
    %2764 = vmatpush1.xpose.msra.mxu0 0.0
    %2765 = vmatprep.subr.mxu0 0.0
    %2766 = vmatpush1.xpose.msra.mxu0 0.0
    %2767 = vmatprep.subr.mxu0 0.0
    %2768 = vmatpush1.xpose.msra.mxu0 0.0
    %2769 = vmatprep.subr.mxu0 0.0
    %2770 = vmatpush1.xpose.msra.mxu0 0.0
    %2771 = vmatprep.subr.mxu0 0.0
    %2772 = vmatpush1.xpose.msra.mxu0 0.0
    %2773 = vmatprep.subr.mxu0 0.0
    %2774 = vmatpush1.xpose.msra.mxu0 0.0
    %2775 = vmatprep.subr.mxu0 0.0
    %2776 = vmatpush1.xpose.msra.mxu0 0.0
    %2777 = vmatprep.subr.mxu0 0.0
    %2778 = vmatpush1.xpose.msra.mxu0 0.0
    %2779 = vmatprep.subr.mxu0 0.0
    %2780 = vmatpush1.xpose.msra.mxu0 0.0
    %2781 = vmatprep.subr.mxu0 0.0
    %2782 = vmatpush1.xpose.msra.mxu0 0.0
    %2783 = vmatprep.subr.mxu0 0.0
    %2784 = vmatpush1.xpose.msra.mxu0 0.0
    %2785 = vmatprep.subr.mxu0 0.0
    %2786 = vmatpush1.xpose.msra.mxu0 0.0
    %2787 = vmatprep.subr.mxu0 0.0
    %2788 = vmatpush1.xpose.msra.mxu0 0.0
    %2789 = vmatprep.subr.mxu0 0.0
    %2790 = vmatpush1.xpose.msra.mxu0 0.0
    %2791 = vmatprep.subr.mxu0 0.0
    %2792 = vmatpush1.xpose.msra.mxu0 0.0
    %2793 = vmatprep.subr.mxu0 0.0
    %2794 = vmatpush1.xpose.msra.mxu0 0.0
    %2795 = vmatprep.subr.mxu0 0.0
    %2796 = vmatpush1.xpose.msra.mxu0 0.0
    %2797 = vmatprep.subr.mxu0 0.0
    %2798 = vmatpush1.xpose.msra.mxu0 0.0
    %2799 = vmatprep.subr.mxu0 0.0
    %2800 = vmatpush1.xpose.msra.mxu0 0.0
    %2801 = vmatprep.subr.mxu0 0.0
    %2802 = vmatpush1.xpose.msra.mxu0 0.0
    %2803 = vmatprep.subr.mxu0 0.0
    %2804 = vmatpush1.xpose.msra.mxu0 0.0
    %2805 = vmatprep.subr.mxu0 0.0
    %2806 = vmatpush1.xpose.msra.mxu0 0.0
    %2807 = vmatprep.subr.mxu0 0.0
    %2808 = vmatpush1.xpose.msra.mxu0 0.0
    %2809 = vmatprep.subr.mxu0 0.0
    %2810 = vmatpush1.xpose.msra.mxu0 0.0
    %2811 = vmatprep.subr.mxu0 0.0
    %2812 = vmatpush1.xpose.msra.mxu0 0.0
    %2813 = vmatprep.subr.mxu0 0.0
    %2814 = vmatpush1.xpose.msra.mxu0 0.0
    %2815 = vmatprep.subr.mxu0 0.0
    %2816 = vmatpush1.xpose.msra.mxu0 0.0
    %2817 = vmatprep.subr.mxu0 0.0
    %2818 = vmatpush1.xpose.msra.mxu0 0.0
    %2819 = vmatprep.subr.mxu0 0.0
    %2820 = vmatpush1.xpose.msra.mxu0 0.0
    %2821 = vmatprep.subr.mxu0 0.0
    %2822 = vmatpush1.xpose.msra.mxu0 0.0
    %2823 = vmatprep.mubr.f32.mxu0 0.0
    %2824 = vmatmul.mubr.f32.gmra.mrb[0].mxu0 %v2755
    %v2825 = vpop.f32.mrb[0].mxu0
    %v2826 = vadd.f32 %v2589, %v2825
    %v2827 = vpop.f32.mrb[0].mxu0
    %2828 = vdwg.mxu0
    %v2829 = vsel %vm368, %v2826, -inf
    %2830 = vmax.xlane.f32.xlu0 %v2829
    %v2831 = vpop.xlane.xlu0 %2830
    %v2832 = vsub.f32 %v2826, %v2831
    %v2833 = vmul.f32 %v2832, 1.442695
    %v2834 = vpow.pop %v2833
    %v2835 = vsel %vm368, %v2834, 0.0
    %2836 = vadd.xlane.f32.xlu0 %v2835
    %v2837 = vpop.xlane.xlu0 %2836
    %v2838 = vrcp.pop %v2837
    %v2839 = vmul.f32 %v2834, %v2838
    %2841 = vrot.lane.b32.xlu0 %v2577, 120
    %v2842 = vpop.permute.xlu0 %2841
    %v2845 = vsel %vm368, %v2839, 0
    %2847 = vmatprep.subr.mxu0 0.0
    %2848 = vmatpush1.msra.mxu0 %v2842
    %2849 = vmatprep.subr.mxu0 0.0
    %2850 = vmatpush1.msra.mxu0 0.0
    %2851 = vmatprep.subr.mxu0 0.0
    %2852 = vmatpush1.msra.mxu0 0.0
    %2853 = vmatprep.subr.mxu0 0.0
    %2854 = vmatpush1.msra.mxu0 0.0
    %2855 = vmatprep.subr.mxu0 0.0
    %2856 = vmatpush1.msra.mxu0 0.0
    %2857 = vmatprep.subr.mxu0 0.0
    %2858 = vmatpush1.msra.mxu0 0.0
    %2859 = vmatprep.subr.mxu0 0.0
    %2860 = vmatpush1.msra.mxu0 0.0
    %2861 = vmatprep.subr.mxu0 0.0
    %2862 = vmatpush1.msra.mxu0 0.0
    %2863 = vmatprep.subr.mxu0 0.0
    %2864 = vmatpush1.msra.mxu0 0.0
    %2865 = vmatprep.subr.mxu0 0.0
    %2866 = vmatpush1.msra.mxu0 0.0
    %2867 = vmatprep.subr.mxu0 0.0
    %2868 = vmatpush1.msra.mxu0 0.0
    %2869 = vmatprep.subr.mxu0 0.0
    %2870 = vmatpush1.msra.mxu0 0.0
    %2871 = vmatprep.subr.mxu0 0.0
    %2872 = vmatpush1.msra.mxu0 0.0
    %2873 = vmatprep.subr.mxu0 0.0
    %2874 = vmatpush1.msra.mxu0 0.0
    %2875 = vmatprep.subr.mxu0 0.0
    %2876 = vmatpush1.msra.mxu0 0.0
    %2877 = vmatprep.subr.mxu0 0.0
    %2878 = vmatpush1.msra.mxu0 0.0
    %2879 = vmatprep.subr.mxu0 0.0
    %2880 = vmatpush1.msra.mxu0 0.0
    %2881 = vmatprep.subr.mxu0 0.0
    %2882 = vmatpush1.msra.mxu0 0.0
    %2883 = vmatprep.subr.mxu0 0.0
    %2884 = vmatpush1.msra.mxu0 0.0
    %2885 = vmatprep.subr.mxu0 0.0
    %2886 = vmatpush1.msra.mxu0 0.0
    %2887 = vmatprep.subr.mxu0 0.0
    %2888 = vmatpush1.msra.mxu0 0.0
    %2889 = vmatprep.subr.mxu0 0.0
    %2890 = vmatpush1.msra.mxu0 0.0
    %2891 = vmatprep.subr.mxu0 0.0
    %2892 = vmatpush1.msra.mxu0 0.0
    %2893 = vmatprep.subr.mxu0 0.0
    %2894 = vmatpush1.msra.mxu0 0.0
    %2895 = vmatprep.subr.mxu0 0.0
    %2896 = vmatpush1.msra.mxu0 0.0
    %2897 = vmatprep.subr.mxu0 0.0
    %2898 = vmatpush1.msra.mxu0 0.0
    %2899 = vmatprep.subr.mxu0 0.0
    %2900 = vmatpush1.msra.mxu0 0.0
    %2901 = vmatprep.subr.mxu0 0.0
    %2902 = vmatpush1.msra.mxu0 0.0
    %2903 = vmatprep.subr.mxu0 0.0
    %2904 = vmatpush1.msra.mxu0 0.0
    %2905 = vmatprep.subr.mxu0 0.0
    %2906 = vmatpush1.msra.mxu0 0.0
    %2907 = vmatprep.subr.mxu0 0.0
    %2908 = vmatpush1.msra.mxu0 0.0
    %2909 = vmatprep.subr.mxu0 0.0
    %2910 = vmatpush1.msra.mxu0 0.0
    %2911 = vmatprep.mubr.f32.mxu0 0.0
    %2912 = vmatmul.mubr.f32.gmra.mrb[0].mxu0 %v2845
    %v2913 = vpop.f32.mrb[0].mxu0
    %v2914 = vadd.f32 0.0, %v2913
    %v2915 = vpop.f32.mrb[0].mxu0
    %2916 = vdwg.mxu0
    %v2918 = vsel %vm368, %v2914, 0
    %2920 = vmatprep.subr.mxu0 0.0
    %2921 = vmatpush1.msra.mxu0 %v2333
    %2922 = vmatprep.subr.mxu0 0.0
    %2923 = vmatpush1.msra.mxu0 0.0
    %2924 = vmatprep.subr.mxu0 0.0
    %2925 = vmatpush1.msra.mxu0 0.0
    %2926 = vmatprep.subr.mxu0 0.0
    %2927 = vmatpush1.msra.mxu0 0.0
    %2928 = vmatprep.subr.mxu0 0.0
    %2929 = vmatpush1.msra.mxu0 0.0
    %2930 = vmatprep.subr.mxu0 0.0
    %2931 = vmatpush1.msra.mxu0 0.0
    %2932 = vmatprep.subr.mxu0 0.0
    %2933 = vmatpush1.msra.mxu0 0.0
    %2934 = vmatprep.subr.mxu0 0.0
    %2935 = vmatpush1.msra.mxu0 0.0
    %2936 = vmatprep.subr.mxu0 0.0
    %2937 = vmatpush1.msra.mxu0 0.0
    %2938 = vmatprep.subr.mxu0 0.0
    %2939 = vmatpush1.msra.mxu0 0.0
    %2940 = vmatprep.subr.mxu0 0.0
    %2941 = vmatpush1.msra.mxu0 0.0
    %2942 = vmatprep.subr.mxu0 0.0
    %2943 = vmatpush1.msra.mxu0 0.0
    %2944 = vmatprep.subr.mxu0 0.0
    %2945 = vmatpush1.msra.mxu0 0.0
    %2946 = vmatprep.subr.mxu0 0.0
    %2947 = vmatpush1.msra.mxu0 0.0
    %2948 = vmatprep.subr.mxu0 0.0
    %2949 = vmatpush1.msra.mxu0 0.0
    %2950 = vmatprep.subr.mxu0 0.0
    %2951 = vmatpush1.msra.mxu0 0.0
    %2952 = vmatprep.subr.mxu0 0.0
    %2953 = vmatpush1.msra.mxu0 0.0
    %2954 = vmatprep.subr.mxu0 0.0
    %2955 = vmatpush1.msra.mxu0 0.0
    %2956 = vmatprep.subr.mxu0 0.0
    %2957 = vmatpush1.msra.mxu0 0.0
    %2958 = vmatprep.subr.mxu0 0.0
    %2959 = vmatpush1.msra.mxu0 0.0
    %2960 = vmatprep.subr.mxu0 0.0
    %2961 = vmatpush1.msra.mxu0 0.0
    %2962 = vmatprep.subr.mxu0 0.0
    %2963 = vmatpush1.msra.mxu0 0.0
    %2964 = vmatprep.subr.mxu0 0.0
    %2965 = vmatpush1.msra.mxu0 0.0
    %2966 = vmatprep.subr.mxu0 0.0
    %2967 = vmatpush1.msra.mxu0 0.0
    %2968 = vmatprep.subr.mxu0 0.0
    %2969 = vmatpush1.msra.mxu0 0.0
    %2970 = vmatprep.subr.mxu0 0.0
    %2971 = vmatpush1.msra.mxu0 0.0
    %2972 = vmatprep.subr.mxu0 0.0
    %2973 = vmatpush1.msra.mxu0 0.0
    %2974 = vmatprep.subr.mxu0 0.0
    %2975 = vmatpush1.msra.mxu0 0.0
    %2976 = vmatprep.subr.mxu0 0.0
    %2977 = vmatpush1.msra.mxu0 0.0
    %2978 = vmatprep.subr.mxu0 0.0
    %2979 = vmatpush1.msra.mxu0 0.0
    %2980 = vmatprep.subr.mxu0 0.0
    %2981 = vmatpush1.msra.mxu0 0.0
    %2982 = vmatprep.subr.mxu0 0.0
    %2983 = vmatpush1.msra.mxu0 0.0
    %2984 = vmatprep.mubr.f32.mxu0 0.0
    %2985 = vmatmul.mubr.f32.gmra.mrb[0].mxu0 %v2918
    %v2986 = vpop.f32.mrb[0].mxu0
    %v2987 = vadd.f32 0.0, %v2986
    %v2988 = vpop.f32.mrb[0].mxu0
    %2989 = vdwg.mxu0
    %v2991 = vsel %vm368, %v2748, 0
    %2993 = vmatprep.subr.mxu0 0.0
    %2994 = vmatpush1.msra.mxu0 %v2332
    %2995 = vmatprep.subr.mxu0 0.0
    %2996 = vmatpush1.msra.mxu0 0.0
    %2997 = vmatprep.subr.mxu0 0.0
    %2998 = vmatpush1.msra.mxu0 0.0
    %2999 = vmatprep.subr.mxu0 0.0
    %3000 = vmatpush1.msra.mxu0 0.0
    %3001 = vmatprep.subr.mxu0 0.0
    %3002 = vmatpush1.msra.mxu0 0.0
    %3003 = vmatprep.subr.mxu0 0.0
    %3004 = vmatpush1.msra.mxu0 0.0
    %3005 = vmatprep.subr.mxu0 0.0
    %3006 = vmatpush1.msra.mxu0 0.0
    %3007 = vmatprep.subr.mxu0 0.0
    %3008 = vmatpush1.msra.mxu0 0.0
    %3009 = vmatprep.subr.mxu0 0.0
    %3010 = vmatpush1.msra.mxu0 0.0
    %3011 = vmatprep.subr.mxu0 0.0
    %3012 = vmatpush1.msra.mxu0 0.0
    %3013 = vmatprep.subr.mxu0 0.0
    %3014 = vmatpush1.msra.mxu0 0.0
    %3015 = vmatprep.subr.mxu0 0.0
    %3016 = vmatpush1.msra.mxu0 0.0
    %3017 = vmatprep.subr.mxu0 0.0
    %3018 = vmatpush1.msra.mxu0 0.0
    %3019 = vmatprep.subr.mxu0 0.0
    %3020 = vmatpush1.msra.mxu0 0.0
    %3021 = vmatprep.subr.mxu0 0.0
    %3022 = vmatpush1.msra.mxu0 0.0
    %3023 = vmatprep.subr.mxu0 0.0
    %3024 = vmatpush1.msra.mxu0 0.0
    %3025 = vmatprep.subr.mxu0 0.0
    %3026 = vmatpush1.msra.mxu0 0.0
    %3027 = vmatprep.subr.mxu0 0.0
    %3028 = vmatpush1.msra.mxu0 0.0
    %3029 = vmatprep.subr.mxu0 0.0
    %3030 = vmatpush1.msra.mxu0 0.0
    %3031 = vmatprep.subr.mxu0 0.0
    %3032 = vmatpush1.msra.mxu0 0.0
    %3033 = vmatprep.subr.mxu0 0.0
    %3034 = vmatpush1.msra.mxu0 0.0
    %3035 = vmatprep.subr.mxu0 0.0
    %3036 = vmatpush1.msra.mxu0 0.0
    %3037 = vmatprep.subr.mxu0 0.0
    %3038 = vmatpush1.msra.mxu0 0.0
    %3039 = vmatprep.subr.mxu0 0.0
    %3040 = vmatpush1.msra.mxu0 0.0
    %3041 = vmatprep.subr.mxu0 0.0
    %3042 = vmatpush1.msra.mxu0 0.0
    %3043 = vmatprep.subr.mxu0 0.0
    %3044 = vmatpush1.msra.mxu0 0.0
    %3045 = vmatprep.subr.mxu0 0.0
    %3046 = vmatpush1.msra.mxu0 0.0
    %3047 = vmatprep.subr.mxu0 0.0
    %3048 = vmatpush1.msra.mxu0 0.0
    %3049 = vmatprep.subr.mxu0 0.0
    %3050 = vmatpush1.msra.mxu0 0.0
    %3051 = vmatprep.subr.mxu0 0.0
    %3052 = vmatpush1.msra.mxu0 0.0
    %3053 = vmatprep.subr.mxu0 0.0
    %3054 = vmatpush1.msra.mxu0 0.0
    %3055 = vmatprep.subr.mxu0 0.0
    %3056 = vmatpush1.msra.mxu0 0.0
    %3057 = vmatprep.mubr.f32.mxu0 0.0
    %3058 = vmatmul.mubr.f32.gmra.mrb[0].mxu0 %v2991
    %v3059 = vpop.f32.mrb[0].mxu0
    %v3060 = vadd.f32 %v2987, %v3059
    %v3061 = vpop.f32.mrb[0].mxu0
    %3062 = vdwg.mxu0
    %3063 = vrot.lane.b32.xlu0 %v2413, 112
    %v3064 = vpop.permute.xlu0 %3063
    %3065 = vrot.lane.b32.xlu0 %v2498, 112
    %v3066 = vpop.permute.xlu0 %3065
    %v3067 = vsel %vm368, %v3064, 0
    %v3069 = vsel %vm368, %v3066, 0
    %3071 = vmatprep.subr.mxu0 0.0
    %3072 = vmatpush1.xpose.msra.mxu0 %v3069
    %3073 = vmatprep.subr.mxu0 0.0
    %3074 = vmatpush1.xpose.msra.mxu0 0.0
    %3075 = vmatprep.subr.mxu0 0.0
    %3076 = vmatpush1.xpose.msra.mxu0 0.0
    %3077 = vmatprep.subr.mxu0 0.0
    %3078 = vmatpush1.xpose.msra.mxu0 0.0
    %3079 = vmatprep.subr.mxu0 0.0
    %3080 = vmatpush1.xpose.msra.mxu0 0.0
    %3081 = vmatprep.subr.mxu0 0.0
    %3082 = vmatpush1.xpose.msra.mxu0 0.0
    %3083 = vmatprep.subr.mxu0 0.0
    %3084 = vmatpush1.xpose.msra.mxu0 0.0
    %3085 = vmatprep.subr.mxu0 0.0
    %3086 = vmatpush1.xpose.msra.mxu0 0.0
    %3087 = vmatprep.subr.mxu0 0.0
    %3088 = vmatpush1.xpose.msra.mxu0 0.0
    %3089 = vmatprep.subr.mxu0 0.0
    %3090 = vmatpush1.xpose.msra.mxu0 0.0
    %3091 = vmatprep.subr.mxu0 0.0
    %3092 = vmatpush1.xpose.msra.mxu0 0.0
    %3093 = vmatprep.subr.mxu0 0.0
    %3094 = vmatpush1.xpose.msra.mxu0 0.0
    %3095 = vmatprep.subr.mxu0 0.0
    %3096 = vmatpush1.xpose.msra.mxu0 0.0
    %3097 = vmatprep.subr.mxu0 0.0
    %3098 = vmatpush1.xpose.msra.mxu0 0.0
    %3099 = vmatprep.subr.mxu0 0.0
    %3100 = vmatpush1.xpose.msra.mxu0 0.0
    %3101 = vmatprep.subr.mxu0 0.0
    %3102 = vmatpush1.xpose.msra.mxu0 0.0
    %3103 = vmatprep.subr.mxu0 0.0
    %3104 = vmatpush1.xpose.msra.mxu0 0.0
    %3105 = vmatprep.subr.mxu0 0.0
    %3106 = vmatpush1.xpose.msra.mxu0 0.0
    %3107 = vmatprep.subr.mxu0 0.0
    %3108 = vmatpush1.xpose.msra.mxu0 0.0
    %3109 = vmatprep.subr.mxu0 0.0
    %3110 = vmatpush1.xpose.msra.mxu0 0.0
    %3111 = vmatprep.subr.mxu0 0.0
    %3112 = vmatpush1.xpose.msra.mxu0 0.0
    %3113 = vmatprep.subr.mxu0 0.0
    %3114 = vmatpush1.xpose.msra.mxu0 0.0
    %3115 = vmatprep.subr.mxu0 0.0
    %3116 = vmatpush1.xpose.msra.mxu0 0.0
    %3117 = vmatprep.subr.mxu0 0.0
    %3118 = vmatpush1.xpose.msra.mxu0 0.0
    %3119 = vmatprep.subr.mxu0 0.0
    %3120 = vmatpush1.xpose.msra.mxu0 0.0
    %3121 = vmatprep.subr.mxu0 0.0
    %3122 = vmatpush1.xpose.msra.mxu0 0.0
    %3123 = vmatprep.subr.mxu0 0.0
    %3124 = vmatpush1.xpose.msra.mxu0 0.0
    %3125 = vmatprep.subr.mxu0 0.0
    %3126 = vmatpush1.xpose.msra.mxu0 0.0
    %3127 = vmatprep.subr.mxu0 0.0
    %3128 = vmatpush1.xpose.msra.mxu0 0.0
    %3129 = vmatprep.subr.mxu0 0.0
    %3130 = vmatpush1.xpose.msra.mxu0 0.0
    %3131 = vmatprep.subr.mxu0 0.0
    %3132 = vmatpush1.xpose.msra.mxu0 0.0
    %3133 = vmatprep.subr.mxu0 0.0
    %3134 = vmatpush1.xpose.msra.mxu0 0.0
    %3135 = vmatprep.mubr.f32.mxu0 0.0
    %3136 = vmatmul.mubr.f32.gmra.mrb[0].mxu0 %v3067
    %v3137 = vpop.f32.mrb[0].mxu0
    %v3138 = vadd.f32 %v2589, %v3137
    %v3139 = vpop.f32.mrb[0].mxu0
    %3140 = vdwg.mxu0
    %v3141 = vsel %vm368, %v3138, -inf
    %3142 = vmax.xlane.f32.xlu0 %v3141
    %v3143 = vpop.xlane.xlu0 %3142
    %v3144 = vsub.f32 %v3138, %v3143
    %v3145 = vmul.f32 %v3144, 1.442695
    %v3146 = vpow.pop %v3145
    %v3147 = vsel %vm368, %v3146, 0.0
    %3148 = vadd.xlane.f32.xlu0 %v3147
    %v3149 = vpop.xlane.xlu0 %3148
    %v3150 = vrcp.pop %v3149
    %v3151 = vmul.f32 %v3146, %v3150
    %3152 = vrot.lane.b32.xlu0 %v2577, 112
    %v3153 = vpop.permute.xlu0 %3152
    %v3156 = vsel %vm368, %v3151, 0
    %3158 = vmatprep.subr.mxu0 0.0
    %3159 = vmatpush1.msra.mxu0 %v3153
    %3160 = vmatprep.subr.mxu0 0.0
    %3161 = vmatpush1.msra.mxu0 0.0
    %3162 = vmatprep.subr.mxu0 0.0
    %3163 = vmatpush1.msra.mxu0 0.0
    %3164 = vmatprep.subr.mxu0 0.0
    %3165 = vmatpush1.msra.mxu0 0.0
    %3166 = vmatprep.subr.mxu0 0.0
    %3167 = vmatpush1.msra.mxu0 0.0
    %3168 = vmatprep.subr.mxu0 0.0
    %3169 = vmatpush1.msra.mxu0 0.0
    %3170 = vmatprep.subr.mxu0 0.0
    %3171 = vmatpush1.msra.mxu0 0.0
    %3172 = vmatprep.subr.mxu0 0.0
    %3173 = vmatpush1.msra.mxu0 0.0
    %3174 = vmatprep.subr.mxu0 0.0
    %3175 = vmatpush1.msra.mxu0 0.0
    %3176 = vmatprep.subr.mxu0 0.0
    %3177 = vmatpush1.msra.mxu0 0.0
    %3178 = vmatprep.subr.mxu0 0.0
    %3179 = vmatpush1.msra.mxu0 0.0
    %3180 = vmatprep.subr.mxu0 0.0
    %3181 = vmatpush1.msra.mxu0 0.0
    %3182 = vmatprep.subr.mxu0 0.0
    %3183 = vmatpush1.msra.mxu0 0.0
    %3184 = vmatprep.subr.mxu0 0.0
    %3185 = vmatpush1.msra.mxu0 0.0
    %3186 = vmatprep.subr.mxu0 0.0
    %3187 = vmatpush1.msra.mxu0 0.0
    %3188 = vmatprep.subr.mxu0 0.0
    %3189 = vmatpush1.msra.mxu0 0.0
    %3190 = vmatprep.subr.mxu0 0.0
    %3191 = vmatpush1.msra.mxu0 0.0
    %3192 = vmatprep.subr.mxu0 0.0
    %3193 = vmatpush1.msra.mxu0 0.0
    %3194 = vmatprep.subr.mxu0 0.0
    %3195 = vmatpush1.msra.mxu0 0.0
    %3196 = vmatprep.subr.mxu0 0.0
    %3197 = vmatpush1.msra.mxu0 0.0
    %3198 = vmatprep.subr.mxu0 0.0
    %3199 = vmatpush1.msra.mxu0 0.0
    %3200 = vmatprep.subr.mxu0 0.0
    %3201 = vmatpush1.msra.mxu0 0.0
    %3202 = vmatprep.subr.mxu0 0.0
    %3203 = vmatpush1.msra.mxu0 0.0
    %3204 = vmatprep.subr.mxu0 0.0
    %3205 = vmatpush1.msra.mxu0 0.0
    %3206 = vmatprep.subr.mxu0 0.0
    %3207 = vmatpush1.msra.mxu0 0.0
    %3208 = vmatprep.subr.mxu0 0.0
    %3209 = vmatpush1.msra.mxu0 0.0
    %3210 = vmatprep.subr.mxu0 0.0
    %3211 = vmatpush1.msra.mxu0 0.0
    %3212 = vmatprep.subr.mxu0 0.0
    %3213 = vmatpush1.msra.mxu0 0.0
    %3214 = vmatprep.subr.mxu0 0.0
    %3215 = vmatpush1.msra.mxu0 0.0
    %3216 = vmatprep.subr.mxu0 0.0
    %3217 = vmatpush1.msra.mxu0 0.0
    %3218 = vmatprep.subr.mxu0 0.0
    %3219 = vmatpush1.msra.mxu0 0.0
    %3220 = vmatprep.subr.mxu0 0.0
    %3221 = vmatpush1.msra.mxu0 0.0
    %3222 = vmatprep.mubr.f32.mxu0 0.0
    %3223 = vmatmul.mubr.f32.gmra.mrb[0].mxu0 %v3156
    %v3224 = vpop.f32.mrb[0].mxu0
    %v3225 = vadd.f32 0.0, %v3224
    %v3226 = vpop.f32.mrb[0].mxu0
    %3227 = vdwg.mxu0
    %v3229 = vsel %vm368, %v3225, 0
    %3231 = vmatprep.subr.mxu0 0.0
    %3232 = vmatpush1.msra.mxu0 %v2334
    %3233 = vmatprep.subr.mxu0 0.0
    %3234 = vmatpush1.msra.mxu0 0.0
    %3235 = vmatprep.subr.mxu0 0.0
    %3236 = vmatpush1.msra.mxu0 0.0
    %3237 = vmatprep.subr.mxu0 0.0
    %3238 = vmatpush1.msra.mxu0 0.0
    %3239 = vmatprep.subr.mxu0 0.0
    %3240 = vmatpush1.msra.mxu0 0.0
    %3241 = vmatprep.subr.mxu0 0.0
    %3242 = vmatpush1.msra.mxu0 0.0
    %3243 = vmatprep.subr.mxu0 0.0
    %3244 = vmatpush1.msra.mxu0 0.0
    %3245 = vmatprep.subr.mxu0 0.0
    %3246 = vmatpush1.msra.mxu0 0.0
    %3247 = vmatprep.subr.mxu0 0.0
    %3248 = vmatpush1.msra.mxu0 0.0
    %3249 = vmatprep.subr.mxu0 0.0
    %3250 = vmatpush1.msra.mxu0 0.0
    %3251 = vmatprep.subr.mxu0 0.0
    %3252 = vmatpush1.msra.mxu0 0.0
    %3253 = vmatprep.subr.mxu0 0.0
    %3254 = vmatpush1.msra.mxu0 0.0
    %3255 = vmatprep.subr.mxu0 0.0
    %3256 = vmatpush1.msra.mxu0 0.0
    %3257 = vmatprep.subr.mxu0 0.0
    %3258 = vmatpush1.msra.mxu0 0.0
    %3259 = vmatprep.subr.mxu0 0.0
    %3260 = vmatpush1.msra.mxu0 0.0
    %3261 = vmatprep.subr.mxu0 0.0
    %3262 = vmatpush1.msra.mxu0 0.0
    %3263 = vmatprep.subr.mxu0 0.0
    %3264 = vmatpush1.msra.mxu0 0.0
    %3265 = vmatprep.subr.mxu0 0.0
    %3266 = vmatpush1.msra.mxu0 0.0
    %3267 = vmatprep.subr.mxu0 0.0
    %3268 = vmatpush1.msra.mxu0 0.0
    %3269 = vmatprep.subr.mxu0 0.0
    %3270 = vmatpush1.msra.mxu0 0.0
    %3271 = vmatprep.subr.mxu0 0.0
    %3272 = vmatpush1.msra.mxu0 0.0
    %3273 = vmatprep.subr.mxu0 0.0
    %3274 = vmatpush1.msra.mxu0 0.0
    %3275 = vmatprep.subr.mxu0 0.0
    %3276 = vmatpush1.msra.mxu0 0.0
    %3277 = vmatprep.subr.mxu0 0.0
    %3278 = vmatpush1.msra.mxu0 0.0
    %3279 = vmatprep.subr.mxu0 0.0
    %3280 = vmatpush1.msra.mxu0 0.0
    %3281 = vmatprep.subr.mxu0 0.0
    %3282 = vmatpush1.msra.mxu0 0.0
    %3283 = vmatprep.subr.mxu0 0.0
    %3284 = vmatpush1.msra.mxu0 0.0
    %3285 = vmatprep.subr.mxu0 0.0
    %3286 = vmatpush1.msra.mxu0 0.0
    %3287 = vmatprep.subr.mxu0 0.0
    %3288 = vmatpush1.msra.mxu0 0.0
    %3289 = vmatprep.subr.mxu0 0.0
    %3290 = vmatpush1.msra.mxu0 0.0
    %3291 = vmatprep.subr.mxu0 0.0
    %3292 = vmatpush1.msra.mxu0 0.0
    %3293 = vmatprep.subr.mxu0 0.0
    %3294 = vmatpush1.msra.mxu0 0.0
    %3295 = vmatprep.mubr.f32.mxu0 0.0
    %3296 = vmatmul.mubr.f32.gmra.mrb[0].mxu0 %v3229
    %v3297 = vpop.f32.mrb[0].mxu0
    %v3298 = vadd.f32 0.0, %v3297
    %v3299 = vpop.f32.mrb[0].mxu0
    %3300 = vdwg.mxu0
    %v3301 = vadd.f32 %v3060, %v3298
    %3302 = vrot.lane.b32.xlu0 %v2413, 104
    %v3303 = vpop.permute.xlu0 %3302
    %3304 = vrot.lane.b32.xlu0 %v2498, 104
    %v3305 = vpop.permute.xlu0 %3304
    %v3306 = vsel %vm368, %v3303, 0
    %v3308 = vsel %vm368, %v3305, 0
    %3310 = vmatprep.subr.mxu0 0.0
    %3311 = vmatpush1.xpose.msra.mxu0 %v3308
    %3312 = vmatprep.subr.mxu0 0.0
    %3313 = vmatpush1.xpose.msra.mxu0 0.0
    %3314 = vmatprep.subr.mxu0 0.0
    %3315 = vmatpush1.xpose.msra.mxu0 0.0
    %3316 = vmatprep.subr.mxu0 0.0
    %3317 = vmatpush1.xpose.msra.mxu0 0.0
    %3318 = vmatprep.subr.mxu0 0.0
    %3319 = vmatpush1.xpose.msra.mxu0 0.0
    %3320 = vmatprep.subr.mxu0 0.0
    %3321 = vmatpush1.xpose.msra.mxu0 0.0
    %3322 = vmatprep.subr.mxu0 0.0
    %3323 = vmatpush1.xpose.msra.mxu0 0.0
    %3324 = vmatprep.subr.mxu0 0.0
    %3325 = vmatpush1.xpose.msra.mxu0 0.0
    %3326 = vmatprep.subr.mxu0 0.0
    %3327 = vmatpush1.xpose.msra.mxu0 0.0
    %3328 = vmatprep.subr.mxu0 0.0
    %3329 = vmatpush1.xpose.msra.mxu0 0.0
    %3330 = vmatprep.subr.mxu0 0.0
    %3331 = vmatpush1.xpose.msra.mxu0 0.0
    %3332 = vmatprep.subr.mxu0 0.0
    %3333 = vmatpush1.xpose.msra.mxu0 0.0
    %3334 = vmatprep.subr.mxu0 0.0
    %3335 = vmatpush1.xpose.msra.mxu0 0.0
    %3336 = vmatprep.subr.mxu0 0.0
    %3337 = vmatpush1.xpose.msra.mxu0 0.0
    %3338 = vmatprep.subr.mxu0 0.0
    %3339 = vmatpush1.xpose.msra.mxu0 0.0
    %3340 = vmatprep.subr.mxu0 0.0
    %3341 = vmatpush1.xpose.msra.mxu0 0.0
    %3342 = vmatprep.subr.mxu0 0.0
    %3343 = vmatpush1.xpose.msra.mxu0 0.0
    %3344 = vmatprep.subr.mxu0 0.0
    %3345 = vmatpush1.xpose.msra.mxu0 0.0
    %3346 = vmatprep.subr.mxu0 0.0
    %3347 = vmatpush1.xpose.msra.mxu0 0.0
    %3348 = vmatprep.subr.mxu0 0.0
    %3349 = vmatpush1.xpose.msra.mxu0 0.0
    %3350 = vmatprep.subr.mxu0 0.0
    %3351 = vmatpush1.xpose.msra.mxu0 0.0
    %3352 = vmatprep.subr.mxu0 0.0
    %3353 = vmatpush1.xpose.msra.mxu0 0.0
    %3354 = vmatprep.subr.mxu0 0.0
    %3355 = vmatpush1.xpose.msra.mxu0 0.0
    %3356 = vmatprep.subr.mxu0 0.0
    %3357 = vmatpush1.xpose.msra.mxu0 0.0
    %3358 = vmatprep.subr.mxu0 0.0
    %3359 = vmatpush1.xpose.msra.mxu0 0.0
    %3360 = vmatprep.subr.mxu0 0.0
    %3361 = vmatpush1.xpose.msra.mxu0 0.0
    %3362 = vmatprep.subr.mxu0 0.0
    %3363 = vmatpush1.xpose.msra.mxu0 0.0
    %3364 = vmatprep.subr.mxu0 0.0
    %3365 = vmatpush1.xpose.msra.mxu0 0.0
    %3366 = vmatprep.subr.mxu0 0.0
    %3367 = vmatpush1.xpose.msra.mxu0 0.0
    %3368 = vmatprep.subr.mxu0 0.0
    %3369 = vmatpush1.xpose.msra.mxu0 0.0
    %3370 = vmatprep.subr.mxu0 0.0
    %3371 = vmatpush1.xpose.msra.mxu0 0.0
    %3372 = vmatprep.subr.mxu0 0.0
    %3373 = vmatpush1.xpose.msra.mxu0 0.0
    %3374 = vmatprep.mubr.f32.mxu0 0.0
    %3375 = vmatmul.mubr.f32.gmra.mrb[0].mxu0 %v3306
    %v3376 = vpop.f32.mrb[0].mxu0
    %v3377 = vadd.f32 %v2589, %v3376
    %v3378 = vpop.f32.mrb[0].mxu0
    %3379 = vdwg.mxu0
    %v3380 = vsel %vm368, %v3377, -inf
    %3381 = vmax.xlane.f32.xlu0 %v3380
    %v3382 = vpop.xlane.xlu0 %3381
    %v3383 = vsub.f32 %v3377, %v3382
    %v3384 = vmul.f32 %v3383, 1.442695
    %v3385 = vpow.pop %v3384
    %v3386 = vsel %vm368, %v3385, 0.0
    %3387 = vadd.xlane.f32.xlu0 %v3386
    %v3388 = vpop.xlane.xlu0 %3387
    %v3389 = vrcp.pop %v3388
    %v3390 = vmul.f32 %v3385, %v3389
    %3391 = vrot.lane.b32.xlu0 %v2577, 104
    %v3392 = vpop.permute.xlu0 %3391
    %v3395 = vsel %vm368, %v3390, 0
    %3397 = vmatprep.subr.mxu0 0.0
    %3398 = vmatpush1.msra.mxu0 %v3392
    %3399 = vmatprep.subr.mxu0 0.0
    %3400 = vmatpush1.msra.mxu0 0.0
    %3401 = vmatprep.subr.mxu0 0.0
    %3402 = vmatpush1.msra.mxu0 0.0
    %3403 = vmatprep.subr.mxu0 0.0
    %3404 = vmatpush1.msra.mxu0 0.0
    %3405 = vmatprep.subr.mxu0 0.0
    %3406 = vmatpush1.msra.mxu0 0.0
    %3407 = vmatprep.subr.mxu0 0.0
    %3408 = vmatpush1.msra.mxu0 0.0
    %3409 = vmatprep.subr.mxu0 0.0
    %3410 = vmatpush1.msra.mxu0 0.0
    %3411 = vmatprep.subr.mxu0 0.0
    %3412 = vmatpush1.msra.mxu0 0.0
    %3413 = vmatprep.subr.mxu0 0.0
    %3414 = vmatpush1.msra.mxu0 0.0
    %3415 = vmatprep.subr.mxu0 0.0
    %3416 = vmatpush1.msra.mxu0 0.0
    %3417 = vmatprep.subr.mxu0 0.0
    %3418 = vmatpush1.msra.mxu0 0.0
    %3419 = vmatprep.subr.mxu0 0.0
    %3420 = vmatpush1.msra.mxu0 0.0
    %3421 = vmatprep.subr.mxu0 0.0
    %3422 = vmatpush1.msra.mxu0 0.0
    %3423 = vmatprep.subr.mxu0 0.0
    %3424 = vmatpush1.msra.mxu0 0.0
    %3425 = vmatprep.subr.mxu0 0.0
    %3426 = vmatpush1.msra.mxu0 0.0
    %3427 = vmatprep.subr.mxu0 0.0
    %3428 = vmatpush1.msra.mxu0 0.0
    %3429 = vmatprep.subr.mxu0 0.0
    %3430 = vmatpush1.msra.mxu0 0.0
    %3431 = vmatprep.subr.mxu0 0.0
    %3432 = vmatpush1.msra.mxu0 0.0
    %3433 = vmatprep.subr.mxu0 0.0
    %3434 = vmatpush1.msra.mxu0 0.0
    %3435 = vmatprep.subr.mxu0 0.0
    %3436 = vmatpush1.msra.mxu0 0.0
    %3437 = vmatprep.subr.mxu0 0.0
    %3438 = vmatpush1.msra.mxu0 0.0
    %3439 = vmatprep.subr.mxu0 0.0
    %3440 = vmatpush1.msra.mxu0 0.0
    %3441 = vmatprep.subr.mxu0 0.0
    %3442 = vmatpush1.msra.mxu0 0.0
    %3443 = vmatprep.subr.mxu0 0.0
    %3444 = vmatpush1.msra.mxu0 0.0
    %3445 = vmatprep.subr.mxu0 0.0
    %3446 = vmatpush1.msra.mxu0 0.0
    %3447 = vmatprep.subr.mxu0 0.0
    %3448 = vmatpush1.msra.mxu0 0.0
    %3449 = vmatprep.subr.mxu0 0.0
    %3450 = vmatpush1.msra.mxu0 0.0
    %3451 = vmatprep.subr.mxu0 0.0
    %3452 = vmatpush1.msra.mxu0 0.0
    %3453 = vmatprep.subr.mxu0 0.0
    %3454 = vmatpush1.msra.mxu0 0.0
    %3455 = vmatprep.subr.mxu0 0.0
    %3456 = vmatpush1.msra.mxu0 0.0
    %3457 = vmatprep.subr.mxu0 0.0
    %3458 = vmatpush1.msra.mxu0 0.0
    %3459 = vmatprep.subr.mxu0 0.0
    %3460 = vmatpush1.msra.mxu0 0.0
    %3461 = vmatprep.mubr.f32.mxu0 0.0
    %3462 = vmatmul.mubr.f32.gmra.mrb[0].mxu0 %v3395
    %v3463 = vpop.f32.mrb[0].mxu0
    %v3464 = vadd.f32 0.0, %v3463
    %v3465 = vpop.f32.mrb[0].mxu0
    %3466 = vdwg.mxu0
    %v3468 = vsel %vm368, %v3464, 0
    %3470 = vmatprep.subr.mxu0 0.0
    %3471 = vmatpush1.msra.mxu0 %v2335
    %3472 = vmatprep.subr.mxu0 0.0
    %3473 = vmatpush1.msra.mxu0 0.0
    %3474 = vmatprep.subr.mxu0 0.0
    %3475 = vmatpush1.msra.mxu0 0.0
    %3476 = vmatprep.subr.mxu0 0.0
    %3477 = vmatpush1.msra.mxu0 0.0
    %3478 = vmatprep.subr.mxu0 0.0
    %3479 = vmatpush1.msra.mxu0 0.0
    %3480 = vmatprep.subr.mxu0 0.0
    %3481 = vmatpush1.msra.mxu0 0.0
    %3482 = vmatprep.subr.mxu0 0.0
    %3483 = vmatpush1.msra.mxu0 0.0
    %3484 = vmatprep.subr.mxu0 0.0
    %3485 = vmatpush1.msra.mxu0 0.0
    %3486 = vmatprep.subr.mxu0 0.0
    %3487 = vmatpush1.msra.mxu0 0.0
    %3488 = vmatprep.subr.mxu0 0.0
    %3489 = vmatpush1.msra.mxu0 0.0
    %3490 = vmatprep.subr.mxu0 0.0
    %3491 = vmatpush1.msra.mxu0 0.0
    %3492 = vmatprep.subr.mxu0 0.0
    %3493 = vmatpush1.msra.mxu0 0.0
    %3494 = vmatprep.subr.mxu0 0.0
    %3495 = vmatpush1.msra.mxu0 0.0
    %3496 = vmatprep.subr.mxu0 0.0
    %3497 = vmatpush1.msra.mxu0 0.0
    %3498 = vmatprep.subr.mxu0 0.0
    %3499 = vmatpush1.msra.mxu0 0.0
    %3500 = vmatprep.subr.mxu0 0.0
    %3501 = vmatpush1.msra.mxu0 0.0
    %3502 = vmatprep.subr.mxu0 0.0
    %3503 = vmatpush1.msra.mxu0 0.0
    %3504 = vmatprep.subr.mxu0 0.0
    %3505 = vmatpush1.msra.mxu0 0.0
    %3506 = vmatprep.subr.mxu0 0.0
    %3507 = vmatpush1.msra.mxu0 0.0
    %3508 = vmatprep.subr.mxu0 0.0
    %3509 = vmatpush1.msra.mxu0 0.0
    %3510 = vmatprep.subr.mxu0 0.0
    %3511 = vmatpush1.msra.mxu0 0.0
    %3512 = vmatprep.subr.mxu0 0.0
    %3513 = vmatpush1.msra.mxu0 0.0
    %3514 = vmatprep.subr.mxu0 0.0
    %3515 = vmatpush1.msra.mxu0 0.0
    %3516 = vmatprep.subr.mxu0 0.0
    %3517 = vmatpush1.msra.mxu0 0.0
    %3518 = vmatprep.subr.mxu0 0.0
    %3519 = vmatpush1.msra.mxu0 0.0
    %3520 = vmatprep.subr.mxu0 0.0
    %3521 = vmatpush1.msra.mxu0 0.0
    %3522 = vmatprep.subr.mxu0 0.0
    %3523 = vmatpush1.msra.mxu0 0.0
    %3524 = vmatprep.subr.mxu0 0.0
    %3525 = vmatpush1.msra.mxu0 0.0
    %3526 = vmatprep.subr.mxu0 0.0
    %3527 = vmatpush1.msra.mxu0 0.0
    %3528 = vmatprep.subr.mxu0 0.0
    %3529 = vmatpush1.msra.mxu0 0.0
    %3530 = vmatprep.subr.mxu0 0.0
    %3531 = vmatpush1.msra.mxu0 0.0
    %3532 = vmatprep.subr.mxu0 0.0
    %3533 = vmatpush1.msra.mxu0 0.0
    %3534 = vmatprep.mubr.f32.mxu0 0.0
    %3535 = vmatmul.mubr.f32.gmra.mrb[0].mxu0 %v3468
    %v3536 = vpop.f32.mrb[0].mxu0
    %v3537 = vadd.f32 0.0, %v3536
    %v3538 = vpop.f32.mrb[0].mxu0
    %3539 = vdwg.mxu0
    %v3540 = vadd.f32 %v3301, %v3537
    %v3542 = vlaneseq
    %v3543 = vshrl.u32 %v3542, 7
    %v3544 = vsub.s32 0, %v3543
    %v3545 = vrot.slane %v104, %v3544
    %v3548 = vsel %vm368, %v2418, 0
    %v3551 = vsel %vm368, %v2503, 0
    %3553 = vmatprep.subr.mxu0 0.0
    %3554 = vmatpush1.xpose.msra.mxu0 %v3551
    %3555 = vmatprep.subr.mxu0 0.0
    %3556 = vmatpush1.xpose.msra.mxu0 0.0
    %3557 = vmatprep.subr.mxu0 0.0
    %3558 = vmatpush1.xpose.msra.mxu0 0.0
    %3559 = vmatprep.subr.mxu0 0.0
    %3560 = vmatpush1.xpose.msra.mxu0 0.0
    %3561 = vmatprep.subr.mxu0 0.0
    %3562 = vmatpush1.xpose.msra.mxu0 0.0
    %3563 = vmatprep.subr.mxu0 0.0
    %3564 = vmatpush1.xpose.msra.mxu0 0.0
    %3565 = vmatprep.subr.mxu0 0.0
    %3566 = vmatpush1.xpose.msra.mxu0 0.0
    %3567 = vmatprep.subr.mxu0 0.0
    %3568 = vmatpush1.xpose.msra.mxu0 0.0
    %3569 = vmatprep.subr.mxu0 0.0
    %3570 = vmatpush1.xpose.msra.mxu0 0.0
    %3571 = vmatprep.subr.mxu0 0.0
    %3572 = vmatpush1.xpose.msra.mxu0 0.0
    %3573 = vmatprep.subr.mxu0 0.0
    %3574 = vmatpush1.xpose.msra.mxu0 0.0
    %3575 = vmatprep.subr.mxu0 0.0
    %3576 = vmatpush1.xpose.msra.mxu0 0.0
    %3577 = vmatprep.subr.mxu0 0.0
    %3578 = vmatpush1.xpose.msra.mxu0 0.0
    %3579 = vmatprep.subr.mxu0 0.0
    %3580 = vmatpush1.xpose.msra.mxu0 0.0
    %3581 = vmatprep.subr.mxu0 0.0
    %3582 = vmatpush1.xpose.msra.mxu0 0.0
    %3583 = vmatprep.subr.mxu0 0.0
    %3584 = vmatpush1.xpose.msra.mxu0 0.0
    %3585 = vmatprep.subr.mxu0 0.0
    %3586 = vmatpush1.xpose.msra.mxu0 0.0
    %3587 = vmatprep.subr.mxu0 0.0
    %3588 = vmatpush1.xpose.msra.mxu0 0.0
    %3589 = vmatprep.subr.mxu0 0.0
    %3590 = vmatpush1.xpose.msra.mxu0 0.0
    %3591 = vmatprep.subr.mxu0 0.0
    %3592 = vmatpush1.xpose.msra.mxu0 0.0
    %3593 = vmatprep.subr.mxu0 0.0
    %3594 = vmatpush1.xpose.msra.mxu0 0.0
    %3595 = vmatprep.subr.mxu0 0.0
    %3596 = vmatpush1.xpose.msra.mxu0 0.0
    %3597 = vmatprep.subr.mxu0 0.0
    %3598 = vmatpush1.xpose.msra.mxu0 0.0
    %3599 = vmatprep.subr.mxu0 0.0
    %3600 = vmatpush1.xpose.msra.mxu0 0.0
    %3601 = vmatprep.subr.mxu0 0.0
    %3602 = vmatpush1.xpose.msra.mxu0 0.0
    %3603 = vmatprep.subr.mxu0 0.0
    %3604 = vmatpush1.xpose.msra.mxu0 0.0
    %3605 = vmatprep.subr.mxu0 0.0
    %3606 = vmatpush1.xpose.msra.mxu0 0.0
    %3607 = vmatprep.subr.mxu0 0.0
    %3608 = vmatpush1.xpose.msra.mxu0 0.0
    %3609 = vmatprep.subr.mxu0 0.0
    %3610 = vmatpush1.xpose.msra.mxu0 0.0
    %3611 = vmatprep.subr.mxu0 0.0
    %3612 = vmatpush1.xpose.msra.mxu0 0.0
    %3613 = vmatprep.subr.mxu0 0.0
    %3614 = vmatpush1.xpose.msra.mxu0 0.0
    %3615 = vmatprep.subr.mxu0 0.0
    %3616 = vmatpush1.xpose.msra.mxu0 0.0
    %3617 = vmatprep.mubr.f32.mxu0 0.0
    %3618 = vmatmul.mubr.f32.gmra.mrb[0].mxu0 %v3548
    %v3619 = vpop.f32.mrb[0].mxu0
    %v3620 = vadd.f32 %v3545, %v3619
    %v3621 = vpop.f32.mrb[0].mxu0
    %3622 = vdwg.mxu0
    %v3623 = vsel %vm368, %v3620, -inf
    %3624 = vmax.xlane.f32.xlu0 %v3623
    %v3625 = vpop.xlane.xlu0 %3624
    %v3626 = vsub.f32 %v3620, %v3625
    %v3627 = vmul.f32 %v3626, 1.442695
    %v3628 = vpow.pop %v3627
    %v3629 = vsel %vm368, %v3628, 0.0
    %3630 = vadd.xlane.f32.xlu0 %v3629
    %v3631 = vpop.xlane.xlu0 %3630
    %v3632 = vrcp.pop %v3631
    %v3633 = vmul.f32 %v3628, %v3632
    %v3635 = vsel %vm368, %v3633, 0
    %3637 = vmatprep.subr.mxu0 0.0
    %3638 = vmatpush1.msra.mxu0 %v2582
    %3639 = vmatprep.subr.mxu0 0.0
    %3640 = vmatpush1.msra.mxu0 0.0
    %3641 = vmatprep.subr.mxu0 0.0
    %3642 = vmatpush1.msra.mxu0 0.0
    %3643 = vmatprep.subr.mxu0 0.0
    %3644 = vmatpush1.msra.mxu0 0.0
    %3645 = vmatprep.subr.mxu0 0.0
    %3646 = vmatpush1.msra.mxu0 0.0
    %3647 = vmatprep.subr.mxu0 0.0
    %3648 = vmatpush1.msra.mxu0 0.0
    %3649 = vmatprep.subr.mxu0 0.0
    %3650 = vmatpush1.msra.mxu0 0.0
    %3651 = vmatprep.subr.mxu0 0.0
    %3652 = vmatpush1.msra.mxu0 0.0
    %3653 = vmatprep.subr.mxu0 0.0
    %3654 = vmatpush1.msra.mxu0 0.0
    %3655 = vmatprep.subr.mxu0 0.0
    %3656 = vmatpush1.msra.mxu0 0.0
    %3657 = vmatprep.subr.mxu0 0.0
    %3658 = vmatpush1.msra.mxu0 0.0
    %3659 = vmatprep.subr.mxu0 0.0
    %3660 = vmatpush1.msra.mxu0 0.0
    %3661 = vmatprep.subr.mxu0 0.0
    %3662 = vmatpush1.msra.mxu0 0.0
    %3663 = vmatprep.subr.mxu0 0.0
    %3664 = vmatpush1.msra.mxu0 0.0
    %3665 = vmatprep.subr.mxu0 0.0
    %3666 = vmatpush1.msra.mxu0 0.0
    %3667 = vmatprep.subr.mxu0 0.0
    %3668 = vmatpush1.msra.mxu0 0.0
    %3669 = vmatprep.subr.mxu0 0.0
    %3670 = vmatpush1.msra.mxu0 0.0
    %3671 = vmatprep.subr.mxu0 0.0
    %3672 = vmatpush1.msra.mxu0 0.0
    %3673 = vmatprep.subr.mxu0 0.0
    %3674 = vmatpush1.msra.mxu0 0.0
    %3675 = vmatprep.subr.mxu0 0.0
    %3676 = vmatpush1.msra.mxu0 0.0
    %3677 = vmatprep.subr.mxu0 0.0
    %3678 = vmatpush1.msra.mxu0 0.0
    %3679 = vmatprep.subr.mxu0 0.0
    %3680 = vmatpush1.msra.mxu0 0.0
    %3681 = vmatprep.subr.mxu0 0.0
    %3682 = vmatpush1.msra.mxu0 0.0
    %3683 = vmatprep.subr.mxu0 0.0
    %3684 = vmatpush1.msra.mxu0 0.0
    %3685 = vmatprep.subr.mxu0 0.0
    %3686 = vmatpush1.msra.mxu0 0.0
    %3687 = vmatprep.subr.mxu0 0.0
    %3688 = vmatpush1.msra.mxu0 0.0
    %3689 = vmatprep.subr.mxu0 0.0
    %3690 = vmatpush1.msra.mxu0 0.0
    %3691 = vmatprep.subr.mxu0 0.0
    %3692 = vmatpush1.msra.mxu0 0.0
    %3693 = vmatprep.subr.mxu0 0.0
    %3694 = vmatpush1.msra.mxu0 0.0
    %3695 = vmatprep.subr.mxu0 0.0
    %3696 = vmatpush1.msra.mxu0 0.0
    %3697 = vmatprep.subr.mxu0 0.0
    %3698 = vmatpush1.msra.mxu0 0.0
    %3699 = vmatprep.subr.mxu0 0.0
    %3700 = vmatpush1.msra.mxu0 0.0
    %3701 = vmatprep.mubr.f32.mxu0 0.0
    %3702 = vmatmul.mubr.f32.gmra.mrb[0].mxu0 %v3635
    %v3703 = vpop.f32.mrb[0].mxu0
    %v3704 = vadd.f32 0.0, %v3703
    %v3705 = vpop.f32.mrb[0].mxu0
    %3706 = vdwg.mxu0
    %3707 = vrot.lane.b32.xlu0 %v2418, 120
    %v3708 = vpop.permute.xlu0 %3707
    %3709 = vrot.lane.b32.xlu0 %v2503, 120
    %v3710 = vpop.permute.xlu0 %3709
    %v3711 = vsel %vm368, %v3708, 0
    %v3713 = vsel %vm368, %v3710, 0
    %3715 = vmatprep.subr.mxu0 0.0
    %3716 = vmatpush1.xpose.msra.mxu0 %v3713
    %3717 = vmatprep.subr.mxu0 0.0
    %3718 = vmatpush1.xpose.msra.mxu0 0.0
    %3719 = vmatprep.subr.mxu0 0.0
    %3720 = vmatpush1.xpose.msra.mxu0 0.0
    %3721 = vmatprep.subr.mxu0 0.0
    %3722 = vmatpush1.xpose.msra.mxu0 0.0
    %3723 = vmatprep.subr.mxu0 0.0
    %3724 = vmatpush1.xpose.msra.mxu0 0.0
    %3725 = vmatprep.subr.mxu0 0.0
    %3726 = vmatpush1.xpose.msra.mxu0 0.0
    %3727 = vmatprep.subr.mxu0 0.0
    %3728 = vmatpush1.xpose.msra.mxu0 0.0
    %3729 = vmatprep.subr.mxu0 0.0
    %3730 = vmatpush1.xpose.msra.mxu0 0.0
    %3731 = vmatprep.subr.mxu0 0.0
    %3732 = vmatpush1.xpose.msra.mxu0 0.0
    %3733 = vmatprep.subr.mxu0 0.0
    %3734 = vmatpush1.xpose.msra.mxu0 0.0
    %3735 = vmatprep.subr.mxu0 0.0
    %3736 = vmatpush1.xpose.msra.mxu0 0.0
    %3737 = vmatprep.subr.mxu0 0.0
    %3738 = vmatpush1.xpose.msra.mxu0 0.0
    %3739 = vmatprep.subr.mxu0 0.0
    %3740 = vmatpush1.xpose.msra.mxu0 0.0
    %3741 = vmatprep.subr.mxu0 0.0
    %3742 = vmatpush1.xpose.msra.mxu0 0.0
    %3743 = vmatprep.subr.mxu0 0.0
    %3744 = vmatpush1.xpose.msra.mxu0 0.0
    %3745 = vmatprep.subr.mxu0 0.0
    %3746 = vmatpush1.xpose.msra.mxu0 0.0
    %3747 = vmatprep.subr.mxu0 0.0
    %3748 = vmatpush1.xpose.msra.mxu0 0.0
    %3749 = vmatprep.subr.mxu0 0.0
    %3750 = vmatpush1.xpose.msra.mxu0 0.0
    %3751 = vmatprep.subr.mxu0 0.0
    %3752 = vmatpush1.xpose.msra.mxu0 0.0
    %3753 = vmatprep.subr.mxu0 0.0
    %3754 = vmatpush1.xpose.msra.mxu0 0.0
    %3755 = vmatprep.subr.mxu0 0.0
    %3756 = vmatpush1.xpose.msra.mxu0 0.0
    %3757 = vmatprep.subr.mxu0 0.0
    %3758 = vmatpush1.xpose.msra.mxu0 0.0
    %3759 = vmatprep.subr.mxu0 0.0
    %3760 = vmatpush1.xpose.msra.mxu0 0.0
    %3761 = vmatprep.subr.mxu0 0.0
    %3762 = vmatpush1.xpose.msra.mxu0 0.0
    %3763 = vmatprep.subr.mxu0 0.0
    %3764 = vmatpush1.xpose.msra.mxu0 0.0
    %3765 = vmatprep.subr.mxu0 0.0
    %3766 = vmatpush1.xpose.msra.mxu0 0.0
    %3767 = vmatprep.subr.mxu0 0.0
    %3768 = vmatpush1.xpose.msra.mxu0 0.0
    %3769 = vmatprep.subr.mxu0 0.0
    %3770 = vmatpush1.xpose.msra.mxu0 0.0
    %3771 = vmatprep.subr.mxu0 0.0
    %3772 = vmatpush1.xpose.msra.mxu0 0.0
    %3773 = vmatprep.subr.mxu0 0.0
    %3774 = vmatpush1.xpose.msra.mxu0 0.0
    %3775 = vmatprep.subr.mxu0 0.0
    %3776 = vmatpush1.xpose.msra.mxu0 0.0
    %3777 = vmatprep.subr.mxu0 0.0
    %3778 = vmatpush1.xpose.msra.mxu0 0.0
    %3779 = vmatprep.mubr.f32.mxu0 0.0
    %3780 = vmatmul.mubr.f32.gmra.mrb[0].mxu0 %v3711
    %v3781 = vpop.f32.mrb[0].mxu0
    %v3782 = vadd.f32 %v3545, %v3781
    %v3783 = vpop.f32.mrb[0].mxu0
    %3784 = vdwg.mxu0
    %v3785 = vsel %vm368, %v3782, -inf
    %3786 = vmax.xlane.f32.xlu0 %v3785
    %v3787 = vpop.xlane.xlu0 %3786
    %v3788 = vsub.f32 %v3782, %v3787
    %v3789 = vmul.f32 %v3788, 1.442695
    %v3790 = vpow.pop %v3789
    %v3791 = vsel %vm368, %v3790, 0.0
    %3792 = vadd.xlane.f32.xlu0 %v3791
    %v3793 = vpop.xlane.xlu0 %3792
    %v3794 = vrcp.pop %v3793
    %v3795 = vmul.f32 %v3790, %v3794
    %3797 = vrot.lane.b32.xlu0 %v2582, 120
    %v3798 = vpop.permute.xlu0 %3797
    %v3801 = vsel %vm368, %v3795, 0
    %3803 = vmatprep.subr.mxu0 0.0
    %3804 = vmatpush1.msra.mxu0 %v3798
    %3805 = vmatprep.subr.mxu0 0.0
    %3806 = vmatpush1.msra.mxu0 0.0
    %3807 = vmatprep.subr.mxu0 0.0
    %3808 = vmatpush1.msra.mxu0 0.0
    %3809 = vmatprep.subr.mxu0 0.0
    %3810 = vmatpush1.msra.mxu0 0.0
    %3811 = vmatprep.subr.mxu0 0.0
    %3812 = vmatpush1.msra.mxu0 0.0
    %3813 = vmatprep.subr.mxu0 0.0
    %3814 = vmatpush1.msra.mxu0 0.0
    %3815 = vmatprep.subr.mxu0 0.0
    %3816 = vmatpush1.msra.mxu0 0.0
    %3817 = vmatprep.subr.mxu0 0.0
    %3818 = vmatpush1.msra.mxu0 0.0
    %3819 = vmatprep.subr.mxu0 0.0
    %3820 = vmatpush1.msra.mxu0 0.0
    %3821 = vmatprep.subr.mxu0 0.0
    %3822 = vmatpush1.msra.mxu0 0.0
    %3823 = vmatprep.subr.mxu0 0.0
    %3824 = vmatpush1.msra.mxu0 0.0
    %3825 = vmatprep.subr.mxu0 0.0
    %3826 = vmatpush1.msra.mxu0 0.0
    %3827 = vmatprep.subr.mxu0 0.0
    %3828 = vmatpush1.msra.mxu0 0.0
    %3829 = vmatprep.subr.mxu0 0.0
    %3830 = vmatpush1.msra.mxu0 0.0
    %3831 = vmatprep.subr.mxu0 0.0
    %3832 = vmatpush1.msra.mxu0 0.0
    %3833 = vmatprep.subr.mxu0 0.0
    %3834 = vmatpush1.msra.mxu0 0.0
    %3835 = vmatprep.subr.mxu0 0.0
    %3836 = vmatpush1.msra.mxu0 0.0
    %3837 = vmatprep.subr.mxu0 0.0
    %3838 = vmatpush1.msra.mxu0 0.0
    %3839 = vmatprep.subr.mxu0 0.0
    %3840 = vmatpush1.msra.mxu0 0.0
    %3841 = vmatprep.subr.mxu0 0.0
    %3842 = vmatpush1.msra.mxu0 0.0
    %3843 = vmatprep.subr.mxu0 0.0
    %3844 = vmatpush1.msra.mxu0 0.0
    %3845 = vmatprep.subr.mxu0 0.0
    %3846 = vmatpush1.msra.mxu0 0.0
    %3847 = vmatprep.subr.mxu0 0.0
    %3848 = vmatpush1.msra.mxu0 0.0
    %3849 = vmatprep.subr.mxu0 0.0
    %3850 = vmatpush1.msra.mxu0 0.0
    %3851 = vmatprep.subr.mxu0 0.0
    %3852 = vmatpush1.msra.mxu0 0.0
    %3853 = vmatprep.subr.mxu0 0.0
    %3854 = vmatpush1.msra.mxu0 0.0
    %3855 = vmatprep.subr.mxu0 0.0
    %3856 = vmatpush1.msra.mxu0 0.0
    %3857 = vmatprep.subr.mxu0 0.0
    %3858 = vmatpush1.msra.mxu0 0.0
    %3859 = vmatprep.subr.mxu0 0.0
    %3860 = vmatpush1.msra.mxu0 0.0
    %3861 = vmatprep.subr.mxu0 0.0
    %3862 = vmatpush1.msra.mxu0 0.0
    %3863 = vmatprep.subr.mxu0 0.0
    %3864 = vmatpush1.msra.mxu0 0.0
    %3865 = vmatprep.subr.mxu0 0.0
    %3866 = vmatpush1.msra.mxu0 0.0
    %3867 = vmatprep.mubr.f32.mxu0 0.0
    %3868 = vmatmul.mubr.f32.gmra.mrb[0].mxu0 %v3801
    %v3869 = vpop.f32.mrb[0].mxu0
    %v3870 = vadd.f32 0.0, %v3869
    %v3871 = vpop.f32.mrb[0].mxu0
    %3872 = vdwg.mxu0
    %v3874 = vsel %vm368, %v3870, 0
    %3876 = vmatprep.subr.mxu0 0.0
    %3877 = vmatpush1.msra.mxu0 %v2333
    %3878 = vmatprep.subr.mxu0 0.0
    %3879 = vmatpush1.msra.mxu0 0.0
    %3880 = vmatprep.subr.mxu0 0.0
    %3881 = vmatpush1.msra.mxu0 0.0
    %3882 = vmatprep.subr.mxu0 0.0
    %3883 = vmatpush1.msra.mxu0 0.0
    %3884 = vmatprep.subr.mxu0 0.0
    %3885 = vmatpush1.msra.mxu0 0.0
    %3886 = vmatprep.subr.mxu0 0.0
    %3887 = vmatpush1.msra.mxu0 0.0
    %3888 = vmatprep.subr.mxu0 0.0
    %3889 = vmatpush1.msra.mxu0 0.0
    %3890 = vmatprep.subr.mxu0 0.0
    %3891 = vmatpush1.msra.mxu0 0.0
    %3892 = vmatprep.subr.mxu0 0.0
    %3893 = vmatpush1.msra.mxu0 0.0
    %3894 = vmatprep.subr.mxu0 0.0
    %3895 = vmatpush1.msra.mxu0 0.0
    %3896 = vmatprep.subr.mxu0 0.0
    %3897 = vmatpush1.msra.mxu0 0.0
    %3898 = vmatprep.subr.mxu0 0.0
    %3899 = vmatpush1.msra.mxu0 0.0
    %3900 = vmatprep.subr.mxu0 0.0
    %3901 = vmatpush1.msra.mxu0 0.0
    %3902 = vmatprep.subr.mxu0 0.0
    %3903 = vmatpush1.msra.mxu0 0.0
    %3904 = vmatprep.subr.mxu0 0.0
    %3905 = vmatpush1.msra.mxu0 0.0
    %3906 = vmatprep.subr.mxu0 0.0
    %3907 = vmatpush1.msra.mxu0 0.0
    %3908 = vmatprep.subr.mxu0 0.0
    %3909 = vmatpush1.msra.mxu0 0.0
    %3910 = vmatprep.subr.mxu0 0.0
    %3911 = vmatpush1.msra.mxu0 0.0
    %3912 = vmatprep.subr.mxu0 0.0
    %3913 = vmatpush1.msra.mxu0 0.0
    %3914 = vmatprep.subr.mxu0 0.0
    %3915 = vmatpush1.msra.mxu0 0.0
    %3916 = vmatprep.subr.mxu0 0.0
    %3917 = vmatpush1.msra.mxu0 0.0
    %3918 = vmatprep.subr.mxu0 0.0
    %3919 = vmatpush1.msra.mxu0 0.0
    %3920 = vmatprep.subr.mxu0 0.0
    %3921 = vmatpush1.msra.mxu0 0.0
    %3922 = vmatprep.subr.mxu0 0.0
    %3923 = vmatpush1.msra.mxu0 0.0
    %3924 = vmatprep.subr.mxu0 0.0
    %3925 = vmatpush1.msra.mxu0 0.0
    %3926 = vmatprep.subr.mxu0 0.0
    %3927 = vmatpush1.msra.mxu0 0.0
    %3928 = vmatprep.subr.mxu0 0.0
    %3929 = vmatpush1.msra.mxu0 0.0
    %3930 = vmatprep.subr.mxu0 0.0
    %3931 = vmatpush1.msra.mxu0 0.0
    %3932 = vmatprep.subr.mxu0 0.0
    %3933 = vmatpush1.msra.mxu0 0.0
    %3934 = vmatprep.subr.mxu0 0.0
    %3935 = vmatpush1.msra.mxu0 0.0
    %3936 = vmatprep.subr.mxu0 0.0
    %3937 = vmatpush1.msra.mxu0 0.0
    %3938 = vmatprep.subr.mxu0 0.0
    %3939 = vmatpush1.msra.mxu0 0.0
    %3940 = vmatprep.mubr.f32.mxu0 0.0
    %3941 = vmatmul.mubr.f32.gmra.mrb[0].mxu0 %v3874
    %v3942 = vpop.f32.mrb[0].mxu0
    %v3943 = vadd.f32 0.0, %v3942
    %v3944 = vpop.f32.mrb[0].mxu0
    %3945 = vdwg.mxu0
    %v3947 = vsel %vm368, %v3704, 0
    %3949 = vmatprep.subr.mxu0 0.0
    %3950 = vmatpush1.msra.mxu0 %v2332
    %3951 = vmatprep.subr.mxu0 0.0
    %3952 = vmatpush1.msra.mxu0 0.0
    %3953 = vmatprep.subr.mxu0 0.0
    %3954 = vmatpush1.msra.mxu0 0.0
    %3955 = vmatprep.subr.mxu0 0.0
    %3956 = vmatpush1.msra.mxu0 0.0
    %3957 = vmatprep.subr.mxu0 0.0
    %3958 = vmatpush1.msra.mxu0 0.0
    %3959 = vmatprep.subr.mxu0 0.0
    %3960 = vmatpush1.msra.mxu0 0.0
    %3961 = vmatprep.subr.mxu0 0.0
    %3962 = vmatpush1.msra.mxu0 0.0
    %3963 = vmatprep.subr.mxu0 0.0
    %3964 = vmatpush1.msra.mxu0 0.0
    %3965 = vmatprep.subr.mxu0 0.0
    %3966 = vmatpush1.msra.mxu0 0.0
    %3967 = vmatprep.subr.mxu0 0.0
    %3968 = vmatpush1.msra.mxu0 0.0
    %3969 = vmatprep.subr.mxu0 0.0
    %3970 = vmatpush1.msra.mxu0 0.0
    %3971 = vmatprep.subr.mxu0 0.0
    %3972 = vmatpush1.msra.mxu0 0.0
    %3973 = vmatprep.subr.mxu0 0.0
    %3974 = vmatpush1.msra.mxu0 0.0
    %3975 = vmatprep.subr.mxu0 0.0
    %3976 = vmatpush1.msra.mxu0 0.0
    %3977 = vmatprep.subr.mxu0 0.0
    %3978 = vmatpush1.msra.mxu0 0.0
    %3979 = vmatprep.subr.mxu0 0.0
    %3980 = vmatpush1.msra.mxu0 0.0
    %3981 = vmatprep.subr.mxu0 0.0
    %3982 = vmatpush1.msra.mxu0 0.0
    %3983 = vmatprep.subr.mxu0 0.0
    %3984 = vmatpush1.msra.mxu0 0.0
    %3985 = vmatprep.subr.mxu0 0.0
    %3986 = vmatpush1.msra.mxu0 0.0
    %3987 = vmatprep.subr.mxu0 0.0
    %3988 = vmatpush1.msra.mxu0 0.0
    %3989 = vmatprep.subr.mxu0 0.0
    %3990 = vmatpush1.msra.mxu0 0.0
    %3991 = vmatprep.subr.mxu0 0.0
    %3992 = vmatpush1.msra.mxu0 0.0
    %3993 = vmatprep.subr.mxu0 0.0
    %3994 = vmatpush1.msra.mxu0 0.0
    %3995 = vmatprep.subr.mxu0 0.0
    %3996 = vmatpush1.msra.mxu0 0.0
    %3997 = vmatprep.subr.mxu0 0.0
    %3998 = vmatpush1.msra.mxu0 0.0
    %3999 = vmatprep.subr.mxu0 0.0
    %4000 = vmatpush1.msra.mxu0 0.0
    %4001 = vmatprep.subr.mxu0 0.0
    %4002 = vmatpush1.msra.mxu0 0.0
    %4003 = vmatprep.subr.mxu0 0.0
    %4004 = vmatpush1.msra.mxu0 0.0
    %4005 = vmatprep.subr.mxu0 0.0
    %4006 = vmatpush1.msra.mxu0 0.0
    %4007 = vmatprep.subr.mxu0 0.0
    %4008 = vmatpush1.msra.mxu0 0.0
    %4009 = vmatprep.subr.mxu0 0.0
    %4010 = vmatpush1.msra.mxu0 0.0
    %4011 = vmatprep.subr.mxu0 0.0
    %4012 = vmatpush1.msra.mxu0 0.0
    %4013 = vmatprep.mubr.f32.mxu0 0.0
    %4014 = vmatmul.mubr.f32.gmra.mrb[0].mxu0 %v3947
    %v4015 = vpop.f32.mrb[0].mxu0
    %v4016 = vadd.f32 %v3943, %v4015
    %v4017 = vpop.f32.mrb[0].mxu0
    %4018 = vdwg.mxu0
    %4019 = vrot.lane.b32.xlu0 %v2418, 112
    %v4020 = vpop.permute.xlu0 %4019
    %4021 = vrot.lane.b32.xlu0 %v2503, 112
    %v4022 = vpop.permute.xlu0 %4021
    %v4023 = vsel %vm368, %v4020, 0
    %v4025 = vsel %vm368, %v4022, 0
    %4027 = vmatprep.subr.mxu0 0.0
    %4028 = vmatpush1.xpose.msra.mxu0 %v4025
    %4029 = vmatprep.subr.mxu0 0.0
    %4030 = vmatpush1.xpose.msra.mxu0 0.0
    %4031 = vmatprep.subr.mxu0 0.0
    %4032 = vmatpush1.xpose.msra.mxu0 0.0
    %4033 = vmatprep.subr.mxu0 0.0
    %4034 = vmatpush1.xpose.msra.mxu0 0.0
    %4035 = vmatprep.subr.mxu0 0.0
    %4036 = vmatpush1.xpose.msra.mxu0 0.0
    %4037 = vmatprep.subr.mxu0 0.0
    %4038 = vmatpush1.xpose.msra.mxu0 0.0
    %4039 = vmatprep.subr.mxu0 0.0
    %4040 = vmatpush1.xpose.msra.mxu0 0.0
    %4041 = vmatprep.subr.mxu0 0.0
    %4042 = vmatpush1.xpose.msra.mxu0 0.0
    %4043 = vmatprep.subr.mxu0 0.0
    %4044 = vmatpush1.xpose.msra.mxu0 0.0
    %4045 = vmatprep.subr.mxu0 0.0
    %4046 = vmatpush1.xpose.msra.mxu0 0.0
    %4047 = vmatprep.subr.mxu0 0.0
    %4048 = vmatpush1.xpose.msra.mxu0 0.0
    %4049 = vmatprep.subr.mxu0 0.0
    %4050 = vmatpush1.xpose.msra.mxu0 0.0
    %4051 = vmatprep.subr.mxu0 0.0
    %4052 = vmatpush1.xpose.msra.mxu0 0.0
    %4053 = vmatprep.subr.mxu0 0.0
    %4054 = vmatpush1.xpose.msra.mxu0 0.0
    %4055 = vmatprep.subr.mxu0 0.0
    %4056 = vmatpush1.xpose.msra.mxu0 0.0
    %4057 = vmatprep.subr.mxu0 0.0
    %4058 = vmatpush1.xpose.msra.mxu0 0.0
    %4059 = vmatprep.subr.mxu0 0.0
    %4060 = vmatpush1.xpose.msra.mxu0 0.0
    %4061 = vmatprep.subr.mxu0 0.0
    %4062 = vmatpush1.xpose.msra.mxu0 0.0
    %4063 = vmatprep.subr.mxu0 0.0
    %4064 = vmatpush1.xpose.msra.mxu0 0.0
    %4065 = vmatprep.subr.mxu0 0.0
    %4066 = vmatpush1.xpose.msra.mxu0 0.0
    %4067 = vmatprep.subr.mxu0 0.0
    %4068 = vmatpush1.xpose.msra.mxu0 0.0
    %4069 = vmatprep.subr.mxu0 0.0
    %4070 = vmatpush1.xpose.msra.mxu0 0.0
    %4071 = vmatprep.subr.mxu0 0.0
    %4072 = vmatpush1.xpose.msra.mxu0 0.0
    %4073 = vmatprep.subr.mxu0 0.0
    %4074 = vmatpush1.xpose.msra.mxu0 0.0
    %4075 = vmatprep.subr.mxu0 0.0
    %4076 = vmatpush1.xpose.msra.mxu0 0.0
    %4077 = vmatprep.subr.mxu0 0.0
    %4078 = vmatpush1.xpose.msra.mxu0 0.0
    %4079 = vmatprep.subr.mxu0 0.0
    %4080 = vmatpush1.xpose.msra.mxu0 0.0
    %4081 = vmatprep.subr.mxu0 0.0
    %4082 = vmatpush1.xpose.msra.mxu0 0.0
    %4083 = vmatprep.subr.mxu0 0.0
    %4084 = vmatpush1.xpose.msra.mxu0 0.0
    %4085 = vmatprep.subr.mxu0 0.0
    %4086 = vmatpush1.xpose.msra.mxu0 0.0
    %4087 = vmatprep.subr.mxu0 0.0
    %4088 = vmatpush1.xpose.msra.mxu0 0.0
    %4089 = vmatprep.subr.mxu0 0.0
    %4090 = vmatpush1.xpose.msra.mxu0 0.0
    %4091 = vmatprep.mubr.f32.mxu0 0.0
    %4092 = vmatmul.mubr.f32.gmra.mrb[0].mxu0 %v4023
    %v4093 = vpop.f32.mrb[0].mxu0
    %v4094 = vadd.f32 %v3545, %v4093
    %v4095 = vpop.f32.mrb[0].mxu0
    %4096 = vdwg.mxu0
    %v4097 = vsel %vm368, %v4094, -inf
    %4098 = vmax.xlane.f32.xlu0 %v4097
    %v4099 = vpop.xlane.xlu0 %4098
    %v4100 = vsub.f32 %v4094, %v4099
    %v4101 = vmul.f32 %v4100, 1.442695
    %v4102 = vpow.pop %v4101
    %v4103 = vsel %vm368, %v4102, 0.0
    %4104 = vadd.xlane.f32.xlu0 %v4103
    %v4105 = vpop.xlane.xlu0 %4104
    %v4106 = vrcp.pop %v4105
    %v4107 = vmul.f32 %v4102, %v4106
    %4108 = vrot.lane.b32.xlu0 %v2582, 112
    %v4109 = vpop.permute.xlu0 %4108
    %v4112 = vsel %vm368, %v4107, 0
    %4114 = vmatprep.subr.mxu0 0.0
    %4115 = vmatpush1.msra.mxu0 %v4109
    %4116 = vmatprep.subr.mxu0 0.0
    %4117 = vmatpush1.msra.mxu0 0.0
    %4118 = vmatprep.subr.mxu0 0.0
    %4119 = vmatpush1.msra.mxu0 0.0
    %4120 = vmatprep.subr.mxu0 0.0
    %4121 = vmatpush1.msra.mxu0 0.0
    %4122 = vmatprep.subr.mxu0 0.0
    %4123 = vmatpush1.msra.mxu0 0.0
    %4124 = vmatprep.subr.mxu0 0.0
    %4125 = vmatpush1.msra.mxu0 0.0
    %4126 = vmatprep.subr.mxu0 0.0
    %4127 = vmatpush1.msra.mxu0 0.0
    %4128 = vmatprep.subr.mxu0 0.0
    %4129 = vmatpush1.msra.mxu0 0.0
    %4130 = vmatprep.subr.mxu0 0.0
    %4131 = vmatpush1.msra.mxu0 0.0
    %4132 = vmatprep.subr.mxu0 0.0
    %4133 = vmatpush1.msra.mxu0 0.0
    %4134 = vmatprep.subr.mxu0 0.0
    %4135 = vmatpush1.msra.mxu0 0.0
    %4136 = vmatprep.subr.mxu0 0.0
    %4137 = vmatpush1.msra.mxu0 0.0
    %4138 = vmatprep.subr.mxu0 0.0
    %4139 = vmatpush1.msra.mxu0 0.0
    %4140 = vmatprep.subr.mxu0 0.0
    %4141 = vmatpush1.msra.mxu0 0.0
    %4142 = vmatprep.subr.mxu0 0.0
    %4143 = vmatpush1.msra.mxu0 0.0
    %4144 = vmatprep.subr.mxu0 0.0
    %4145 = vmatpush1.msra.mxu0 0.0
    %4146 = vmatprep.subr.mxu0 0.0
    %4147 = vmatpush1.msra.mxu0 0.0
    %4148 = vmatprep.subr.mxu0 0.0
    %4149 = vmatpush1.msra.mxu0 0.0
    %4150 = vmatprep.subr.mxu0 0.0
    %4151 = vmatpush1.msra.mxu0 0.0
    %4152 = vmatprep.subr.mxu0 0.0
    %4153 = vmatpush1.msra.mxu0 0.0
    %4154 = vmatprep.subr.mxu0 0.0
    %4155 = vmatpush1.msra.mxu0 0.0
    %4156 = vmatprep.subr.mxu0 0.0
    %4157 = vmatpush1.msra.mxu0 0.0
    %4158 = vmatprep.subr.mxu0 0.0
    %4159 = vmatpush1.msra.mxu0 0.0
    %4160 = vmatprep.subr.mxu0 0.0
    %4161 = vmatpush1.msra.mxu0 0.0
    %4162 = vmatprep.subr.mxu0 0.0
    %4163 = vmatpush1.msra.mxu0 0.0
    %4164 = vmatprep.subr.mxu0 0.0
    %4165 = vmatpush1.msra.mxu0 0.0
    %4166 = vmatprep.subr.mxu0 0.0
    %4167 = vmatpush1.msra.mxu0 0.0
    %4168 = vmatprep.subr.mxu0 0.0
    %4169 = vmatpush1.msra.mxu0 0.0
    %4170 = vmatprep.subr.mxu0 0.0
    %4171 = vmatpush1.msra.mxu0 0.0
    %4172 = vmatprep.subr.mxu0 0.0
    %4173 = vmatpush1.msra.mxu0 0.0
    %4174 = vmatprep.subr.mxu0 0.0
    %4175 = vmatpush1.msra.mxu0 0.0
    %4176 = vmatprep.subr.mxu0 0.0
    %4177 = vmatpush1.msra.mxu0 0.0
    %4178 = vmatprep.mubr.f32.mxu0 0.0
    %4179 = vmatmul.mubr.f32.gmra.mrb[0].mxu0 %v4112
    %v4180 = vpop.f32.mrb[0].mxu0
    %v4181 = vadd.f32 0.0, %v4180
    %v4182 = vpop.f32.mrb[0].mxu0
    %4183 = vdwg.mxu0
    %v4185 = vsel %vm368, %v4181, 0
    %4187 = vmatprep.subr.mxu0 0.0
    %4188 = vmatpush1.msra.mxu0 %v2334
    %4189 = vmatprep.subr.mxu0 0.0
    %4190 = vmatpush1.msra.mxu0 0.0
    %4191 = vmatprep.subr.mxu0 0.0
    %4192 = vmatpush1.msra.mxu0 0.0
    %4193 = vmatprep.subr.mxu0 0.0
    %4194 = vmatpush1.msra.mxu0 0.0
    %4195 = vmatprep.subr.mxu0 0.0
    %4196 = vmatpush1.msra.mxu0 0.0
    %4197 = vmatprep.subr.mxu0 0.0
    %4198 = vmatpush1.msra.mxu0 0.0
    %4199 = vmatprep.subr.mxu0 0.0
    %4200 = vmatpush1.msra.mxu0 0.0
    %4201 = vmatprep.subr.mxu0 0.0
    %4202 = vmatpush1.msra.mxu0 0.0
    %4203 = vmatprep.subr.mxu0 0.0
    %4204 = vmatpush1.msra.mxu0 0.0
    %4205 = vmatprep.subr.mxu0 0.0
    %4206 = vmatpush1.msra.mxu0 0.0
    %4207 = vmatprep.subr.mxu0 0.0
    %4208 = vmatpush1.msra.mxu0 0.0
    %4209 = vmatprep.subr.mxu0 0.0
    %4210 = vmatpush1.msra.mxu0 0.0
    %4211 = vmatprep.subr.mxu0 0.0
    %4212 = vmatpush1.msra.mxu0 0.0
    %4213 = vmatprep.subr.mxu0 0.0
    %4214 = vmatpush1.msra.mxu0 0.0
    %4215 = vmatprep.subr.mxu0 0.0
    %4216 = vmatpush1.msra.mxu0 0.0
    %4217 = vmatprep.subr.mxu0 0.0
    %4218 = vmatpush1.msra.mxu0 0.0
    %4219 = vmatprep.subr.mxu0 0.0
    %4220 = vmatpush1.msra.mxu0 0.0
    %4221 = vmatprep.subr.mxu0 0.0
    %4222 = vmatpush1.msra.mxu0 0.0
    %4223 = vmatprep.subr.mxu0 0.0
    %4224 = vmatpush1.msra.mxu0 0.0
    %4225 = vmatprep.subr.mxu0 0.0
    %4226 = vmatpush1.msra.mxu0 0.0
    %4227 = vmatprep.subr.mxu0 0.0
    %4228 = vmatpush1.msra.mxu0 0.0
    %4229 = vmatprep.subr.mxu0 0.0
    %4230 = vmatpush1.msra.mxu0 0.0
    %4231 = vmatprep.subr.mxu0 0.0
    %4232 = vmatpush1.msra.mxu0 0.0
    %4233 = vmatprep.subr.mxu0 0.0
    %4234 = vmatpush1.msra.mxu0 0.0
    %4235 = vmatprep.subr.mxu0 0.0
    %4236 = vmatpush1.msra.mxu0 0.0
    %4237 = vmatprep.subr.mxu0 0.0
    %4238 = vmatpush1.msra.mxu0 0.0
    %4239 = vmatprep.subr.mxu0 0.0
    %4240 = vmatpush1.msra.mxu0 0.0
    %4241 = vmatprep.subr.mxu0 0.0
    %4242 = vmatpush1.msra.mxu0 0.0
    %4243 = vmatprep.subr.mxu0 0.0
    %4244 = vmatpush1.msra.mxu0 0.0
    %4245 = vmatprep.subr.mxu0 0.0
    %4246 = vmatpush1.msra.mxu0 0.0
    %4247 = vmatprep.subr.mxu0 0.0
    %4248 = vmatpush1.msra.mxu0 0.0
    %4249 = vmatprep.subr.mxu0 0.0
    %4250 = vmatpush1.msra.mxu0 0.0
    %4251 = vmatprep.mubr.f32.mxu0 0.0
    %4252 = vmatmul.mubr.f32.gmra.mrb[0].mxu0 %v4185
    %v4253 = vpop.f32.mrb[0].mxu0
    %v4254 = vadd.f32 0.0, %v4253
    %v4255 = vpop.f32.mrb[0].mxu0
    %4256 = vdwg.mxu0
    %v4257 = vadd.f32 %v4016, %v4254
    %4258 = vrot.lane.b32.xlu0 %v2418, 104
    %v4259 = vpop.permute.xlu0 %4258
    %4260 = vrot.lane.b32.xlu0 %v2503, 104
    %v4261 = vpop.permute.xlu0 %4260
    %v4262 = vsel %vm368, %v4259, 0
    %v4264 = vsel %vm368, %v4261, 0
    %4266 = vmatprep.subr.mxu0 0.0
    %4267 = vmatpush1.xpose.msra.mxu0 %v4264
    %4268 = vmatprep.subr.mxu0 0.0
    %4269 = vmatpush1.xpose.msra.mxu0 0.0
    %4270 = vmatprep.subr.mxu0 0.0
    %4271 = vmatpush1.xpose.msra.mxu0 0.0
    %4272 = vmatprep.subr.mxu0 0.0
    %4273 = vmatpush1.xpose.msra.mxu0 0.0
    %4274 = vmatprep.subr.mxu0 0.0
    %4275 = vmatpush1.xpose.msra.mxu0 0.0
    %4276 = vmatprep.subr.mxu0 0.0
    %4277 = vmatpush1.xpose.msra.mxu0 0.0
    %4278 = vmatprep.subr.mxu0 0.0
    %4279 = vmatpush1.xpose.msra.mxu0 0.0
    %4280 = vmatprep.subr.mxu0 0.0
    %4281 = vmatpush1.xpose.msra.mxu0 0.0
    %4282 = vmatprep.subr.mxu0 0.0
    %4283 = vmatpush1.xpose.msra.mxu0 0.0
    %4284 = vmatprep.subr.mxu0 0.0
    %4285 = vmatpush1.xpose.msra.mxu0 0.0
    %4286 = vmatprep.subr.mxu0 0.0
    %4287 = vmatpush1.xpose.msra.mxu0 0.0
    %4288 = vmatprep.subr.mxu0 0.0
    %4289 = vmatpush1.xpose.msra.mxu0 0.0
    %4290 = vmatprep.subr.mxu0 0.0
    %4291 = vmatpush1.xpose.msra.mxu0 0.0
    %4292 = vmatprep.subr.mxu0 0.0
    %4293 = vmatpush1.xpose.msra.mxu0 0.0
    %4294 = vmatprep.subr.mxu0 0.0
    %4295 = vmatpush1.xpose.msra.mxu0 0.0
    %4296 = vmatprep.subr.mxu0 0.0
    %4297 = vmatpush1.xpose.msra.mxu0 0.0
    %4298 = vmatprep.subr.mxu0 0.0
    %4299 = vmatpush1.xpose.msra.mxu0 0.0
    %4300 = vmatprep.subr.mxu0 0.0
    %4301 = vmatpush1.xpose.msra.mxu0 0.0
    %4302 = vmatprep.subr.mxu0 0.0
    %4303 = vmatpush1.xpose.msra.mxu0 0.0
    %4304 = vmatprep.subr.mxu0 0.0
    %4305 = vmatpush1.xpose.msra.mxu0 0.0
    %4306 = vmatprep.subr.mxu0 0.0
    %4307 = vmatpush1.xpose.msra.mxu0 0.0
    %4308 = vmatprep.subr.mxu0 0.0
    %4309 = vmatpush1.xpose.msra.mxu0 0.0
    %4310 = vmatprep.subr.mxu0 0.0
    %4311 = vmatpush1.xpose.msra.mxu0 0.0
    %4312 = vmatprep.subr.mxu0 0.0
    %4313 = vmatpush1.xpose.msra.mxu0 0.0
    %4314 = vmatprep.subr.mxu0 0.0
    %4315 = vmatpush1.xpose.msra.mxu0 0.0
    %4316 = vmatprep.subr.mxu0 0.0
    %4317 = vmatpush1.xpose.msra.mxu0 0.0
    %4318 = vmatprep.subr.mxu0 0.0
    %4319 = vmatpush1.xpose.msra.mxu0 0.0
    %4320 = vmatprep.subr.mxu0 0.0
    %4321 = vmatpush1.xpose.msra.mxu0 0.0
    %4322 = vmatprep.subr.mxu0 0.0
    %4323 = vmatpush1.xpose.msra.mxu0 0.0
    %4324 = vmatprep.subr.mxu0 0.0
    %4325 = vmatpush1.xpose.msra.mxu0 0.0
    %4326 = vmatprep.subr.mxu0 0.0
    %4327 = vmatpush1.xpose.msra.mxu0 0.0
    %4328 = vmatprep.subr.mxu0 0.0
    %4329 = vmatpush1.xpose.msra.mxu0 0.0
    %4330 = vmatprep.mubr.f32.mxu0 0.0
    %4331 = vmatmul.mubr.f32.gmra.mrb[0].mxu0 %v4262
    %v4332 = vpop.f32.mrb[0].mxu0
    %v4333 = vadd.f32 %v3545, %v4332
    %v4334 = vpop.f32.mrb[0].mxu0
    %4335 = vdwg.mxu0
    %v4336 = vsel %vm368, %v4333, -inf
    %4337 = vmax.xlane.f32.xlu0 %v4336
    %v4338 = vpop.xlane.xlu0 %4337
    %v4339 = vsub.f32 %v4333, %v4338
    %v4340 = vmul.f32 %v4339, 1.442695
    %v4341 = vpow.pop %v4340
    %v4342 = vsel %vm368, %v4341, 0.0
    %4343 = vadd.xlane.f32.xlu0 %v4342
    %v4344 = vpop.xlane.xlu0 %4343
    %v4345 = vrcp.pop %v4344
    %v4346 = vmul.f32 %v4341, %v4345
    %4347 = vrot.lane.b32.xlu0 %v2582, 104
    %v4348 = vpop.permute.xlu0 %4347
    %v4351 = vsel %vm368, %v4346, 0
    %4353 = vmatprep.subr.mxu0 0.0
    %4354 = vmatpush1.msra.mxu0 %v4348
    %4355 = vmatprep.subr.mxu0 0.0
    %4356 = vmatpush1.msra.mxu0 0.0
    %4357 = vmatprep.subr.mxu0 0.0
    %4358 = vmatpush1.msra.mxu0 0.0
    %4359 = vmatprep.subr.mxu0 0.0
    %4360 = vmatpush1.msra.mxu0 0.0
    %4361 = vmatprep.subr.mxu0 0.0
    %4362 = vmatpush1.msra.mxu0 0.0
    %4363 = vmatprep.subr.mxu0 0.0
    %4364 = vmatpush1.msra.mxu0 0.0
    %4365 = vmatprep.subr.mxu0 0.0
    %4366 = vmatpush1.msra.mxu0 0.0
    %4367 = vmatprep.subr.mxu0 0.0
    %4368 = vmatpush1.msra.mxu0 0.0
    %4369 = vmatprep.subr.mxu0 0.0
    %4370 = vmatpush1.msra.mxu0 0.0
    %4371 = vmatprep.subr.mxu0 0.0
    %4372 = vmatpush1.msra.mxu0 0.0
    %4373 = vmatprep.subr.mxu0 0.0
    %4374 = vmatpush1.msra.mxu0 0.0
    %4375 = vmatprep.subr.mxu0 0.0
    %4376 = vmatpush1.msra.mxu0 0.0
    %4377 = vmatprep.subr.mxu0 0.0
    %4378 = vmatpush1.msra.mxu0 0.0
    %4379 = vmatprep.subr.mxu0 0.0
    %4380 = vmatpush1.msra.mxu0 0.0
    %4381 = vmatprep.subr.mxu0 0.0
    %4382 = vmatpush1.msra.mxu0 0.0
    %4383 = vmatprep.subr.mxu0 0.0
    %4384 = vmatpush1.msra.mxu0 0.0
    %4385 = vmatprep.subr.mxu0 0.0
    %4386 = vmatpush1.msra.mxu0 0.0
    %4387 = vmatprep.subr.mxu0 0.0
    %4388 = vmatpush1.msra.mxu0 0.0
    %4389 = vmatprep.subr.mxu0 0.0
    %4390 = vmatpush1.msra.mxu0 0.0
    %4391 = vmatprep.subr.mxu0 0.0
    %4392 = vmatpush1.msra.mxu0 0.0
    %4393 = vmatprep.subr.mxu0 0.0
    %4394 = vmatpush1.msra.mxu0 0.0
    %4395 = vmatprep.subr.mxu0 0.0
    %4396 = vmatpush1.msra.mxu0 0.0
    %4397 = vmatprep.subr.mxu0 0.0
    %4398 = vmatpush1.msra.mxu0 0.0
    %4399 = vmatprep.subr.mxu0 0.0
    %4400 = vmatpush1.msra.mxu0 0.0
    %4401 = vmatprep.subr.mxu0 0.0
    %4402 = vmatpush1.msra.mxu0 0.0
    %4403 = vmatprep.subr.mxu0 0.0
    %4404 = vmatpush1.msra.mxu0 0.0
    %4405 = vmatprep.subr.mxu0 0.0
    %4406 = vmatpush1.msra.mxu0 0.0
    %4407 = vmatprep.subr.mxu0 0.0
    %4408 = vmatpush1.msra.mxu0 0.0
    %4409 = vmatprep.subr.mxu0 0.0
    %4410 = vmatpush1.msra.mxu0 0.0
    %4411 = vmatprep.subr.mxu0 0.0
    %4412 = vmatpush1.msra.mxu0 0.0
    %4413 = vmatprep.subr.mxu0 0.0
    %4414 = vmatpush1.msra.mxu0 0.0
    %4415 = vmatprep.subr.mxu0 0.0
    %4416 = vmatpush1.msra.mxu0 0.0
    %4417 = vmatprep.mubr.f32.mxu0 0.0
    %4418 = vmatmul.mubr.f32.gmra.mrb[0].mxu0 %v4351
    %v4419 = vpop.f32.mrb[0].mxu0
    %v4420 = vadd.f32 0.0, %v4419
    %v4421 = vpop.f32.mrb[0].mxu0
    %4422 = vdwg.mxu0
    %v4424 = vsel %vm368, %v4420, 0
    %4426 = vmatprep.subr.mxu0 0.0
    %4427 = vmatpush1.msra.mxu0 %v2335
    %4428 = vmatprep.subr.mxu0 0.0
    %4429 = vmatpush1.msra.mxu0 0.0
    %4430 = vmatprep.subr.mxu0 0.0
    %4431 = vmatpush1.msra.mxu0 0.0
    %4432 = vmatprep.subr.mxu0 0.0
    %4433 = vmatpush1.msra.mxu0 0.0
    %4434 = vmatprep.subr.mxu0 0.0
    %4435 = vmatpush1.msra.mxu0 0.0
    %4436 = vmatprep.subr.mxu0 0.0
    %4437 = vmatpush1.msra.mxu0 0.0
    %4438 = vmatprep.subr.mxu0 0.0
    %4439 = vmatpush1.msra.mxu0 0.0
    %4440 = vmatprep.subr.mxu0 0.0
    %4441 = vmatpush1.msra.mxu0 0.0
    %4442 = vmatprep.subr.mxu0 0.0
    %4443 = vmatpush1.msra.mxu0 0.0
    %4444 = vmatprep.subr.mxu0 0.0
    %4445 = vmatpush1.msra.mxu0 0.0
    %4446 = vmatprep.subr.mxu0 0.0
    %4447 = vmatpush1.msra.mxu0 0.0
    %4448 = vmatprep.subr.mxu0 0.0
    %4449 = vmatpush1.msra.mxu0 0.0
    %4450 = vmatprep.subr.mxu0 0.0
    %4451 = vmatpush1.msra.mxu0 0.0
    %4452 = vmatprep.subr.mxu0 0.0
    %4453 = vmatpush1.msra.mxu0 0.0
    %4454 = vmatprep.subr.mxu0 0.0
    %4455 = vmatpush1.msra.mxu0 0.0
    %4456 = vmatprep.subr.mxu0 0.0
    %4457 = vmatpush1.msra.mxu0 0.0
    %4458 = vmatprep.subr.mxu0 0.0
    %4459 = vmatpush1.msra.mxu0 0.0
    %4460 = vmatprep.subr.mxu0 0.0
    %4461 = vmatpush1.msra.mxu0 0.0
    %4462 = vmatprep.subr.mxu0 0.0
    %4463 = vmatpush1.msra.mxu0 0.0
    %4464 = vmatprep.subr.mxu0 0.0
    %4465 = vmatpush1.msra.mxu0 0.0
    %4466 = vmatprep.subr.mxu0 0.0
    %4467 = vmatpush1.msra.mxu0 0.0
    %4468 = vmatprep.subr.mxu0 0.0
    %4469 = vmatpush1.msra.mxu0 0.0
    %4470 = vmatprep.subr.mxu0 0.0
    %4471 = vmatpush1.msra.mxu0 0.0
    %4472 = vmatprep.subr.mxu0 0.0
    %4473 = vmatpush1.msra.mxu0 0.0
    %4474 = vmatprep.subr.mxu0 0.0
    %4475 = vmatpush1.msra.mxu0 0.0
    %4476 = vmatprep.subr.mxu0 0.0
    %4477 = vmatpush1.msra.mxu0 0.0
    %4478 = vmatprep.subr.mxu0 0.0
    %4479 = vmatpush1.msra.mxu0 0.0
    %4480 = vmatprep.subr.mxu0 0.0
    %4481 = vmatpush1.msra.mxu0 0.0
    %4482 = vmatprep.subr.mxu0 0.0
    %4483 = vmatpush1.msra.mxu0 0.0
    %4484 = vmatprep.subr.mxu0 0.0
    %4485 = vmatpush1.msra.mxu0 0.0
    %4486 = vmatprep.subr.mxu0 0.0
    %4487 = vmatpush1.msra.mxu0 0.0
    %4488 = vmatprep.subr.mxu0 0.0
    %4489 = vmatpush1.msra.mxu0 0.0
    %4490 = vmatprep.mubr.f32.mxu0 0.0
    %4491 = vmatmul.mubr.f32.gmra.mrb[0].mxu0 %v4424
    %v4492 = vpop.f32.mrb[0].mxu0
    %v4493 = vadd.f32 0.0, %v4492
    %v4494 = vpop.f32.mrb[0].mxu0
    %4495 = vdwg.mxu0
    %v4496 = vadd.f32 %v4257, %v4493
    %v4497 = vlaneseq
    %v4498 = vshrl.u32 %v4497, 7
    %v4499 = vsub.s32 7, %v4498
    %v4500 = vrot.slane %v99, %v4499
    %v4501 = vadd.f32 %v3540, %v4500
    %v4502 = vadd.f32 %v4496, %v4500
    %v4503 = vadd.f32 %v4501, %v2314
    %v4504 = vadd.f32 %v4502, %v2315
    %v4505 = vsel %vm128, %v4503, 0.0
    %4506 = vadd.xlane.f32.xlu0 %v4505
    %v4507 = vpop.xlane.xlu0 %4506
    %v4508 = vsel %vm128, %v4504, 0.0
    %4509 = vadd.xlane.f32.xlu0 %v4508
    %v4510 = vpop.xlane.xlu0 %4509
    %v4511 = vmul.f32 %v4507, %v2283
    %v4512 = vmul.f32 %v4510, %v2283
    %v4513 = vsub.f32 %v4503, %v4511
    %v4514 = vsub.f32 %v4504, %v4512
    %v4515 = vmul.f32 %v4513, %v4513
    %v4516 = vmul.f32 %v4514, %v4514
    %v4517 = vsel %vm128, %v4515, 0.0
    %4518 = vadd.xlane.f32.xlu0 %v4517
    %v4519 = vpop.xlane.xlu0 %4518
    %v4520 = vsel %vm128, %v4516, 0.0
    %4521 = vadd.xlane.f32.xlu0 %v4520
    %v4522 = vpop.xlane.xlu0 %4521
    %v4523 = vmul.f32 %v4519, %v2283
    %v4524 = vmul.f32 %v4522, %v2283
    %v4525 = vadd.f32 %v4523, 1e-05
    %v4526 = vadd.f32 %v4524, 1e-05
    %v4527 = vrsqrt.pop %v4525
    %v4528 = vrsqrt.pop %v4526
    %v4529 = vmul.f32 %v4513, %v4527
    %v4530 = vmul.f32 %v4514, %v4528
    %v4531 = vlaneseq
    %v4532 = vshrl.u32 %v4531, 7
    %v4533 = vsub.s32 4, %v4532
    %v4534 = vrot.slane %v100, %v4533
    %v4535 = vmul.f32 %v4529, %v4534
    %v4536 = vmul.f32 %v4530, %v4534
    %v4537 = vlaneseq
    %v4538 = vshrl.u32 %v4537, 7
    %v4539 = vsub.s32 5, %v4538
    %v4540 = vrot.slane %v100, %v4539
    %v4541 = vadd.f32 %v4535, %v4540
    %v4542 = vadd.f32 %v4536, %v4540
    %v4543 = vld [vmem:[#allocation10] sm:$0xff]
    %v4544 = vld [vmem:[#allocation10 + $0x8] sm:$0xff]
    %v4545 = vld [vmem:[#allocation10 + $0x10] sm:$0xff]
    %v4546 = vld [vmem:[#allocation10 + $0x18] sm:$0xff]
    %s4547 = scalar_lea.vmem [#allocation10], 64
    %v4548 = vld [vmem:[%s4547] sm:$0xff]
    %v4549 = vld [vmem:[%s4547 + $0x8] sm:$0xff]
    %v4550 = vld [vmem:[%s4547 + $0x10] sm:$0xff]
    %v4551 = vld [vmem:[%s4547 + $0x18] sm:$0xff]
    %v4552 = vld [vmem:[%s4547 + $0x20] sm:$0xff]
    %v4553 = vld [vmem:[%s4547 + $0x28] sm:$0xff]
    %v4554 = vld [vmem:[%s4547 + $0x30] sm:$0xff]
    %v4555 = vld [vmem:[%s4547 + $0x38] sm:$0xff]
    %v4556 = vlaneseq
    %v4557 = vshrl.u32 %v4556, 7
    %v4558 = vsub.s32 0, %v4557
    %v4559 = vrot.slane %v100, %v4558
    %v4561 = vsel %vm128, %v4541, 0
    %v4564 = vsel %vm128, %v4542, 0
    %4566 = vmatprep.subr.mxu0 0.0
    %4567 = vmatpush1.msra.mxu0 %v4543
    %4568 = vmatprep.subr.mxu0 0.0
    %4569 = vmatpush1.msra.mxu0 %v4544
    %4570 = vmatprep.subr.mxu0 0.0
    %4571 = vmatpush1.msra.mxu0 %v4545
    %4572 = vmatprep.subr.mxu0 0.0
    %4573 = vmatpush1.msra.mxu0 %v4546
    %4574 = vmatprep.subr.mxu0 0.0
    %4575 = vmatpush1.msra.mxu0 0.0
    %4576 = vmatprep.subr.mxu0 0.0
    %4577 = vmatpush1.msra.mxu0 0.0
    %4578 = vmatprep.subr.mxu0 0.0
    %4579 = vmatpush1.msra.mxu0 0.0
    %4580 = vmatprep.subr.mxu0 0.0
    %4581 = vmatpush1.msra.mxu0 0.0
    %4582 = vmatprep.subr.mxu0 0.0
    %4583 = vmatpush1.msra.mxu0 0.0
    %4584 = vmatprep.subr.mxu0 0.0
    %4585 = vmatpush1.msra.mxu0 0.0
    %4586 = vmatprep.subr.mxu0 0.0
    %4587 = vmatpush1.msra.mxu0 0.0
    %4588 = vmatprep.subr.mxu0 0.0
    %4589 = vmatpush1.msra.mxu0 0.0
    %4590 = vmatprep.subr.mxu0 0.0
    %4591 = vmatpush1.msra.mxu0 0.0
    %4592 = vmatprep.subr.mxu0 0.0
    %4593 = vmatpush1.msra.mxu0 0.0
    %4594 = vmatprep.subr.mxu0 0.0
    %4595 = vmatpush1.msra.mxu0 0.0
    %4596 = vmatprep.subr.mxu0 0.0
    %4597 = vmatpush1.msra.mxu0 0.0
    %4598 = vmatprep.subr.mxu0 0.0
    %4599 = vmatpush1.msra.mxu0 0.0
    %4600 = vmatprep.subr.mxu0 0.0
    %4601 = vmatpush1.msra.mxu0 0.0
    %4602 = vmatprep.subr.mxu0 0.0
    %4603 = vmatpush1.msra.mxu0 0.0
    %4604 = vmatprep.subr.mxu0 0.0
    %4605 = vmatpush1.msra.mxu0 0.0
    %4606 = vmatprep.subr.mxu0 0.0
    %4607 = vmatpush1.msra.mxu0 0.0
    %4608 = vmatprep.subr.mxu0 0.0
    %4609 = vmatpush1.msra.mxu0 0.0
    %4610 = vmatprep.subr.mxu0 0.0
    %4611 = vmatpush1.msra.mxu0 0.0
    %4612 = vmatprep.subr.mxu0 0.0
    %4613 = vmatpush1.msra.mxu0 0.0
    %4614 = vmatprep.subr.mxu0 0.0
    %4615 = vmatpush1.msra.mxu0 0.0
    %4616 = vmatprep.subr.mxu0 0.0
    %4617 = vmatpush1.msra.mxu0 0.0
    %4618 = vmatprep.subr.mxu0 0.0
    %4619 = vmatpush1.msra.mxu0 0.0
    %4620 = vmatprep.subr.mxu0 0.0
    %4621 = vmatpush1.msra.mxu0 0.0
    %4622 = vmatprep.subr.mxu0 0.0
    %4623 = vmatpush1.msra.mxu0 0.0
    %4624 = vmatprep.subr.mxu0 0.0
    %4625 = vmatpush1.msra.mxu0 0.0
    %4626 = vmatprep.subr.mxu0 0.0
    %4627 = vmatpush1.msra.mxu0 0.0
    %4628 = vmatprep.subr.mxu0 0.0
    %4629 = vmatpush1.msra.mxu0 0.0
    %4630 = vmatprep.mubr.f32.mxu0 0.0
    %4631 = vmatmul.mubr.f32.gmra.mrb[0].mxu0 %v4561
    %v4632 = vpop.f32.mrb[0].mxu0
    %v4633 = vadd.f32 %v4559, %v4632
    %v4634 = vpop.f32.mrb[0].mxu0
    %4635 = vmatprep.mubr.f32.mxu0 0.0
    %4636 = vmatmul.mubr.f32.gmra.mrb[0].mxu0 %v4564
    %v4637 = vpop.f32.mrb[0].mxu0
    %v4638 = vadd.f32 %v4559, %v4637
    %v4639 = vpop.f32.mrb[0].mxu0
    %4640 = vdwg.mxu0
    %v4641 = vmax.f32 %v4633, 0.0
    %v4642 = vmax.f32 %v4638, 0.0
    %v4643 = vlaneseq
    %v4644 = vshrl.u32 %v4643, 7
    %v4645 = vsub.s32 1, %v4644
    %v4646 = vrot.slane %v100, %v4645
    %vm4647 = vcmask 523264
    %v4649 = vsel %vm4647, %v4641, 0
    %v4652 = vsel %vm4647, %v4642, 0
    %4654 = vmatprep.subr.mxu0 0.0
    %4655 = vmatpush1.msra.mxu0 %v4548
    %4656 = vmatprep.subr.mxu0 0.0
    %4657 = vmatpush1.msra.mxu0 %v4549
    %4658 = vmatprep.subr.mxu0 0.0
    %4659 = vmatpush1.msra.mxu0 %v4550
    %4660 = vmatprep.subr.mxu0 0.0
    %4661 = vmatpush1.msra.mxu0 %v4551
    %4662 = vmatprep.subr.mxu0 0.0
    %4663 = vmatpush1.msra.mxu0 %v4552
    %4664 = vmatprep.subr.mxu0 0.0
    %4665 = vmatpush1.msra.mxu0 %v4553
    %4666 = vmatprep.subr.mxu0 0.0
    %4667 = vmatpush1.msra.mxu0 %v4554
    %4668 = vmatprep.subr.mxu0 0.0
    %4669 = vmatpush1.msra.mxu0 %v4555
    %4670 = vmatprep.subr.mxu0 0.0
    %4671 = vmatpush1.msra.mxu0 0.0
    %4672 = vmatprep.subr.mxu0 0.0
    %4673 = vmatpush1.msra.mxu0 0.0
    %4674 = vmatprep.subr.mxu0 0.0
    %4675 = vmatpush1.msra.mxu0 0.0
    %4676 = vmatprep.subr.mxu0 0.0
    %4677 = vmatpush1.msra.mxu0 0.0
    %4678 = vmatprep.subr.mxu0 0.0
    %4679 = vmatpush1.msra.mxu0 0.0
    %4680 = vmatprep.subr.mxu0 0.0
    %4681 = vmatpush1.msra.mxu0 0.0
    %4682 = vmatprep.subr.mxu0 0.0
    %4683 = vmatpush1.msra.mxu0 0.0
    %4684 = vmatprep.subr.mxu0 0.0
    %4685 = vmatpush1.msra.mxu0 0.0
    %4686 = vmatprep.subr.mxu0 0.0
    %4687 = vmatpush1.msra.mxu0 0.0
    %4688 = vmatprep.subr.mxu0 0.0
    %4689 = vmatpush1.msra.mxu0 0.0
    %4690 = vmatprep.subr.mxu0 0.0
    %4691 = vmatpush1.msra.mxu0 0.0
    %4692 = vmatprep.subr.mxu0 0.0
    %4693 = vmatpush1.msra.mxu0 0.0
    %4694 = vmatprep.subr.mxu0 0.0
    %4695 = vmatpush1.msra.mxu0 0.0
    %4696 = vmatprep.subr.mxu0 0.0
    %4697 = vmatpush1.msra.mxu0 0.0
    %4698 = vmatprep.subr.mxu0 0.0
    %4699 = vmatpush1.msra.mxu0 0.0
    %4700 = vmatprep.subr.mxu0 0.0
    %4701 = vmatpush1.msra.mxu0 0.0
    %4702 = vmatprep.subr.mxu0 0.0
    %4703 = vmatpush1.msra.mxu0 0.0
    %4704 = vmatprep.subr.mxu0 0.0
    %4705 = vmatpush1.msra.mxu0 0.0
    %4706 = vmatprep.subr.mxu0 0.0
    %4707 = vmatpush1.msra.mxu0 0.0
    %4708 = vmatprep.subr.mxu0 0.0
    %4709 = vmatpush1.msra.mxu0 0.0
    %4710 = vmatprep.subr.mxu0 0.0
    %4711 = vmatpush1.msra.mxu0 0.0
    %4712 = vmatprep.subr.mxu0 0.0
    %4713 = vmatpush1.msra.mxu0 0.0
    %4714 = vmatprep.subr.mxu0 0.0
    %4715 = vmatpush1.msra.mxu0 0.0
    %4716 = vmatprep.subr.mxu0 0.0
    %4717 = vmatpush1.msra.mxu0 0.0
    %4718 = vmatprep.mubr.f32.mxu0 0.0
    %4719 = vmatmul.mubr.f32.gmra.mrb[0].mxu0 %v4649
    %v4720 = vpop.f32.mrb[0].mxu0
    %v4721 = vadd.f32 %v4646, %v4720
    %v4722 = vpop.f32.mrb[0].mxu0
    %4723 = vmatprep.mubr.f32.mxu0 0.0
    %4724 = vmatmul.mubr.f32.gmra.mrb[0].mxu0 %v4652
    %v4725 = vpop.f32.mrb[0].mxu0
    %v4726 = vadd.f32 %v4646, %v4725
    %v4727 = vpop.f32.mrb[0].mxu0
    %4728 = vdwg.mxu0
    %v4729 = vadd.f32 %v4721, %v4541
    %v4730 = vadd.f32 %v4726, %v4542
    %v4731 = vsel %vm128, %v4729, 0.0
    %4732 = vadd.xlane.f32.xlu0 %v4731
    %v4733 = vpop.xlane.xlu0 %4732
    %v4734 = vsel %vm128, %v4730, 0.0
    %4735 = vadd.xlane.f32.xlu0 %v4734
    %v4736 = vpop.xlane.xlu0 %4735
    %v4737 = vmul.f32 %v4733, %v2283
    %v4738 = vmul.f32 %v4736, %v2283
    %v4739 = vsub.f32 %v4729, %v4737
    %v4740 = vsub.f32 %v4730, %v4738
    %v4741 = vmul.f32 %v4739, %v4739
    %v4742 = vmul.f32 %v4740, %v4740
    %v4743 = vsel %vm128, %v4741, 0.0
    %4744 = vadd.xlane.f32.xlu0 %v4743
    %v4745 = vpop.xlane.xlu0 %4744
    %v4746 = vsel %vm128, %v4742, 0.0
    %4747 = vadd.xlane.f32.xlu0 %v4746
    %v4748 = vpop.xlane.xlu0 %4747
    %v4749 = vmul.f32 %v4745, %v2283
    %v4750 = vmul.f32 %v4748, %v2283
    %v4751 = vadd.f32 %v4749, 1e-05
    %v4752 = vadd.f32 %v4750, 1e-05
    %v4753 = vrsqrt.pop %v4751
    %v4754 = vrsqrt.pop %v4752
    %v4755 = vmul.f32 %v4739, %v4753
    %v4756 = vmul.f32 %v4740, %v4754
    %v4757 = vlaneseq
    %v4758 = vshrl.u32 %v4757, 7
    %v4759 = vsub.s32 6, %v4758
    %v4760 = vrot.slane %v100, %v4759
    %v4761 = vmul.f32 %v4755, %v4760
    %v4762 = vmul.f32 %v4756, %v4760
    %v4763 = vlaneseq
    %v4764 = vshrl.u32 %v4763, 7
    %v4765 = vsub.s32 7, %v4764
    %v4766 = vrot.slane %v100, %v4765
    %v4767 = vadd.f32 %v4761, %v4766
    %v4768 = vadd.f32 %v4762, %v4766
    %4769 = vst.msk [vmem:[#allocation11] sm:$0xff] %vm128, %v4767
    %4770 = vst.msk [vmem:[#allocation11 + $0x8] sm:$0xff] %vm128, %v4768
    // Predicated region
    $region50: #{tpu_custom_call.1} parent=1 // pred_check
      _
    $region51: #{tpu_custom_call.1} parent=1 // pred_check_branch
      %4772 = sbr.rel (0) target = $region53
    $region52: #{tpu_custom_call.1} parent=1 // pred_region
      %s4774 = ssub.s32 256, 256
      %4775 = vsyncadd [#allocation4], %s4774
      %s4776 = sshll.u32 [#allocation11], 4
      %s4777 = int_to_ptr.vmem [resolvable:$true] %s4776
      %4782 = dma.vmem_to_hbm [thread:$0]  %s4777, 256, %s7, [#allocation4], 128, 128, 8
    $region53: #{tpu_custom_call.1} parent=1 // pred_fallthru
      _
    // Predicated region
    $region54: #{tpu_custom_call.1} parent=1 // pred_check
      _
    $region55: #{tpu_custom_call.1} parent=1 // pred_check_branch
      %4784 = sbr.rel (0) target = $region57
    $region56: #{tpu_custom_call.1} parent=1 // pred_region
      %4785 = dma.done [#allocation4], 256
    $region57: #{tpu_custom_call.1} parent=1 // pred_fallthru
      _
    %4786 = vsyncpa [#allocation3], 1
    %4787 = vsyncpa [#allocation6], 1
    %4788 = vsyncpa [#allocation9], 1
    %4789 = vsyncpa [#allocation4], 1

</llo_original>
